<compile_context>
chip_gen: v5e
topology: v5e:2x2
jax: 0.10.0
libtpu: 0.0.40
codegen_flags: <defaults>
</compile_context>

<pallas_src>
import numpy as np

import jax
import jax.numpy as jnp
from jax import lax
from jax.experimental import pallas as pl
from jax.experimental.pallas import tpu as pltpu  # noqa: F401  (TPU backend)


# --------------------------- parameter preparation ---------------------------

def _conv_mats(weight, bias, H, W, stride, N):
    """nn.Conv2d(Cin->Cout, (kh,kw), stride) as row-matrix operands."""
    w = np.asarray(weight, np.float32)            # [Cout, Cin, kh, kw]
    Cout, Cin, kh, kw = w.shape
    Ho = (H - kh) // stride + 1
    Wo = (W - kw) // stride + 1
    M = np.zeros((kh, W * Cin, Wo * Cout), np.float32)
    P = np.zeros((kh, N * Ho, N * H), np.float32)
    for ki in range(kh):
        for kj in range(kw):
            blk = w[:, :, ki, kj].T               # [Cin, Cout]
            for wo in range(Wo):
                wi = stride * wo + kj
                M[ki, wi * Cin:(wi + 1) * Cin, wo * Cout:(wo + 1) * Cout] += blk
        for n in range(N):
            for ho in range(Ho):
                P[ki, n * Ho + ho, n * H + stride * ho + ki] = 1.0
    brow = np.tile(np.asarray(bias, np.float32), Wo)[None, :]   # [1, Wo*Cout]
    return P, M, brow, Ho, Wo, Cout


def _convT_mats(weight, bias, H, W, stride, N):
    """nn.ConvTranspose2d(Cin->Cout, (kh,kw), stride, padding=0) operands."""
    w = np.asarray(weight, np.float32)            # [Cin, Cout, kh, kw]
    Cin, Cout, kh, kw = w.shape
    Ho = (H - 1) * stride + kh
    Wo = (W - 1) * stride + kw
    M = np.zeros((kh, W * Cin, Wo * Cout), np.float32)
    P = np.zeros((kh, N * Ho, N * H), np.float32)
    for ki in range(kh):
        for kj in range(kw):
            blk = w[:, :, ki, kj]                 # [Cin, Cout]
            for wi in range(W):
                wo = stride * wi + kj
                M[ki, wi * Cin:(wi + 1) * Cin, wo * Cout:(wo + 1) * Cout] += blk
        for n in range(N):
            for hi in range(H):
                P[ki, n * Ho + stride * hi + ki, n * H + hi] = 1.0
    brow = np.tile(np.asarray(bias, np.float32), Wo)[None, :]
    return P, M, brow, Ho, Wo, Cout


def _fc_encoder_mats(w_mu, b_mu, w_var, b_var, C, H, W, N):
    """fc_mu and fc_var fused; consumes the [N*H, W*C] row matrix directly."""
    latent = int(w_mu.shape[0])
    wm = np.asarray(w_mu, np.float32).reshape(latent, C, H, W)   # torch (c,h,w) flatten
    wv = np.asarray(w_var, np.float32).reshape(latent, C, H, W)
    M = np.zeros((H, W * C, 2 * latent), np.float32)
    P = np.zeros((H, N, N * H), np.float32)
    for h in range(H):
        for w in range(W):
            for c in range(C):
                M[h, w * C + c, :latent] = wm[:, c, h, w]
                M[h, w * C + c, latent:] = wv[:, c, h, w]
        for n in range(N):
            P[h, n, n * H + h] = 1.0
    brow = np.concatenate([np.asarray(b_mu, np.float32),
                           np.asarray(b_var, np.float32)])[None, :]
    return P, M, brow


def _fc_decoder_mats(w_d, b_d, C, H, W, N):
    """decoder_input Linear + .view(-1, C, H, W), emitted as a [N*H, W*C] row matrix."""
    in_dim = int(w_d.shape[1])
    wd = np.asarray(w_d, np.float32).reshape(C, H, W, in_dim)
    bd = np.asarray(b_d, np.float32).reshape(C, H, W)
    M = np.zeros((H, in_dim, W * C), np.float32)
    P = np.zeros((H, N * H, N), np.float32)
    bias = np.zeros((N * H, W * C), np.float32)
    for h in range(H):
        for w in range(W):
            for c in range(C):
                M[h, :, w * C + c] = wd[c, h, w, :]
        for n in range(N):
            P[h, n * H + h, n] = 1.0
    for n in range(N):
        for h in range(H):
            for w in range(W):
                for c in range(C):
                    bias[n * H + h, w * C + c] = bd[c, h, w]
    return P, M, bias


def prepare_operands(p, dims, batch):
    """Precompute (once) the P / M / bias operands of every fused layer."""
    hidden = dims["hidden"]
    N = batch
    latent = int(p["mu_w"].shape[0])

    cfgs, ops = [], []

    def add(P, M, b, relu, gather_first):
        cfgs.append((int(M.shape[0]), bool(relu), bool(gather_first)))
        ops.extend([jnp.asarray(P), jnp.asarray(M), jnp.asarray(b)])

    # ---- encoder convs (row gather first -> no wasted rows at stride 2) ----
    H, W, C = dims["fgx"], dims["fgy"], 1
    P, M, b, H, W, C = _conv_mats(p["e1_w"], p["e1_b"], H, W, 1, N)[:3] + \
        _conv_mats(p["e1_w"], p["e1_b"], dims["fgx"], dims["fgy"], 1, N)[3:]
    add(P, M, b, True, True)
    P, M, b, Ho, Wo, Co = _conv_mats(p["e3_w"], p["e3_b"], H, W, 2, N)
    add(P, M, b, True, True); H, W, C = Ho, Wo, Co
    P, M, b, Ho, Wo, Co = _conv_mats(p["e4_w"], p["e4_b"], H, W, 2, N)
    add(P, M, b, True, True); H, W, C = Ho, Wo, Co

    # ---- fc_mu | fc_var (fused into one matmul chain) ----
    P, M, b = _fc_encoder_mats(p["mu_w"], p["mu_b"], p["var_w"], p["var_b"], C, H, W, N)
    add(P, M, b, False, True)

    # ---- decoder_input (+ .view to [N, C, H, W]) ----
    C, H, W = hidden[2], dims["enbedimx"], dims["enbedimy"]
    P, M, b = _fc_decoder_mats(p["di_w"], p["di_b"], C, H, W, N)
    add(P, M, b, False, False)

    # ---- decoder transposed convs (scatter last -> no zero rows to the MXU) ----
    P, M, b, Ho, Wo, Co = _convT_mats(p["d4_w"], p["d4_b"], H, W, 2, N)
    add(P, M, b, True, False); H, W, C = Ho, Wo, Co
    P, M, b, Ho, Wo, Co = _convT_mats(p["d3_w"], p["d3_b"], H, W, 2, N)
    add(P, M, b, True, False); H, W, C = Ho, Wo, Co
    P, M, b, Ho, Wo, Co = _convT_mats(p["d1_w"], p["d1_b"], H, W, 1, N)
    add(P, M, b, False, False); H, W, C = Ho, Wo, Co

    meta = dict(latent=latent, batch=N, out_h=H, out_w=W,
                in_h=dims["fgx"], in_w=dims["fgy"])
    return tuple(cfgs), tuple(ops), meta


# ------------------------------- Pallas kernel -------------------------------

def _make_kernel(cfgs, latent):
    n_layers = len(cfgs)

    def kernel(*refs):
        img_ref, onehot_ref, eps_ref = refs[:3]
        layer_refs = refs[3:3 + 3 * n_layers]
        recon_ref, mu_ref, logvar_ref, mask_ref = refs[3 + 3 * n_layers:]

        def run_layer(idx, a):
            p_ref = layer_refs[3 * idx]
            m_ref = layer_refs[3 * idx + 1]
            b_ref = layer_refs[3 * idx + 2]
            kh, relu, gather_first = cfgs[idx]
            acc = b_ref[...]
            for ki in range(kh):
                p = p_ref[ki]
                m = m_ref[ki]
                if gather_first:   # forward conv / fc: gather rows, then mix channels
                    t = jnp.dot(jnp.dot(p, a, preferred_element_type=jnp.float32),
                                m, preferred_element_type=jnp.float32)
                else:              # transposed conv / decoder fc: mix, then scatter rows
                    t = jnp.dot(p, jnp.dot(a, m, preferred_element_type=jnp.float32),
                                preferred_element_type=jnp.float32)
                acc = acc + t
            if relu:
                acc = jnp.maximum(acc, 0.0)
            return acc

        img = img_ref[...]
        mask_ref[...] = (img != 0.0).astype(jnp.float32)       # (input != 0).float()

        a = run_layer(0, img)                                  # encoderl1 + ReLU
        a = run_layer(1, a)                                    # encoderl3 + ReLU
        a = run_layer(2, a)                                    # encoderl4 + ReLU
        stats = run_layer(3, a)                                # [fc_mu | fc_var]
        mu = stats[:, :latent]
        log_var = stats[:, latent:]
        mu_ref[...] = mu
        logvar_ref[...] = log_var

        z = eps_ref[...] * jnp.exp(0.5 * log_var) + mu         # reparameterize
        zplus = jnp.concatenate([z, onehot_ref[...]], axis=1)  # cat(z, cluster)

        d = run_layer(4, zplus)                                # decoder_input + view
        d = run_layer(5, d)                                    # decoderl4 + ReLU
        d = run_layer(6, d)                                    # decoderl3 + ReLU
        recon_ref[...] = run_layer(7, d)                       # decoderl1

    return kernel


def make_forward(cfgs, meta):
    """Build the fused single-pallas_call ClusterVAEmask forward."""
    assert len(cfgs) == 8
    latent = meta["latent"]
    N = meta["batch"]
    kernel = _make_kernel(cfgs, latent)

    def forward(ops, img, cluster_onehot, eps):
        n, c, h, w = img.shape
        assert c == 1 and n == N
        img_rows = img.reshape(n * h, w)   # free metadata reshape (C == 1)
        out_shape = (
            jax.ShapeDtypeStruct((N * meta["out_h"], meta["out_w"]), jnp.float32),
            jax.ShapeDtypeStruct((N, latent), jnp.float32),
            jax.ShapeDtypeStruct((N, latent), jnp.float32),
            jax.ShapeDtypeStruct((n * h, w), jnp.float32),
        )
        recon_rows, mu, log_var, mask_rows = pl.pallas_call(
            kernel, out_shape=out_shape)(img_rows, cluster_onehot, eps, *ops)
        recon = recon_rows.reshape(N, 1, meta["out_h"], meta["out_w"])
        mask = mask_rows.reshape(n, c, h, w)
        return [recon, (img, cluster_onehot), mu, log_var, mask]

    return forward


# ------------------------------ model parameters -----------------------------

def init_params(key, latent_dim, total_cluster, hidden, fgx, fgy):
    scanx, scany = fgx % 4 + 3, fgy % 4 + 3
    enbedimx = int(((fgx - scanx + 1) / 2 - 1) / 2 - 1)
    enbedimy = int(((fgy - scany + 1) / 2 - 1) / 2 - 1)
    node_int = int(enbedimx * enbedimy * hidden[2])

    keys = jax.random.split(key, 18)
    nrm = lambda k, s: 0.1 * jax.random.normal(k, s, jnp.float32)
    p = {
        "e1_w": nrm(keys[0], (hidden[0], 1, scanx, scany)),
        "e1_b": nrm(keys[1], (hidden[0],)),
        "e3_w": nrm(keys[2], (hidden[1], hidden[0], 4, 4)),
        "e3_b": nrm(keys[3], (hidden[1],)),
        "e4_w": nrm(keys[4], (hidden[2], hidden[1], 4, 4)),
        "e4_b": nrm(keys[5], (hidden[2],)),
        "mu_w": nrm(keys[6], (latent_dim, node_int)),
        "mu_b": nrm(keys[7], (latent_dim,)),
        "var_w": nrm(keys[8], (latent_dim, node_int)),
        "var_b": nrm(keys[9], (latent_dim,)),
        "di_w": nrm(keys[10], (node_int, latent_dim + total_cluster + 1)),
        "di_b": nrm(keys[11], (node_int,)),
        "d4_w": nrm(keys[12], (hidden[2], hidden[3], 4, 4)),
        "d4_b": nrm(keys[13], (hidden[3],)),
        "d3_w": nrm(keys[14], (hidden[3], hidden[4], 4, 4)),
        "d3_b": nrm(keys[15], (hidden[4],)),
        "d1_w": nrm(keys[16], (hidden[4], 1, scanx, scany)),
        "d1_b": nrm(keys[17], (1,)),
    }
    dims = dict(scanx=scanx, scany=scany, enbedimx=enbedimx, enbedimy=enbedimy,
                node_int=node_int, hidden=hidden, fgx=fgx, fgy=fgy)
    return p, dims


# ------------------------- plain-JAX reference (check) ------------------------

def reference_forward(p, dims, img, cluster_onehot, eps):
    hp = lax.Precision.HIGHEST

    def conv(x, w, b, s):
        y = lax.conv_general_dilated(x, w, (s, s), "VALID",
                                     dimension_numbers=("NCHW", "OIHW", "NCHW"),
                                     precision=hp)
        return y + b.reshape(1, -1, 1, 1)

    def convT(x, w, b, s):
        kh, kw = int(w.shape[2]), int(w.shape[3])
        w2 = jnp.flip(w, (2, 3)).transpose(1, 0, 2, 3)       # -> OIHW
        y = lax.conv_general_dilated(x, w2, (1, 1),
                                     padding=[(kh - 1, kh - 1), (kw - 1, kw - 1)],
                                     lhs_dilation=(s, s),
                                     dimension_numbers=("NCHW", "OIHW", "NCHW"),
                                     precision=hp)
        return y + b.reshape(1, -1, 1, 1)

    h = jax.nn.relu(conv(img, p["e1_w"], p["e1_b"], 1))
    h = jax.nn.relu(conv(h, p["e3_w"], p["e3_b"], 2))
    h = jax.nn.relu(conv(h, p["e4_w"], p["e4_b"], 2))
    flat = h.reshape(h.shape[0], -1)
    mu = jnp.dot(flat, p["mu_w"].T, precision=hp) + p["mu_b"]
    log_var = jnp.dot(flat, p["var_w"].T, precision=hp) + p["var_b"]
    z = eps * jnp.exp(0.5 * log_var) + mu
    zplus = jnp.concatenate([z, cluster_onehot], axis=1)
    d = jnp.dot(zplus, p["di_w"].T, precision=hp) + p["di_b"]
    d = d.reshape(-1, dims["hidden"][2], dims["enbedimx"], dims["enbedimy"])
    d = jax.nn.relu(convT(d, p["d4_w"], p["d4_b"], 2))
    d = jax.nn.relu(convT(d, p["d3_w"], p["d3_b"], 2))
    recon = convT(d, p["d1_w"], p["d1_b"], 1)
    mask = (img != 0).astype(jnp.float32)
    return recon, mu, log_var, mask


# ------------------------------------ main ------------------------------------

if __name__ == "__main__":
    latent_dim = 8
    total_cluster = 4
    hidden = [16, 8, 4, 8, 8]
    fgx = fgy = 24          # -> scan=3, embedding 4x4, node_int=64
    batch = 2

    key = jax.random.PRNGKey(0)
    k_par, k_img, k_zero, k_cl, k_eps = jax.random.split(key, 5)

    params, dims = init_params(k_par, latent_dim, total_cluster, hidden, fgx, fgy)

    img = jax.random.normal(k_img, (batch, 1, fgx, fgy), jnp.float32)
    img = img * (jax.random.uniform(k_zero, img.shape) > 0.3).astype(jnp.float32)
    cluster_onehot = jax.nn.one_hot(
        jax.random.randint(k_cl, (batch,), 0, total_cluster + 1),
        total_cluster + 1, dtype=jnp.float32)
    # TODO(synk): torch.manual_seed(seed)+torch.randn bit-exact RNG is not
    # reproducible in JAX; eps is drawn deterministically from jax.random instead.
    eps = jax.random.normal(k_eps, (batch, latent_dim), jnp.float32)

    cfgs, ops, meta = prepare_operands(params, dims, batch)
    forward = jax.jit(make_forward(cfgs, meta))

    recon, inputs, mu, log_var, mask = forward(ops, img, cluster_onehot, eps)
    jax.block_until_ready((recon, mu, log_var, mask))

    assert recon.shape == (batch, 1, fgx, fgy)
    assert mu.shape == (batch, latent_dim)
    assert log_var.shape == (batch, latent_dim)
    assert mask.shape == (batch, 1, fgx, fgy)

    # Validate the fused kernel against a plain-JAX reference of the module.
    r_recon, r_mu, r_lv, r_mask = reference_forward(params, dims, img,
                                                    cluster_onehot, eps)
    for got, want in ((recon, r_recon), (mu, r_mu), (log_var, r_lv), (mask, r_mask)):
        err = float(jnp.max(jnp.abs(got - want)))
        assert err < 1e-3, f"kernel/reference mismatch: {err}"

    print("KERNEL_OK")
</pallas_src>

<mosaic_0001>
module attributes {stable_mosaic.version = 11 : i64} {
  func.func @kernel(%arg0: memref<48x24xf32, #tpu.memory_space<vmem>>, %arg1: memref<2x5xf32, #tpu.memory_space<vmem>>, %arg2: memref<2x8xf32, #tpu.memory_space<vmem>>, %arg3: memref<3x44x48xf32, #tpu.memory_space<vmem>>, %arg4: memref<3x24x352xf32, #tpu.memory_space<vmem>>, %arg5: memref<1x352xf32, #tpu.memory_space<vmem>>, %arg6: memref<4x20x44xf32, #tpu.memory_space<vmem>>, %arg7: memref<4x352x80xf32, #tpu.memory_space<vmem>>, %arg8: memref<1x80xf32, #tpu.memory_space<vmem>>, %arg9: memref<4x8x20xf32, #tpu.memory_space<vmem>>, %arg10: memref<4x80x16xf32, #tpu.memory_space<vmem>>, %arg11: memref<1x16xf32, #tpu.memory_space<vmem>>, %arg12: memref<4x2x8xf32, #tpu.memory_space<vmem>>, %arg13: memref<4x16x16xf32, #tpu.memory_space<vmem>>, %arg14: memref<1x16xf32, #tpu.memory_space<vmem>>, %arg15: memref<4x8x2xf32, #tpu.memory_space<vmem>>, %arg16: memref<4x13x16xf32, #tpu.memory_space<vmem>>, %arg17: memref<8x16xf32, #tpu.memory_space<vmem>>, %arg18: memref<4x20x8xf32, #tpu.memory_space<vmem>>, %arg19: memref<4x16x80xf32, #tpu.memory_space<vmem>>, %arg20: memref<1x80xf32, #tpu.memory_space<vmem>>, %arg21: memref<4x44x20xf32, #tpu.memory_space<vmem>>, %arg22: memref<4x80x176xf32, #tpu.memory_space<vmem>>, %arg23: memref<1x176xf32, #tpu.memory_space<vmem>>, %arg24: memref<3x48x44xf32, #tpu.memory_space<vmem>>, %arg25: memref<3x176x24xf32, #tpu.memory_space<vmem>>, %arg26: memref<1x24xf32, #tpu.memory_space<vmem>>, %arg27: memref<48x24xf32, #tpu.memory_space<vmem>>, %arg28: memref<2x8xf32, #tpu.memory_space<vmem>>, %arg29: memref<2x8xf32, #tpu.memory_space<vmem>>, %arg30: memref<48x24xf32, #tpu.memory_space<vmem>>) attributes {dimension_semantics = [], scalar_prefetch = 0 : i64, scratch_operands = 0 : i64, tpu.core_type = #tpu.core_type<tc>} {
    %c0 = arith.constant 0 : index
    %c0_0 = arith.constant 0 : index
    %0 = vector.load %arg0[%c0, %c0_0] : memref<48x24xf32, #tpu.memory_space<vmem>>, vector<48x24xf32>
    %cst = arith.constant 0.000000e+00 : f32
    %1 = vector.broadcast %cst : f32 to vector<48x24xf32>
    %2 = arith.cmpf one, %0, %1 : vector<48x24xf32>
    %3 = arith.extui %2 : vector<48x24xi1> to vector<48x24xi32>
    %4 = arith.sitofp %3 : vector<48x24xi32> to vector<48x24xf32>
    %c0_1 = arith.constant 0 : index
    %c0_2 = arith.constant 0 : index
    %5 = vector.load %arg30[%c0_1, %c0_2] : memref<48x24xf32, #tpu.memory_space<vmem>>, vector<48x24xf32>
    tpu.vector_store %arg30[%c0_1, %c0_2], %4 {strides = array<i32>} : memref<48x24xf32, #tpu.memory_space<vmem>>, vector<48x24xf32>,
    %c0_3 = arith.constant 0 : index
    %c0_4 = arith.constant 0 : index
    %6 = vector.load %arg5[%c0_3, %c0_4] : memref<1x352xf32, #tpu.memory_space<vmem>>, vector<1x352xf32>
    %c0_5 = arith.constant 0 : index
    %c0_6 = arith.constant 0 : index
    %c0_7 = arith.constant 0 : index
    %7 = vector.load %arg3[%c0_5, %c0_6, %c0_7] : memref<3x44x48xf32, #tpu.memory_space<vmem>>, vector<1x44x48xf32>
    %8 = vector.shape_cast %7 : vector<1x44x48xf32> to vector<44x48xf32>
    %c0_8 = arith.constant 0 : index
    %c0_9 = arith.constant 0 : index
    %c0_10 = arith.constant 0 : index
    %9 = vector.load %arg4[%c0_8, %c0_9, %c0_10] : memref<3x24x352xf32, #tpu.memory_space<vmem>>, vector<1x24x352xf32>
    %10 = vector.shape_cast %9 : vector<1x24x352xf32> to vector<24x352xf32>
    %cst_11 = arith.constant dense<0.000000e+00> : vector<44x24xf32>
    %11 = tpu.matmul %8, %0, %cst_11 {dimension_numbers = #tpu.dot_dimension_numbers<[1], [0], [0], [1], [0, 0, 1, 1], [], []>} : vector<44x48xf32>, vector<48x24xf32>, vector<44x24xf32> -> vector<44x24xf32>
    %cst_12 = arith.constant dense<0.000000e+00> : vector<44x352xf32>
    %12 = tpu.matmul %11, %10, %cst_12 {dimension_numbers = #tpu.dot_dimension_numbers<[1], [0], [0], [1], [0, 0, 1, 1], [], []>} : vector<44x24xf32>, vector<24x352xf32>, vector<44x352xf32> -> vector<44x352xf32>
    %13 = vector.broadcast %6 : vector<1x352xf32> to vector<44x352xf32>
    %14 = arith.addf %13, %12 : vector<44x352xf32>
    %c1 = arith.constant 1 : index
    %c0_13 = arith.constant 0 : index
    %c0_14 = arith.constant 0 : index
    %15 = vector.load %arg3[%c1, %c0_13, %c0_14] : memref<3x44x48xf32, #tpu.memory_space<vmem>>, vector<1x44x48xf32>
    %16 = vector.shape_cast %15 : vector<1x44x48xf32> to vector<44x48xf32>
    %c1_15 = arith.constant 1 : index
    %c0_16 = arith.constant 0 : index
    %c0_17 = arith.constant 0 : index
    %17 = vector.load %arg4[%c1_15, %c0_16, %c0_17] : memref<3x24x352xf32, #tpu.memory_space<vmem>>, vector<1x24x352xf32>
    %18 = vector.shape_cast %17 : vector<1x24x352xf32> to vector<24x352xf32>
    %cst_18 = arith.constant dense<0.000000e+00> : vector<44x24xf32>
    %19 = tpu.matmul %16, %0, %cst_18 {dimension_numbers = #tpu.dot_dimension_numbers<[1], [0], [0], [1], [0, 0, 1, 1], [], []>} : vector<44x48xf32>, vector<48x24xf32>, vector<44x24xf32> -> vector<44x24xf32>
    %cst_19 = arith.constant dense<0.000000e+00> : vector<44x352xf32>
    %20 = tpu.matmul %19, %18, %cst_19 {dimension_numbers = #tpu.dot_dimension_numbers<[1], [0], [0], [1], [0, 0, 1, 1], [], []>} : vector<44x24xf32>, vector<24x352xf32>, vector<44x352xf32> -> vector<44x352xf32>
    %21 = arith.addf %14, %20 : vector<44x352xf32>
    %c2 = arith.constant 2 : index
    %c0_20 = arith.constant 0 : index
    %c0_21 = arith.constant 0 : index
    %22 = vector.load %arg3[%c2, %c0_20, %c0_21] : memref<3x44x48xf32, #tpu.memory_space<vmem>>, vector<1x44x48xf32>
    %23 = vector.shape_cast %22 : vector<1x44x48xf32> to vector<44x48xf32>
    %c2_22 = arith.constant 2 : index
    %c0_23 = arith.constant 0 : index
    %c0_24 = arith.constant 0 : index
    %24 = vector.load %arg4[%c2_22, %c0_23, %c0_24] : memref<3x24x352xf32, #tpu.memory_space<vmem>>, vector<1x24x352xf32>
    %25 = vector.shape_cast %24 : vector<1x24x352xf32> to vector<24x352xf32>
    %cst_25 = arith.constant dense<0.000000e+00> : vector<44x24xf32>
    %26 = tpu.matmul %23, %0, %cst_25 {dimension_numbers = #tpu.dot_dimension_numbers<[1], [0], [0], [1], [0, 0, 1, 1], [], []>} : vector<44x48xf32>, vector<48x24xf32>, vector<44x24xf32> -> vector<44x24xf32>
    %cst_26 = arith.constant dense<0.000000e+00> : vector<44x352xf32>
    %27 = tpu.matmul %26, %25, %cst_26 {dimension_numbers = #tpu.dot_dimension_numbers<[1], [0], [0], [1], [0, 0, 1, 1], [], []>} : vector<44x24xf32>, vector<24x352xf32>, vector<44x352xf32> -> vector<44x352xf32>
    %28 = arith.addf %21, %27 : vector<44x352xf32>
    %cst_27 = arith.constant 0.000000e+00 : f32
    %29 = vector.broadcast %cst_27 : f32 to vector<44x352xf32>
    %30 = arith.maximumf %28, %29 : vector<44x352xf32>
    %c0_28 = arith.constant 0 : index
    %c0_29 = arith.constant 0 : index
    %31 = vector.load %arg8[%c0_28, %c0_29] : memref<1x80xf32, #tpu.memory_space<vmem>>, vector<1x80xf32>
    %c0_30 = arith.constant 0 : index
    %c0_31 = arith.constant 0 : index
    %c0_32 = arith.constant 0 : index
    %32 = vector.load %arg6[%c0_30, %c0_31, %c0_32] : memref<4x20x44xf32, #tpu.memory_space<vmem>>, vector<1x20x44xf32>
    %33 = vector.shape_cast %32 : vector<1x20x44xf32> to vector<20x44xf32>
    %c0_33 = arith.constant 0 : index
    %c0_34 = arith.constant 0 : index
    %c0_35 = arith.constant 0 : index
    %34 = vector.load %arg7[%c0_33, %c0_34, %c0_35] : memref<4x352x80xf32, #tpu.memory_space<vmem>>, vector<1x352x80xf32>
    %35 = vector.shape_cast %34 : vector<1x352x80xf32> to vector<352x80xf32>
    %cst_36 = arith.constant dense<0.000000e+00> : vector<20x352xf32>
    %36 = tpu.matmul %33, %30, %cst_36 {dimension_numbers = #tpu.dot_dimension_numbers<[1], [0], [0], [1], [0, 0, 1, 1], [], []>} : vector<20x44xf32>, vector<44x352xf32>, vector<20x352xf32> -> vector<20x352xf32>
    %cst_37 = arith.constant dense<0.000000e+00> : vector<20x80xf32>
    %37 = tpu.matmul %36, %35, %cst_37 {dimension_numbers = #tpu.dot_dimension_numbers<[1], [0], [0], [1], [0, 0, 1, 1], [], []>} : vector<20x352xf32>, vector<352x80xf32>, vector<20x80xf32> -> vector<20x80xf32>
    %38 = vector.broadcast %31 : vector<1x80xf32> to vector<20x80xf32>
    %39 = arith.addf %38, %37 : vector<20x80xf32>
    %c1_38 = arith.constant 1 : index
    %c0_39 = arith.constant 0 : index
    %c0_40 = arith.constant 0 : index
    %40 = vector.load %arg6[%c1_38, %c0_39, %c0_40] : memref<4x20x44xf32, #tpu.memory_space<vmem>>, vector<1x20x44xf32>
    %41 = vector.shape_cast %40 : vector<1x20x44xf32> to vector<20x44xf32>
    %c1_41 = arith.constant 1 : index
    %c0_42 = arith.constant 0 : index
    %c0_43 = arith.constant 0 : index
    %42 = vector.load %arg7[%c1_41, %c0_42, %c0_43] : memref<4x352x80xf32, #tpu.memory_space<vmem>>, vector<1x352x80xf32>
    %43 = vector.shape_cast %42 : vector<1x352x80xf32> to vector<352x80xf32>
    %cst_44 = arith.constant dense<0.000000e+00> : vector<20x352xf32>
    %44 = tpu.matmul %41, %30, %cst_44 {dimension_numbers = #tpu.dot_dimension_numbers<[1], [0], [0], [1], [0, 0, 1, 1], [], []>} : vector<20x44xf32>, vector<44x352xf32>, vector<20x352xf32> -> vector<20x352xf32>
    %cst_45 = arith.constant dense<0.000000e+00> : vector<20x80xf32>
    %45 = tpu.matmul %44, %43, %cst_45 {dimension_numbers = #tpu.dot_dimension_numbers<[1], [0], [0], [1], [0, 0, 1, 1], [], []>} : vector<20x352xf32>, vector<352x80xf32>, vector<20x80xf32> -> vector<20x80xf32>
    %46 = arith.addf %39, %45 : vector<20x80xf32>
    %c2_46 = arith.constant 2 : index
    %c0_47 = arith.constant 0 : index
    %c0_48 = arith.constant 0 : index
    %47 = vector.load %arg6[%c2_46, %c0_47, %c0_48] : memref<4x20x44xf32, #tpu.memory_space<vmem>>, vector<1x20x44xf32>
    %48 = vector.shape_cast %47 : vector<1x20x44xf32> to vector<20x44xf32>
    %c2_49 = arith.constant 2 : index
    %c0_50 = arith.constant 0 : index
    %c0_51 = arith.constant 0 : index
    %49 = vector.load %arg7[%c2_49, %c0_50, %c0_51] : memref<4x352x80xf32, #tpu.memory_space<vmem>>, vector<1x352x80xf32>
    %50 = vector.shape_cast %49 : vector<1x352x80xf32> to vector<352x80xf32>
    %cst_52 = arith.constant dense<0.000000e+00> : vector<20x352xf32>
    %51 = tpu.matmul %48, %30, %cst_52 {dimension_numbers = #tpu.dot_dimension_numbers<[1], [0], [0], [1], [0, 0, 1, 1], [], []>} : vector<20x44xf32>, vector<44x352xf32>, vector<20x352xf32> -> vector<20x352xf32>
    %cst_53 = arith.constant dense<0.000000e+00> : vector<20x80xf32>
    %52 = tpu.matmul %51, %50, %cst_53 {dimension_numbers = #tpu.dot_dimension_numbers<[1], [0], [0], [1], [0, 0, 1, 1], [], []>} : vector<20x352xf32>, vector<352x80xf32>, vector<20x80xf32> -> vector<20x80xf32>
    %53 = arith.addf %46, %52 : vector<20x80xf32>
    %c3 = arith.constant 3 : index
    %c0_54 = arith.constant 0 : index
    %c0_55 = arith.constant 0 : index
    %54 = vector.load %arg6[%c3, %c0_54, %c0_55] : memref<4x20x44xf32, #tpu.memory_space<vmem>>, vector<1x20x44xf32>
    %55 = vector.shape_cast %54 : vector<1x20x44xf32> to vector<20x44xf32>
    %c3_56 = arith.constant 3 : index
    %c0_57 = arith.constant 0 : index
    %c0_58 = arith.constant 0 : index
    %56 = vector.load %arg7[%c3_56, %c0_57, %c0_58] : memref<4x352x80xf32, #tpu.memory_space<vmem>>, vector<1x352x80xf32>
    %57 = vector.shape_cast %56 : vector<1x352x80xf32> to vector<352x80xf32>
    %cst_59 = arith.constant dense<0.000000e+00> : vector<20x352xf32>
    %58 = tpu.matmul %55, %30, %cst_59 {dimension_numbers = #tpu.dot_dimension_numbers<[1], [0], [0], [1], [0, 0, 1, 1], [], []>} : vector<20x44xf32>, vector<44x352xf32>, vector<20x352xf32> -> vector<20x352xf32>
    %cst_60 = arith.constant dense<0.000000e+00> : vector<20x80xf32>
    %59 = tpu.matmul %58, %57, %cst_60 {dimension_numbers = #tpu.dot_dimension_numbers<[1], [0], [0], [1], [0, 0, 1, 1], [], []>} : vector<20x352xf32>, vector<352x80xf32>, vector<20x80xf32> -> vector<20x80xf32>
    %60 = arith.addf %53, %59 : vector<20x80xf32>
    %cst_61 = arith.constant 0.000000e+00 : f32
    %61 = vector.broadcast %cst_61 : f32 to vector<20x80xf32>
    %62 = arith.maximumf %60, %61 : vector<20x80xf32>
    %c0_62 = arith.constant 0 : index
    %c0_63 = arith.constant 0 : index
    %63 = vector.load %arg11[%c0_62, %c0_63] : memref<1x16xf32, #tpu.memory_space<vmem>>, vector<1x16xf32>
    %c0_64 = arith.constant 0 : index
    %c0_65 = arith.constant 0 : index
    %c0_66 = arith.constant 0 : index
    %64 = vector.load %arg9[%c0_64, %c0_65, %c0_66] : memref<4x8x20xf32, #tpu.memory_space<vmem>>, vector<1x8x20xf32>
    %65 = vector.shape_cast %64 : vector<1x8x20xf32> to vector<8x20xf32>
    %c0_67 = arith.constant 0 : index
    %c0_68 = arith.constant 0 : index
    %c0_69 = arith.constant 0 : index
    %66 = vector.load %arg10[%c0_67, %c0_68, %c0_69] : memref<4x80x16xf32, #tpu.memory_space<vmem>>, vector<1x80x16xf32>
    %67 = vector.shape_cast %66 : vector<1x80x16xf32> to vector<80x16xf32>
    %cst_70 = arith.constant dense<0.000000e+00> : vector<8x80xf32>
    %68 = tpu.matmul %65, %62, %cst_70 {dimension_numbers = #tpu.dot_dimension_numbers<[1], [0], [0], [1], [0, 0, 1, 1], [], []>} : vector<8x20xf32>, vector<20x80xf32>, vector<8x80xf32> -> vector<8x80xf32>
    %cst_71 = arith.constant dense<0.000000e+00> : vector<8x16xf32>
    %69 = tpu.matmul %68, %67, %cst_71 {dimension_numbers = #tpu.dot_dimension_numbers<[1], [0], [0], [1], [0, 0, 1, 1], [], []>} : vector<8x80xf32>, vector<80x16xf32>, vector<8x16xf32> -> vector<8x16xf32>
    %70 = vector.broadcast %63 : vector<1x16xf32> to vector<8x16xf32>
    %71 = arith.addf %70, %69 : vector<8x16xf32>
    %c1_72 = arith.constant 1 : index
    %c0_73 = arith.constant 0 : index
    %c0_74 = arith.constant 0 : index
    %72 = vector.load %arg9[%c1_72, %c0_73, %c0_74] : memref<4x8x20xf32, #tpu.memory_space<vmem>>, vector<1x8x20xf32>
    %73 = vector.shape_cast %72 : vector<1x8x20xf32> to vector<8x20xf32>
    %c1_75 = arith.constant 1 : index
    %c0_76 = arith.constant 0 : index
    %c0_77 = arith.constant 0 : index
    %74 = vector.load %arg10[%c1_75, %c0_76, %c0_77] : memref<4x80x16xf32, #tpu.memory_space<vmem>>, vector<1x80x16xf32>
    %75 = vector.shape_cast %74 : vector<1x80x16xf32> to vector<80x16xf32>
    %cst_78 = arith.constant dense<0.000000e+00> : vector<8x80xf32>
    %76 = tpu.matmul %73, %62, %cst_78 {dimension_numbers = #tpu.dot_dimension_numbers<[1], [0], [0], [1], [0, 0, 1, 1], [], []>} : vector<8x20xf32>, vector<20x80xf32>, vector<8x80xf32> -> vector<8x80xf32>
    %cst_79 = arith.constant dense<0.000000e+00> : vector<8x16xf32>
    %77 = tpu.matmul %76, %75, %cst_79 {dimension_numbers = #tpu.dot_dimension_numbers<[1], [0], [0], [1], [0, 0, 1, 1], [], []>} : vector<8x80xf32>, vector<80x16xf32>, vector<8x16xf32> -> vector<8x16xf32>
    %78 = arith.addf %71, %77 : vector<8x16xf32>
    %c2_80 = arith.constant 2 : index
    %c0_81 = arith.constant 0 : index
    %c0_82 = arith.constant 0 : index
    %79 = vector.load %arg9[%c2_80, %c0_81, %c0_82] : memref<4x8x20xf32, #tpu.memory_space<vmem>>, vector<1x8x20xf32>
    %80 = vector.shape_cast %79 : vector<1x8x20xf32> to vector<8x20xf32>
    %c2_83 = arith.constant 2 : index
    %c0_84 = arith.constant 0 : index
    %c0_85 = arith.constant 0 : index
    %81 = vector.load %arg10[%c2_83, %c0_84, %c0_85] : memref<4x80x16xf32, #tpu.memory_space<vmem>>, vector<1x80x16xf32>
    %82 = vector.shape_cast %81 : vector<1x80x16xf32> to vector<80x16xf32>
    %cst_86 = arith.constant dense<0.000000e+00> : vector<8x80xf32>
    %83 = tpu.matmul %80, %62, %cst_86 {dimension_numbers = #tpu.dot_dimension_numbers<[1], [0], [0], [1], [0, 0, 1, 1], [], []>} : vector<8x20xf32>, vector<20x80xf32>, vector<8x80xf32> -> vector<8x80xf32>
    %cst_87 = arith.constant dense<0.000000e+00> : vector<8x16xf32>
    %84 = tpu.matmul %83, %82, %cst_87 {dimension_numbers = #tpu.dot_dimension_numbers<[1], [0], [0], [1], [0, 0, 1, 1], [], []>} : vector<8x80xf32>, vector<80x16xf32>, vector<8x16xf32> -> vector<8x16xf32>
    %85 = arith.addf %78, %84 : vector<8x16xf32>
    %c3_88 = arith.constant 3 : index
    %c0_89 = arith.constant 0 : index
    %c0_90 = arith.constant 0 : index
    %86 = vector.load %arg9[%c3_88, %c0_89, %c0_90] : memref<4x8x20xf32, #tpu.memory_space<vmem>>, vector<1x8x20xf32>
    %87 = vector.shape_cast %86 : vector<1x8x20xf32> to vector<8x20xf32>
    %c3_91 = arith.constant 3 : index
    %c0_92 = arith.constant 0 : index
    %c0_93 = arith.constant 0 : index
    %88 = vector.load %arg10[%c3_91, %c0_92, %c0_93] : memref<4x80x16xf32, #tpu.memory_space<vmem>>, vector<1x80x16xf32>
    %89 = vector.shape_cast %88 : vector<1x80x16xf32> to vector<80x16xf32>
    %cst_94 = arith.constant dense<0.000000e+00> : vector<8x80xf32>
    %90 = tpu.matmul %87, %62, %cst_94 {dimension_numbers = #tpu.dot_dimension_numbers<[1], [0], [0], [1], [0, 0, 1, 1], [], []>} : vector<8x20xf32>, vector<20x80xf32>, vector<8x80xf32> -> vector<8x80xf32>
    %cst_95 = arith.constant dense<0.000000e+00> : vector<8x16xf32>
    %91 = tpu.matmul %90, %89, %cst_95 {dimension_numbers = #tpu.dot_dimension_numbers<[1], [0], [0], [1], [0, 0, 1, 1], [], []>} : vector<8x80xf32>, vector<80x16xf32>, vector<8x16xf32> -> vector<8x16xf32>
    %92 = arith.addf %85, %91 : vector<8x16xf32>
    %cst_96 = arith.constant 0.000000e+00 : f32
    %93 = vector.broadcast %cst_96 : f32 to vector<8x16xf32>
    %94 = arith.maximumf %92, %93 : vector<8x16xf32>
    %c0_97 = arith.constant 0 : index
    %c0_98 = arith.constant 0 : index
    %95 = vector.load %arg14[%c0_97, %c0_98] : memref<1x16xf32, #tpu.memory_space<vmem>>, vector<1x16xf32>
    %c0_99 = arith.constant 0 : index
    %c0_100 = arith.constant 0 : index
    %c0_101 = arith.constant 0 : index
    %96 = vector.load %arg12[%c0_99, %c0_100, %c0_101] : memref<4x2x8xf32, #tpu.memory_space<vmem>>, vector<1x2x8xf32>
    %97 = vector.shape_cast %96 : vector<1x2x8xf32> to vector<2x8xf32>
    %c0_102 = arith.constant 0 : index
    %c0_103 = arith.constant 0 : index
    %c0_104 = arith.constant 0 : index
    %98 = vector.load %arg13[%c0_102, %c0_103, %c0_104] : memref<4x16x16xf32, #tpu.memory_space<vmem>>, vector<1x16x16xf32>
    %99 = vector.shape_cast %98 : vector<1x16x16xf32> to vector<16x16xf32>
    %cst_105 = arith.constant dense<0.000000e+00> : vector<2x16xf32>
    %100 = tpu.matmul %97, %94, %cst_105 {dimension_numbers = #tpu.dot_dimension_numbers<[1], [0], [0], [1], [0, 0, 1, 1], [], []>} : vector<2x8xf32>, vector<8x16xf32>, vector<2x16xf32> -> vector<2x16xf32>
    %cst_106 = arith.constant dense<0.000000e+00> : vector<2x16xf32>
    %101 = tpu.matmul %100, %99, %cst_106 {dimension_numbers = #tpu.dot_dimension_numbers<[1], [0], [0], [1], [0, 0, 1, 1], [], []>} : vector<2x16xf32>, vector<16x16xf32>, vector<2x16xf32> -> vector<2x16xf32>
    %102 = vector.broadcast %95 : vector<1x16xf32> to vector<2x16xf32>
    %103 = arith.addf %102, %101 : vector<2x16xf32>
    %c1_107 = arith.constant 1 : index
    %c0_108 = arith.constant 0 : index
    %c0_109 = arith.constant 0 : index
    %104 = vector.load %arg12[%c1_107, %c0_108, %c0_109] : memref<4x2x8xf32, #tpu.memory_space<vmem>>, vector<1x2x8xf32>
    %105 = vector.shape_cast %104 : vector<1x2x8xf32> to vector<2x8xf32>
    %c1_110 = arith.constant 1 : index
    %c0_111 = arith.constant 0 : index
    %c0_112 = arith.constant 0 : index
    %106 = vector.load %arg13[%c1_110, %c0_111, %c0_112] : memref<4x16x16xf32, #tpu.memory_space<vmem>>, vector<1x16x16xf32>
    %107 = vector.shape_cast %106 : vector<1x16x16xf32> to vector<16x16xf32>
    %cst_113 = arith.constant dense<0.000000e+00> : vector<2x16xf32>
    %108 = tpu.matmul %105, %94, %cst_113 {dimension_numbers = #tpu.dot_dimension_numbers<[1], [0], [0], [1], [0, 0, 1, 1], [], []>} : vector<2x8xf32>, vector<8x16xf32>, vector<2x16xf32> -> vector<2x16xf32>
    %cst_114 = arith.constant dense<0.000000e+00> : vector<2x16xf32>
    %109 = tpu.matmul %108, %107, %cst_114 {dimension_numbers = #tpu.dot_dimension_numbers<[1], [0], [0], [1], [0, 0, 1, 1], [], []>} : vector<2x16xf32>, vector<16x16xf32>, vector<2x16xf32> -> vector<2x16xf32>
    %110 = arith.addf %103, %109 : vector<2x16xf32>
    %c2_115 = arith.constant 2 : index
    %c0_116 = arith.constant 0 : index
    %c0_117 = arith.constant 0 : index
    %111 = vector.load %arg12[%c2_115, %c0_116, %c0_117] : memref<4x2x8xf32, #tpu.memory_space<vmem>>, vector<1x2x8xf32>
    %112 = vector.shape_cast %111 : vector<1x2x8xf32> to vector<2x8xf32>
    %c2_118 = arith.constant 2 : index
    %c0_119 = arith.constant 0 : index
    %c0_120 = arith.constant 0 : index
    %113 = vector.load %arg13[%c2_118, %c0_119, %c0_120] : memref<4x16x16xf32, #tpu.memory_space<vmem>>, vector<1x16x16xf32>
    %114 = vector.shape_cast %113 : vector<1x16x16xf32> to vector<16x16xf32>
    %cst_121 = arith.constant dense<0.000000e+00> : vector<2x16xf32>
    %115 = tpu.matmul %112, %94, %cst_121 {dimension_numbers = #tpu.dot_dimension_numbers<[1], [0], [0], [1], [0, 0, 1, 1], [], []>} : vector<2x8xf32>, vector<8x16xf32>, vector<2x16xf32> -> vector<2x16xf32>
    %cst_122 = arith.constant dense<0.000000e+00> : vector<2x16xf32>
    %116 = tpu.matmul %115, %114, %cst_122 {dimension_numbers = #tpu.dot_dimension_numbers<[1], [0], [0], [1], [0, 0, 1, 1], [], []>} : vector<2x16xf32>, vector<16x16xf32>, vector<2x16xf32> -> vector<2x16xf32>
    %117 = arith.addf %110, %116 : vector<2x16xf32>
    %c3_123 = arith.constant 3 : index
    %c0_124 = arith.constant 0 : index
    %c0_125 = arith.constant 0 : index
    %118 = vector.load %arg12[%c3_123, %c0_124, %c0_125] : memref<4x2x8xf32, #tpu.memory_space<vmem>>, vector<1x2x8xf32>
    %119 = vector.shape_cast %118 : vector<1x2x8xf32> to vector<2x8xf32>
    %c3_126 = arith.constant 3 : index
    %c0_127 = arith.constant 0 : index
    %c0_128 = arith.constant 0 : index
    %120 = vector.load %arg13[%c3_126, %c0_127, %c0_128] : memref<4x16x16xf32, #tpu.memory_space<vmem>>, vector<1x16x16xf32>
    %121 = vector.shape_cast %120 : vector<1x16x16xf32> to vector<16x16xf32>
    %cst_129 = arith.constant dense<0.000000e+00> : vector<2x16xf32>
    %122 = tpu.matmul %119, %94, %cst_129 {dimension_numbers = #tpu.dot_dimension_numbers<[1], [0], [0], [1], [0, 0, 1, 1], [], []>} : vector<2x8xf32>, vector<8x16xf32>, vector<2x16xf32> -> vector<2x16xf32>
    %cst_130 = arith.constant dense<0.000000e+00> : vector<2x16xf32>
    %123 = tpu.matmul %122, %121, %cst_130 {dimension_numbers = #tpu.dot_dimension_numbers<[1], [0], [0], [1], [0, 0, 1, 1], [], []>} : vector<2x16xf32>, vector<16x16xf32>, vector<2x16xf32> -> vector<2x16xf32>
    %124 = arith.addf %117, %123 : vector<2x16xf32>
    %125 = vector.extract_strided_slice %124 {offsets = [0, 0], sizes = [2, 8], strides = [1, 1]} : vector<2x16xf32> to vector<2x8xf32>
    %126 = vector.extract_strided_slice %124 {offsets = [0, 8], sizes = [2, 8], strides = [1, 1]} : vector<2x16xf32> to vector<2x8xf32>
    %c0_131 = arith.constant 0 : index
    %c0_132 = arith.constant 0 : index
    %127 = vector.load %arg28[%c0_131, %c0_132] : memref<2x8xf32, #tpu.memory_space<vmem>>, vector<2x8xf32>
    tpu.vector_store %arg28[%c0_131, %c0_132], %125 {strides = array<i32>} : memref<2x8xf32, #tpu.memory_space<vmem>>, vector<2x8xf32>,
    %c0_133 = arith.constant 0 : index
    %c0_134 = arith.constant 0 : index
    %128 = vector.load %arg29[%c0_133, %c0_134] : memref<2x8xf32, #tpu.memory_space<vmem>>, vector<2x8xf32>
    tpu.vector_store %arg29[%c0_133, %c0_134], %126 {strides = array<i32>} : memref<2x8xf32, #tpu.memory_space<vmem>>, vector<2x8xf32>,
    %c0_135 = arith.constant 0 : index
    %c0_136 = arith.constant 0 : index
    %129 = vector.load %arg2[%c0_135, %c0_136] : memref<2x8xf32, #tpu.memory_space<vmem>>, vector<2x8xf32>
    %cst_137 = arith.constant 5.000000e-01 : f32
    %130 = vector.broadcast %cst_137 : f32 to vector<2x8xf32>
    %131 = arith.mulf %130, %126 : vector<2x8xf32>
    %132 = math.exp %131 : vector<2x8xf32>
    %133 = arith.mulf %129, %132 : vector<2x8xf32>
    %134 = arith.addf %133, %125 : vector<2x8xf32>
    %c0_138 = arith.constant 0 : index
    %c0_139 = arith.constant 0 : index
    %135 = vector.load %arg1[%c0_138, %c0_139] : memref<2x5xf32, #tpu.memory_space<vmem>>, vector<2x5xf32>
    %136 = tpu.concatenate %134, %135 in 1 : vector<2x8xf32>, vector<2x5xf32> -> vector<2x13xf32>
    %c0_140 = arith.constant 0 : index
    %c0_141 = arith.constant 0 : index
    %137 = vector.load %arg17[%c0_140, %c0_141] : memref<8x16xf32, #tpu.memory_space<vmem>>, vector<8x16xf32>
    %c0_142 = arith.constant 0 : index
    %c0_143 = arith.constant 0 : index
    %c0_144 = arith.constant 0 : index
    %138 = vector.load %arg15[%c0_142, %c0_143, %c0_144] : memref<4x8x2xf32, #tpu.memory_space<vmem>>, vector<1x8x2xf32>
    %139 = vector.shape_cast %138 : vector<1x8x2xf32> to vector<8x2xf32>
    %c0_145 = arith.constant 0 : index
    %c0_146 = arith.constant 0 : index
    %c0_147 = arith.constant 0 : index
    %140 = vector.load %arg16[%c0_145, %c0_146, %c0_147] : memref<4x13x16xf32, #tpu.memory_space<vmem>>, vector<1x13x16xf32>
    %141 = vector.shape_cast %140 : vector<1x13x16xf32> to vector<13x16xf32>
    %cst_148 = arith.constant dense<0.000000e+00> : vector<2x16xf32>
    %142 = tpu.matmul %136, %141, %cst_148 {dimension_numbers = #tpu.dot_dimension_numbers<[1], [0], [0], [1], [0, 0, 1, 1], [], []>} : vector<2x13xf32>, vector<13x16xf32>, vector<2x16xf32> -> vector<2x16xf32>
    %cst_149 = arith.constant dense<0.000000e+00> : vector<8x16xf32>
    %143 = tpu.matmul %139, %142, %cst_149 {dimension_numbers = #tpu.dot_dimension_numbers<[1], [0], [0], [1], [0, 0, 1, 1], [], []>} : vector<8x2xf32>, vector<2x16xf32>, vector<8x16xf32> -> vector<8x16xf32>
    %144 = arith.addf %137, %143 : vector<8x16xf32>
    %c1_150 = arith.constant 1 : index
    %c0_151 = arith.constant 0 : index
    %c0_152 = arith.constant 0 : index
    %145 = vector.load %arg15[%c1_150, %c0_151, %c0_152] : memref<4x8x2xf32, #tpu.memory_space<vmem>>, vector<1x8x2xf32>
    %146 = vector.shape_cast %145 : vector<1x8x2xf32> to vector<8x2xf32>
    %c1_153 = arith.constant 1 : index
    %c0_154 = arith.constant 0 : index
    %c0_155 = arith.constant 0 : index
    %147 = vector.load %arg16[%c1_153, %c0_154, %c0_155] : memref<4x13x16xf32, #tpu.memory_space<vmem>>, vector<1x13x16xf32>
    %148 = vector.shape_cast %147 : vector<1x13x16xf32> to vector<13x16xf32>
    %cst_156 = arith.constant dense<0.000000e+00> : vector<2x16xf32>
    %149 = tpu.matmul %136, %148, %cst_156 {dimension_numbers = #tpu.dot_dimension_numbers<[1], [0], [0], [1], [0, 0, 1, 1], [], []>} : vector<2x13xf32>, vector<13x16xf32>, vector<2x16xf32> -> vector<2x16xf32>
    %cst_157 = arith.constant dense<0.000000e+00> : vector<8x16xf32>
    %150 = tpu.matmul %146, %149, %cst_157 {dimension_numbers = #tpu.dot_dimension_numbers<[1], [0], [0], [1], [0, 0, 1, 1], [], []>} : vector<8x2xf32>, vector<2x16xf32>, vector<8x16xf32> -> vector<8x16xf32>
    %151 = arith.addf %144, %150 : vector<8x16xf32>
    %c2_158 = arith.constant 2 : index
    %c0_159 = arith.constant 0 : index
    %c0_160 = arith.constant 0 : index
    %152 = vector.load %arg15[%c2_158, %c0_159, %c0_160] : memref<4x8x2xf32, #tpu.memory_space<vmem>>, vector<1x8x2xf32>
    %153 = vector.shape_cast %152 : vector<1x8x2xf32> to vector<8x2xf32>
    %c2_161 = arith.constant 2 : index
    %c0_162 = arith.constant 0 : index
    %c0_163 = arith.constant 0 : index
    %154 = vector.load %arg16[%c2_161, %c0_162, %c0_163] : memref<4x13x16xf32, #tpu.memory_space<vmem>>, vector<1x13x16xf32>
    %155 = vector.shape_cast %154 : vector<1x13x16xf32> to vector<13x16xf32>
    %cst_164 = arith.constant dense<0.000000e+00> : vector<2x16xf32>
    %156 = tpu.matmul %136, %155, %cst_164 {dimension_numbers = #tpu.dot_dimension_numbers<[1], [0], [0], [1], [0, 0, 1, 1], [], []>} : vector<2x13xf32>, vector<13x16xf32>, vector<2x16xf32> -> vector<2x16xf32>
    %cst_165 = arith.constant dense<0.000000e+00> : vector<8x16xf32>
    %157 = tpu.matmul %153, %156, %cst_165 {dimension_numbers = #tpu.dot_dimension_numbers<[1], [0], [0], [1], [0, 0, 1, 1], [], []>} : vector<8x2xf32>, vector<2x16xf32>, vector<8x16xf32> -> vector<8x16xf32>
    %158 = arith.addf %151, %157 : vector<8x16xf32>
    %c3_166 = arith.constant 3 : index
    %c0_167 = arith.constant 0 : index
    %c0_168 = arith.constant 0 : index
    %159 = vector.load %arg15[%c3_166, %c0_167, %c0_168] : memref<4x8x2xf32, #tpu.memory_space<vmem>>, vector<1x8x2xf32>
    %160 = vector.shape_cast %159 : vector<1x8x2xf32> to vector<8x2xf32>
    %c3_169 = arith.constant 3 : index
    %c0_170 = arith.constant 0 : index
    %c0_171 = arith.constant 0 : index
    %161 = vector.load %arg16[%c3_169, %c0_170, %c0_171] : memref<4x13x16xf32, #tpu.memory_space<vmem>>, vector<1x13x16xf32>
    %162 = vector.shape_cast %161 : vector<1x13x16xf32> to vector<13x16xf32>
    %cst_172 = arith.constant dense<0.000000e+00> : vector<2x16xf32>
    %163 = tpu.matmul %136, %162, %cst_172 {dimension_numbers = #tpu.dot_dimension_numbers<[1], [0], [0], [1], [0, 0, 1, 1], [], []>} : vector<2x13xf32>, vector<13x16xf32>, vector<2x16xf32> -> vector<2x16xf32>
    %cst_173 = arith.constant dense<0.000000e+00> : vector<8x16xf32>
    %164 = tpu.matmul %160, %163, %cst_173 {dimension_numbers = #tpu.dot_dimension_numbers<[1], [0], [0], [1], [0, 0, 1, 1], [], []>} : vector<8x2xf32>, vector<2x16xf32>, vector<8x16xf32> -> vector<8x16xf32>
    %165 = arith.addf %158, %164 : vector<8x16xf32>
    %c0_174 = arith.constant 0 : index
    %c0_175 = arith.constant 0 : index
    %166 = vector.load %arg20[%c0_174, %c0_175] : memref<1x80xf32, #tpu.memory_space<vmem>>, vector<1x80xf32>
    %c0_176 = arith.constant 0 : index
    %c0_177 = arith.constant 0 : index
    %c0_178 = arith.constant 0 : index
    %167 = vector.load %arg18[%c0_176, %c0_177, %c0_178] : memref<4x20x8xf32, #tpu.memory_space<vmem>>, vector<1x20x8xf32>
    %168 = vector.shape_cast %167 : vector<1x20x8xf32> to vector<20x8xf32>
    %c0_179 = arith.constant 0 : index
    %c0_180 = arith.constant 0 : index
    %c0_181 = arith.constant 0 : index
    %169 = vector.load %arg19[%c0_179, %c0_180, %c0_181] : memref<4x16x80xf32, #tpu.memory_space<vmem>>, vector<1x16x80xf32>
    %170 = vector.shape_cast %169 : vector<1x16x80xf32> to vector<16x80xf32>
    %cst_182 = arith.constant dense<0.000000e+00> : vector<8x80xf32>
    %171 = tpu.matmul %165, %170, %cst_182 {dimension_numbers = #tpu.dot_dimension_numbers<[1], [0], [0], [1], [0, 0, 1, 1], [], []>} : vector<8x16xf32>, vector<16x80xf32>, vector<8x80xf32> -> vector<8x80xf32>
    %cst_183 = arith.constant dense<0.000000e+00> : vector<20x80xf32>
    %172 = tpu.matmul %168, %171, %cst_183 {dimension_numbers = #tpu.dot_dimension_numbers<[1], [0], [0], [1], [0, 0, 1, 1], [], []>} : vector<20x8xf32>, vector<8x80xf32>, vector<20x80xf32> -> vector<20x80xf32>
    %173 = vector.broadcast %166 : vector<1x80xf32> to vector<20x80xf32>
    %174 = arith.addf %173, %172 : vector<20x80xf32>
    %c1_184 = arith.constant 1 : index
    %c0_185 = arith.constant 0 : index
    %c0_186 = arith.constant 0 : index
    %175 = vector.load %arg18[%c1_184, %c0_185, %c0_186] : memref<4x20x8xf32, #tpu.memory_space<vmem>>, vector<1x20x8xf32>
    %176 = vector.shape_cast %175 : vector<1x20x8xf32> to vector<20x8xf32>
    %c1_187 = arith.constant 1 : index
    %c0_188 = arith.constant 0 : index
    %c0_189 = arith.constant 0 : index
    %177 = vector.load %arg19[%c1_187, %c0_188, %c0_189] : memref<4x16x80xf32, #tpu.memory_space<vmem>>, vector<1x16x80xf32>
    %178 = vector.shape_cast %177 : vector<1x16x80xf32> to vector<16x80xf32>
    %cst_190 = arith.constant dense<0.000000e+00> : vector<8x80xf32>
    %179 = tpu.matmul %165, %178, %cst_190 {dimension_numbers = #tpu.dot_dimension_numbers<[1], [0], [0], [1], [0, 0, 1, 1], [], []>} : vector<8x16xf32>, vector<16x80xf32>, vector<8x80xf32> -> vector<8x80xf32>
    %cst_191 = arith.constant dense<0.000000e+00> : vector<20x80xf32>
    %180 = tpu.matmul %176, %179, %cst_191 {dimension_numbers = #tpu.dot_dimension_numbers<[1], [0], [0], [1], [0, 0, 1, 1], [], []>} : vector<20x8xf32>, vector<8x80xf32>, vector<20x80xf32> -> vector<20x80xf32>
    %181 = arith.addf %174, %180 : vector<20x80xf32>
    %c2_192 = arith.constant 2 : index
    %c0_193 = arith.constant 0 : index
    %c0_194 = arith.constant 0 : index
    %182 = vector.load %arg18[%c2_192, %c0_193, %c0_194] : memref<4x20x8xf32, #tpu.memory_space<vmem>>, vector<1x20x8xf32>
    %183 = vector.shape_cast %182 : vector<1x20x8xf32> to vector<20x8xf32>
    %c2_195 = arith.constant 2 : index
    %c0_196 = arith.constant 0 : index
    %c0_197 = arith.constant 0 : index
    %184 = vector.load %arg19[%c2_195, %c0_196, %c0_197] : memref<4x16x80xf32, #tpu.memory_space<vmem>>, vector<1x16x80xf32>
    %185 = vector.shape_cast %184 : vector<1x16x80xf32> to vector<16x80xf32>
    %cst_198 = arith.constant dense<0.000000e+00> : vector<8x80xf32>
    %186 = tpu.matmul %165, %185, %cst_198 {dimension_numbers = #tpu.dot_dimension_numbers<[1], [0], [0], [1], [0, 0, 1, 1], [], []>} : vector<8x16xf32>, vector<16x80xf32>, vector<8x80xf32> -> vector<8x80xf32>
    %cst_199 = arith.constant dense<0.000000e+00> : vector<20x80xf32>
    %187 = tpu.matmul %183, %186, %cst_199 {dimension_numbers = #tpu.dot_dimension_numbers<[1], [0], [0], [1], [0, 0, 1, 1], [], []>} : vector<20x8xf32>, vector<8x80xf32>, vector<20x80xf32> -> vector<20x80xf32>
    %188 = arith.addf %181, %187 : vector<20x80xf32>
    %c3_200 = arith.constant 3 : index
    %c0_201 = arith.constant 0 : index
    %c0_202 = arith.constant 0 : index
    %189 = vector.load %arg18[%c3_200, %c0_201, %c0_202] : memref<4x20x8xf32, #tpu.memory_space<vmem>>, vector<1x20x8xf32>
    %190 = vector.shape_cast %189 : vector<1x20x8xf32> to vector<20x8xf32>
    %c3_203 = arith.constant 3 : index
    %c0_204 = arith.constant 0 : index
    %c0_205 = arith.constant 0 : index
    %191 = vector.load %arg19[%c3_203, %c0_204, %c0_205] : memref<4x16x80xf32, #tpu.memory_space<vmem>>, vector<1x16x80xf32>
    %192 = vector.shape_cast %191 : vector<1x16x80xf32> to vector<16x80xf32>
    %cst_206 = arith.constant dense<0.000000e+00> : vector<8x80xf32>
    %193 = tpu.matmul %165, %192, %cst_206 {dimension_numbers = #tpu.dot_dimension_numbers<[1], [0], [0], [1], [0, 0, 1, 1], [], []>} : vector<8x16xf32>, vector<16x80xf32>, vector<8x80xf32> -> vector<8x80xf32>
    %cst_207 = arith.constant dense<0.000000e+00> : vector<20x80xf32>
    %194 = tpu.matmul %190, %193, %cst_207 {dimension_numbers = #tpu.dot_dimension_numbers<[1], [0], [0], [1], [0, 0, 1, 1], [], []>} : vector<20x8xf32>, vector<8x80xf32>, vector<20x80xf32> -> vector<20x80xf32>
    %195 = arith.addf %188, %194 : vector<20x80xf32>
    %cst_208 = arith.constant 0.000000e+00 : f32
    %196 = vector.broadcast %cst_208 : f32 to vector<20x80xf32>
    %197 = arith.maximumf %195, %196 : vector<20x80xf32>
    %c0_209 = arith.constant 0 : index
    %c0_210 = arith.constant 0 : index
    %198 = vector.load %arg23[%c0_209, %c0_210] : memref<1x176xf32, #tpu.memory_space<vmem>>, vector<1x176xf32>
    %c0_211 = arith.constant 0 : index
    %c0_212 = arith.constant 0 : index
    %c0_213 = arith.constant 0 : index
    %199 = vector.load %arg21[%c0_211, %c0_212, %c0_213] : memref<4x44x20xf32, #tpu.memory_space<vmem>>, vector<1x44x20xf32>
    %200 = vector.shape_cast %199 : vector<1x44x20xf32> to vector<44x20xf32>
    %c0_214 = arith.constant 0 : index
    %c0_215 = arith.constant 0 : index
    %c0_216 = arith.constant 0 : index
    %201 = vector.load %arg22[%c0_214, %c0_215, %c0_216] : memref<4x80x176xf32, #tpu.memory_space<vmem>>, vector<1x80x176xf32>
    %202 = vector.shape_cast %201 : vector<1x80x176xf32> to vector<80x176xf32>
    %cst_217 = arith.constant dense<0.000000e+00> : vector<20x176xf32>
    %203 = tpu.matmul %197, %202, %cst_217 {dimension_numbers = #tpu.dot_dimension_numbers<[1], [0], [0], [1], [0, 0, 1, 1], [], []>} : vector<20x80xf32>, vector<80x176xf32>, vector<20x176xf32> -> vector<20x176xf32>
    %cst_218 = arith.constant dense<0.000000e+00> : vector<44x176xf32>
    %204 = tpu.matmul %200, %203, %cst_218 {dimension_numbers = #tpu.dot_dimension_numbers<[1], [0], [0], [1], [0, 0, 1, 1], [], []>} : vector<44x20xf32>, vector<20x176xf32>, vector<44x176xf32> -> vector<44x176xf32>
    %205 = vector.broadcast %198 : vector<1x176xf32> to vector<44x176xf32>
    %206 = arith.addf %205, %204 : vector<44x176xf32>
    %c1_219 = arith.constant 1 : index
    %c0_220 = arith.constant 0 : index
    %c0_221 = arith.constant 0 : index
    %207 = vector.load %arg21[%c1_219, %c0_220, %c0_221] : memref<4x44x20xf32, #tpu.memory_space<vmem>>, vector<1x44x20xf32>
    %208 = vector.shape_cast %207 : vector<1x44x20xf32> to vector<44x20xf32>
    %c1_222 = arith.constant 1 : index
    %c0_223 = arith.constant 0 : index
    %c0_224 = arith.constant 0 : index
    %209 = vector.load %arg22[%c1_222, %c0_223, %c0_224] : memref<4x80x176xf32, #tpu.memory_space<vmem>>, vector<1x80x176xf32>
    %210 = vector.shape_cast %209 : vector<1x80x176xf32> to vector<80x176xf32>
    %cst_225 = arith.constant dense<0.000000e+00> : vector<20x176xf32>
    %211 = tpu.matmul %197, %210, %cst_225 {dimension_numbers = #tpu.dot_dimension_numbers<[1], [0], [0], [1], [0, 0, 1, 1], [], []>} : vector<20x80xf32>, vector<80x176xf32>, vector<20x176xf32> -> vector<20x176xf32>
    %cst_226 = arith.constant dense<0.000000e+00> : vector<44x176xf32>
    %212 = tpu.matmul %208, %211, %cst_226 {dimension_numbers = #tpu.dot_dimension_numbers<[1], [0], [0], [1], [0, 0, 1, 1], [], []>} : vector<44x20xf32>, vector<20x176xf32>, vector<44x176xf32> -> vector<44x176xf32>
    %213 = arith.addf %206, %212 : vector<44x176xf32>
    %c2_227 = arith.constant 2 : index
    %c0_228 = arith.constant 0 : index
    %c0_229 = arith.constant 0 : index
    %214 = vector.load %arg21[%c2_227, %c0_228, %c0_229] : memref<4x44x20xf32, #tpu.memory_space<vmem>>, vector<1x44x20xf32>
    %215 = vector.shape_cast %214 : vector<1x44x20xf32> to vector<44x20xf32>
    %c2_230 = arith.constant 2 : index
    %c0_231 = arith.constant 0 : index
    %c0_232 = arith.constant 0 : index
    %216 = vector.load %arg22[%c2_230, %c0_231, %c0_232] : memref<4x80x176xf32, #tpu.memory_space<vmem>>, vector<1x80x176xf32>
    %217 = vector.shape_cast %216 : vector<1x80x176xf32> to vector<80x176xf32>
    %cst_233 = arith.constant dense<0.000000e+00> : vector<20x176xf32>
    %218 = tpu.matmul %197, %217, %cst_233 {dimension_numbers = #tpu.dot_dimension_numbers<[1], [0], [0], [1], [0, 0, 1, 1], [], []>} : vector<20x80xf32>, vector<80x176xf32>, vector<20x176xf32> -> vector<20x176xf32>
    %cst_234 = arith.constant dense<0.000000e+00> : vector<44x176xf32>
    %219 = tpu.matmul %215, %218, %cst_234 {dimension_numbers = #tpu.dot_dimension_numbers<[1], [0], [0], [1], [0, 0, 1, 1], [], []>} : vector<44x20xf32>, vector<20x176xf32>, vector<44x176xf32> -> vector<44x176xf32>
    %220 = arith.addf %213, %219 : vector<44x176xf32>
    %c3_235 = arith.constant 3 : index
    %c0_236 = arith.constant 0 : index
    %c0_237 = arith.constant 0 : index
    %221 = vector.load %arg21[%c3_235, %c0_236, %c0_237] : memref<4x44x20xf32, #tpu.memory_space<vmem>>, vector<1x44x20xf32>
    %222 = vector.shape_cast %221 : vector<1x44x20xf32> to vector<44x20xf32>
    %c3_238 = arith.constant 3 : index
    %c0_239 = arith.constant 0 : index
    %c0_240 = arith.constant 0 : index
    %223 = vector.load %arg22[%c3_238, %c0_239, %c0_240] : memref<4x80x176xf32, #tpu.memory_space<vmem>>, vector<1x80x176xf32>
    %224 = vector.shape_cast %223 : vector<1x80x176xf32> to vector<80x176xf32>
    %cst_241 = arith.constant dense<0.000000e+00> : vector<20x176xf32>
    %225 = tpu.matmul %197, %224, %cst_241 {dimension_numbers = #tpu.dot_dimension_numbers<[1], [0], [0], [1], [0, 0, 1, 1], [], []>} : vector<20x80xf32>, vector<80x176xf32>, vector<20x176xf32> -> vector<20x176xf32>
    %cst_242 = arith.constant dense<0.000000e+00> : vector<44x176xf32>
    %226 = tpu.matmul %222, %225, %cst_242 {dimension_numbers = #tpu.dot_dimension_numbers<[1], [0], [0], [1], [0, 0, 1, 1], [], []>} : vector<44x20xf32>, vector<20x176xf32>, vector<44x176xf32> -> vector<44x176xf32>
    %227 = arith.addf %220, %226 : vector<44x176xf32>
    %cst_243 = arith.constant 0.000000e+00 : f32
    %228 = vector.broadcast %cst_243 : f32 to vector<44x176xf32>
    %229 = arith.maximumf %227, %228 : vector<44x176xf32>
    %c0_244 = arith.constant 0 : index
    %c0_245 = arith.constant 0 : index
    %230 = vector.load %arg26[%c0_244, %c0_245] : memref<1x24xf32, #tpu.memory_space<vmem>>, vector<1x24xf32>
    %c0_246 = arith.constant 0 : index
    %c0_247 = arith.constant 0 : index
    %c0_248 = arith.constant 0 : index
    %231 = vector.load %arg24[%c0_246, %c0_247, %c0_248] : memref<3x48x44xf32, #tpu.memory_space<vmem>>, vector<1x48x44xf32>
    %232 = vector.shape_cast %231 : vector<1x48x44xf32> to vector<48x44xf32>
    %c0_249 = arith.constant 0 : index
    %c0_250 = arith.constant 0 : index
    %c0_251 = arith.constant 0 : index
    %233 = vector.load %arg25[%c0_249, %c0_250, %c0_251] : memref<3x176x24xf32, #tpu.memory_space<vmem>>, vector<1x176x24xf32>
    %234 = vector.shape_cast %233 : vector<1x176x24xf32> to vector<176x24xf32>
    %cst_252 = arith.constant dense<0.000000e+00> : vector<44x24xf32>
    %235 = tpu.matmul %229, %234, %cst_252 {dimension_numbers = #tpu.dot_dimension_numbers<[1], [0], [0], [1], [0, 0, 1, 1], [], []>} : vector<44x176xf32>, vector<176x24xf32>, vector<44x24xf32> -> vector<44x24xf32>
    %cst_253 = arith.constant dense<0.000000e+00> : vector<48x24xf32>
    %236 = tpu.matmul %232, %235, %cst_253 {dimension_numbers = #tpu.dot_dimension_numbers<[1], [0], [0], [1], [0, 0, 1, 1], [], []>} : vector<48x44xf32>, vector<44x24xf32>, vector<48x24xf32> -> vector<48x24xf32>
    %237 = vector.broadcast %230 : vector<1x24xf32> to vector<48x24xf32>
    %238 = arith.addf %237, %236 : vector<48x24xf32>
    %c1_254 = arith.constant 1 : index
    %c0_255 = arith.constant 0 : index
    %c0_256 = arith.constant 0 : index
    %239 = vector.load %arg24[%c1_254, %c0_255, %c0_256] : memref<3x48x44xf32, #tpu.memory_space<vmem>>, vector<1x48x44xf32>
    %240 = vector.shape_cast %239 : vector<1x48x44xf32> to vector<48x44xf32>
    %c1_257 = arith.constant 1 : index
    %c0_258 = arith.constant 0 : index
    %c0_259 = arith.constant 0 : index
    %241 = vector.load %arg25[%c1_257, %c0_258, %c0_259] : memref<3x176x24xf32, #tpu.memory_space<vmem>>, vector<1x176x24xf32>
    %242 = vector.shape_cast %241 : vector<1x176x24xf32> to vector<176x24xf32>
    %cst_260 = arith.constant dense<0.000000e+00> : vector<44x24xf32>
    %243 = tpu.matmul %229, %242, %cst_260 {dimension_numbers = #tpu.dot_dimension_numbers<[1], [0], [0], [1], [0, 0, 1, 1], [], []>} : vector<44x176xf32>, vector<176x24xf32>, vector<44x24xf32> -> vector<44x24xf32>
    %cst_261 = arith.constant dense<0.000000e+00> : vector<48x24xf32>
    %244 = tpu.matmul %240, %243, %cst_261 {dimension_numbers = #tpu.dot_dimension_numbers<[1], [0], [0], [1], [0, 0, 1, 1], [], []>} : vector<48x44xf32>, vector<44x24xf32>, vector<48x24xf32> -> vector<48x24xf32>
    %245 = arith.addf %238, %244 : vector<48x24xf32>
    %c2_262 = arith.constant 2 : index
    %c0_263 = arith.constant 0 : index
    %c0_264 = arith.constant 0 : index
    %246 = vector.load %arg24[%c2_262, %c0_263, %c0_264] : memref<3x48x44xf32, #tpu.memory_space<vmem>>, vector<1x48x44xf32>
    %247 = vector.shape_cast %246 : vector<1x48x44xf32> to vector<48x44xf32>
    %c2_265 = arith.constant 2 : index
    %c0_266 = arith.constant 0 : index
    %c0_267 = arith.constant 0 : index
    %248 = vector.load %arg25[%c2_265, %c0_266, %c0_267] : memref<3x176x24xf32, #tpu.memory_space<vmem>>, vector<1x176x24xf32>
    %249 = vector.shape_cast %248 : vector<1x176x24xf32> to vector<176x24xf32>
    %cst_268 = arith.constant dense<0.000000e+00> : vector<44x24xf32>
    %250 = tpu.matmul %229, %249, %cst_268 {dimension_numbers = #tpu.dot_dimension_numbers<[1], [0], [0], [1], [0, 0, 1, 1], [], []>} : vector<44x176xf32>, vector<176x24xf32>, vector<44x24xf32> -> vector<44x24xf32>
    %cst_269 = arith.constant dense<0.000000e+00> : vector<48x24xf32>
    %251 = tpu.matmul %247, %250, %cst_269 {dimension_numbers = #tpu.dot_dimension_numbers<[1], [0], [0], [1], [0, 0, 1, 1], [], []>} : vector<48x44xf32>, vector<44x24xf32>, vector<48x24xf32> -> vector<48x24xf32>
    %252 = arith.addf %245, %251 : vector<48x24xf32>
    %c0_270 = arith.constant 0 : index
    %c0_271 = arith.constant 0 : index
    %253 = vector.load %arg27[%c0_270, %c0_271] : memref<48x24xf32, #tpu.memory_space<vmem>>, vector<48x24xf32>
    tpu.vector_store %arg27[%c0_270, %c0_271], %252 {strides = array<i32>} : memref<48x24xf32, #tpu.memory_space<vmem>>, vector<48x24xf32>,
    return
  }
}

</mosaic_0001>

<llo_original>
// kernel: forward.1
$region0: #{forward.1}
  #allocation0 [shape = 'u32[]', space=smem, size = 0x4, offset = 0x4, fixed_abs, tag = 'smem constant byte address 0x4 - core index']
  #allocation1 [shape = 'u32[72,128]{1,0:T(1,128)}', space=vmem, size = 0x9000, scoped, tag = 'internal scratch']
  %s0 = inlined_call_operand.smem [shape: u32[31], index: -1, kind: input, shape index: {}]
  %s1 = sld [smem:[%s0]]
  %s2 = scalar_lea.smem %s0, 1
  %s3 = sld [smem:[%s2]]
  %s4 = scalar_lea.smem %s0, 2
  %s5 = sld [smem:[%s4]]
  %s6 = scalar_lea.smem %s0, 3
  %s7 = sld [smem:[%s6]]
  %s8 = scalar_lea.smem %s0, 4
  %s9 = sld [smem:[%s8]]
  %s10 = scalar_lea.smem %s0, 5
  %s11 = sld [smem:[%s10]]
  %s12 = scalar_lea.smem %s0, 6
  %s13 = sld [smem:[%s12]]
  %s14 = scalar_lea.smem %s0, 7
  %s15 = sld [smem:[%s14]]
  %s16 = scalar_lea.smem %s0, 8
  %s17 = sld [smem:[%s16]]
  %s18 = scalar_lea.smem %s0, 9
  %s19 = sld [smem:[%s18]]
  %s20 = scalar_lea.smem %s0, 10
  %s21 = sld [smem:[%s20]]
  %s22 = scalar_lea.smem %s0, 11
  %s23 = sld [smem:[%s22]]
  %s24 = scalar_lea.smem %s0, 12
  %s25 = sld [smem:[%s24]]
  %s26 = scalar_lea.smem %s0, 13
  %s27 = sld [smem:[%s26]]
  %s28 = scalar_lea.smem %s0, 14
  %s29 = sld [smem:[%s28]]
  %s30 = scalar_lea.smem %s0, 15
  %s31 = sld [smem:[%s30]]
  %s32 = scalar_lea.smem %s0, 16
  %s33 = sld [smem:[%s32]]
  %s34 = scalar_lea.smem %s0, 17
  %s35 = sld [smem:[%s34]]
  %s36 = scalar_lea.smem %s0, 18
  %s37 = sld [smem:[%s36]]
  %s38 = scalar_lea.smem %s0, 19
  %s39 = sld [smem:[%s38]]
  %s40 = scalar_lea.smem %s0, 20
  %s41 = sld [smem:[%s40]]
  %s42 = scalar_lea.smem %s0, 21
  %s43 = sld [smem:[%s42]]
  %s44 = scalar_lea.smem %s0, 22
  %s45 = sld [smem:[%s44]]
  %s46 = scalar_lea.smem %s0, 23
  %s47 = sld [smem:[%s46]]
  %s48 = scalar_lea.smem %s0, 24
  %s49 = sld [smem:[%s48]]
  %s50 = scalar_lea.smem %s0, 25
  %s51 = sld [smem:[%s50]]
  %s52 = scalar_lea.smem %s0, 26
  %s53 = sld [smem:[%s52]]
  %s54 = scalar_lea.smem %s0, 27
  %s55 = sld [smem:[%s54]]
  %s56 = scalar_lea.smem %s0, 28
  %s57 = sld [smem:[%s56]]
  %s58 = scalar_lea.smem %s0, 29
  %s59 = sld [smem:[%s58]]
  %s60 = scalar_lea.smem %s0, 30
  %s61 = sld [smem:[%s60]]
  %62 = xla_tuple %s55, %s57, %s59, %s61
  %s63 = sld [smem:[#allocation0]]
  $region142: #{forward.1} parent=0
    _
  %s65 = ssub.s32 1, %s63
  %s66 = scalar_select 0, %s65, %s63
  $region1: #{forward.1} parent=0
    #allocation2 [shape = 'u8[24576]{0}', space=vmem, size = 0x6000, scoped, tag = 'output window, operand 0, single buffered']
    #allocation3 [shape = 's32[1]{0}', space=sflag, size = 0x4, scoped, tag = 'scoped memory for forward.1']
    #allocation4 [shape = 'u8[1024]{0}', space=vmem, size = 0x400, scoped, tag = 'output window, operand 1, single buffered']
    #allocation5 [shape = 's32[1]{0}', space=sflag, size = 0x4, scoped, tag = 'scoped memory for forward.1']
    #allocation6 [shape = 'u8[1024]{0}', space=vmem, size = 0x400, scoped, tag = 'output window, operand 2, single buffered']
    #allocation7 [shape = 'u8[24576]{0}', space=vmem, size = 0x6000, scoped, tag = 'output window, operand 3, single buffered']
    #allocation8 [shape = 's32[1]{0}', space=sflag, size = 0x4, scoped, tag = 'scoped memory for forward.1']
    %67 = vsyncpa [#allocation3], 0
    %68 = vsyncpa [#allocation5], 0
    %69 = vsyncpa [#allocation8], 0
    // Predicated region
    $region2: #{forward.1} parent=1 // pred_check
      _
    $region3: #{forward.1} parent=1 // pred_check_branch
      %71 = sbr.rel (0) target = $region5
    $region4: #{forward.1} parent=1 // pred_region
      _
    $region5: #{forward.1} parent=1 // pred_fallthru
      _
    // Predicated region
    $region6: #{forward.1} parent=1 // pred_check
      _
    $region7: #{forward.1} parent=1 // pred_check_branch
      %73 = sbr.rel (0) target = $region9
    $region8: #{forward.1} parent=1 // pred_region
      _
    $region9: #{forward.1} parent=1 // pred_fallthru
      _
    // Predicated region
    $region10: #{forward.1} parent=1 // pred_check
      _
    $region11: #{forward.1} parent=1 // pred_check_branch
      %75 = sbr.rel (0) target = $region13
    $region12: #{forward.1} parent=1 // pred_region
      _
    $region13: #{forward.1} parent=1 // pred_fallthru
      _
    // Predicated region
    $region14: #{forward.1} parent=1 // pred_check
      _
    $region15: #{forward.1} parent=1 // pred_check_branch
      %77 = sbr.rel (0) target = $region17
    $region16: #{forward.1} parent=1 // pred_region
      _
    $region17: #{forward.1} parent=1 // pred_fallthru
      _
    // Predicated region
    $region18: #{forward.1} parent=1 // pred_check
      _
    $region19: #{forward.1} parent=1 // pred_check_branch
      %79 = sbr.rel (0) target = $region21
    $region20: #{forward.1} parent=1 // pred_region
      _
    $region21: #{forward.1} parent=1 // pred_fallthru
      _
    // Predicated region
    $region22: #{forward.1} parent=1 // pred_check
      _
    $region23: #{forward.1} parent=1 // pred_check_branch
      %81 = sbr.rel (0) target = $region25
    $region24: #{forward.1} parent=1 // pred_region
      _
    $region25: #{forward.1} parent=1 // pred_fallthru
      _
    // Predicated region
    $region26: #{forward.1} parent=1 // pred_check
      _
    $region27: #{forward.1} parent=1 // pred_check_branch
      %83 = sbr.rel (0) target = $region29
    $region28: #{forward.1} parent=1 // pred_region
      _
    $region29: #{forward.1} parent=1 // pred_fallthru
      _
    // Predicated region
    $region30: #{forward.1} parent=1 // pred_check
      _
    $region31: #{forward.1} parent=1 // pred_check_branch
      %85 = sbr.rel (0) target = $region33
    $region32: #{forward.1} parent=1 // pred_region
      _
    $region33: #{forward.1} parent=1 // pred_fallthru
      _
    // Predicated region
    $region34: #{forward.1} parent=1 // pred_check
      _
    $region35: #{forward.1} parent=1 // pred_check_branch
      %87 = sbr.rel (0) target = $region37
    $region36: #{forward.1} parent=1 // pred_region
      _
    $region37: #{forward.1} parent=1 // pred_fallthru
      _
    // Predicated region
    $region38: #{forward.1} parent=1 // pred_check
      _
    $region39: #{forward.1} parent=1 // pred_check_branch
      %89 = sbr.rel (0) target = $region41
    $region40: #{forward.1} parent=1 // pred_region
      _
    $region41: #{forward.1} parent=1 // pred_fallthru
      _
    // Predicated region
    $region42: #{forward.1} parent=1 // pred_check
      _
    $region43: #{forward.1} parent=1 // pred_check_branch
      %91 = sbr.rel (0) target = $region45
    $region44: #{forward.1} parent=1 // pred_region
      _
    $region45: #{forward.1} parent=1 // pred_fallthru
      _
    // Predicated region
    $region46: #{forward.1} parent=1 // pred_check
      _
    $region47: #{forward.1} parent=1 // pred_check_branch
      %93 = sbr.rel (0) target = $region49
    $region48: #{forward.1} parent=1 // pred_region
      _
    $region49: #{forward.1} parent=1 // pred_fallthru
      _
    // Predicated region
    $region50: #{forward.1} parent=1 // pred_check
      _
    $region51: #{forward.1} parent=1 // pred_check_branch
      %95 = sbr.rel (0) target = $region53
    $region52: #{forward.1} parent=1 // pred_region
      _
    $region53: #{forward.1} parent=1 // pred_fallthru
      _
    // Predicated region
    $region54: #{forward.1} parent=1 // pred_check
      _
    $region55: #{forward.1} parent=1 // pred_check_branch
      %97 = sbr.rel (0) target = $region57
    $region56: #{forward.1} parent=1 // pred_region
      _
    $region57: #{forward.1} parent=1 // pred_fallthru
      _
    // Predicated region
    $region58: #{forward.1} parent=1 // pred_check
      _
    $region59: #{forward.1} parent=1 // pred_check_branch
      %99 = sbr.rel (0) target = $region61
    $region60: #{forward.1} parent=1 // pred_region
      _
    $region61: #{forward.1} parent=1 // pred_fallthru
      _
    // Predicated region
    $region62: #{forward.1} parent=1 // pred_check
      _
    $region63: #{forward.1} parent=1 // pred_check_branch
      %101 = sbr.rel (0) target = $region65
    $region64: #{forward.1} parent=1 // pred_region
      _
    $region65: #{forward.1} parent=1 // pred_fallthru
      _
    // Predicated region
    $region66: #{forward.1} parent=1 // pred_check
      _
    $region67: #{forward.1} parent=1 // pred_check_branch
      %103 = sbr.rel (0) target = $region69
    $region68: #{forward.1} parent=1 // pred_region
      _
    $region69: #{forward.1} parent=1 // pred_fallthru
      _
    // Predicated region
    $region70: #{forward.1} parent=1 // pred_check
      _
    $region71: #{forward.1} parent=1 // pred_check_branch
      %105 = sbr.rel (0) target = $region73
    $region72: #{forward.1} parent=1 // pred_region
      _
    $region73: #{forward.1} parent=1 // pred_fallthru
      _
    // Predicated region
    $region74: #{forward.1} parent=1 // pred_check
      _
    $region75: #{forward.1} parent=1 // pred_check_branch
      %107 = sbr.rel (0) target = $region77
    $region76: #{forward.1} parent=1 // pred_region
      _
    $region77: #{forward.1} parent=1 // pred_fallthru
      _
    // Predicated region
    $region78: #{forward.1} parent=1 // pred_check
      _
    $region79: #{forward.1} parent=1 // pred_check_branch
      %109 = sbr.rel (0) target = $region81
    $region80: #{forward.1} parent=1 // pred_region
      _
    $region81: #{forward.1} parent=1 // pred_fallthru
      _
    // Predicated region
    $region82: #{forward.1} parent=1 // pred_check
      _
    $region83: #{forward.1} parent=1 // pred_check_branch
      %111 = sbr.rel (0) target = $region85
    $region84: #{forward.1} parent=1 // pred_region
      _
    $region85: #{forward.1} parent=1 // pred_fallthru
      _
    // Predicated region
    $region86: #{forward.1} parent=1 // pred_check
      _
    $region87: #{forward.1} parent=1 // pred_check_branch
      %113 = sbr.rel (0) target = $region89
    $region88: #{forward.1} parent=1 // pred_region
      _
    $region89: #{forward.1} parent=1 // pred_fallthru
      _
    // Predicated region
    $region90: #{forward.1} parent=1 // pred_check
      _
    $region91: #{forward.1} parent=1 // pred_check_branch
      %115 = sbr.rel (0) target = $region93
    $region92: #{forward.1} parent=1 // pred_region
      _
    $region93: #{forward.1} parent=1 // pred_fallthru
      _
    // Predicated region
    $region94: #{forward.1} parent=1 // pred_check
      _
    $region95: #{forward.1} parent=1 // pred_check_branch
      %117 = sbr.rel (0) target = $region97
    $region96: #{forward.1} parent=1 // pred_region
      _
    $region97: #{forward.1} parent=1 // pred_fallthru
      _
    // Predicated region
    $region98: #{forward.1} parent=1 // pred_check
      _
    $region99: #{forward.1} parent=1 // pred_check_branch
      %119 = sbr.rel (0) target = $region101
    $region100: #{forward.1} parent=1 // pred_region
      _
    $region101: #{forward.1} parent=1 // pred_fallthru
      _
    // Predicated region
    $region102: #{forward.1} parent=1 // pred_check
      _
    $region103: #{forward.1} parent=1 // pred_check_branch
      %121 = sbr.rel (0) target = $region105
    $region104: #{forward.1} parent=1 // pred_region
      _
    $region105: #{forward.1} parent=1 // pred_fallthru
      _
    // Predicated region
    $region106: #{forward.1} parent=1 // pred_check
      _
    $region107: #{forward.1} parent=1 // pred_check_branch
      %123 = sbr.rel (0) target = $region109
    $region108: #{forward.1} parent=1 // pred_region
      _
    $region109: #{forward.1} parent=1 // pred_fallthru
      _
    %v124 = vld [vmem:[%s1] sm:$0xff]
    %v125 = vld [vmem:[%s1 + $0x8] sm:$0xff]
    %v126 = vld [vmem:[%s1 + $0x10] sm:$0xff]
    %v127 = vld [vmem:[%s1 + $0x18] sm:$0xff]
    %v128 = vld [vmem:[%s1 + $0x20] sm:$0xff]
    %v129 = vld [vmem:[%s1 + $0x28] sm:$0xff]
    %vm130 = vcmp.ne.f32.partialorder %v124, 0.0
    %vm131 = vcmp.ne.f32.partialorder %v125, 0.0
    %vm132 = vcmp.ne.f32.partialorder %v126, 0.0
    %vm133 = vcmp.ne.f32.partialorder %v127, 0.0
    %vm134 = vcmp.ne.f32.partialorder %v128, 0.0
    %vm135 = vcmp.ne.f32.partialorder %v129, 0.0
    %v136 = vsel %vm130, 1, 0
    %v137 = vsel %vm131, 1, 0
    %v138 = vsel %vm132, 1, 0
    %v139 = vsel %vm133, 1, 0
    %v140 = vsel %vm134, 1, 0
    %v141 = vsel %vm135, 1, 0
    %v142 = vcvt.s32.f32 %v136
    %v143 = vcvt.s32.f32 %v137
    %v144 = vcvt.s32.f32 %v138
    %v145 = vcvt.s32.f32 %v139
    %v146 = vcvt.s32.f32 %v140
    %v147 = vcvt.s32.f32 %v141
    %vm148 = vcmask 195584
    %149 = vst.msk [vmem:[#allocation7] sm:$0xff] %vm148, %v142
    %150 = vst.msk [vmem:[#allocation7 + $0x8] sm:$0xff] %vm148, %v143
    %151 = vst.msk [vmem:[#allocation7 + $0x10] sm:$0xff] %vm148, %v144
    %152 = vst.msk [vmem:[#allocation7 + $0x18] sm:$0xff] %vm148, %v145
    %153 = vst.msk [vmem:[#allocation7 + $0x20] sm:$0xff] %vm148, %v146
    %154 = vst.msk [vmem:[#allocation7 + $0x28] sm:$0xff] %vm148, %v147
    %v155 = vld [vmem:[%s11] sm:$0x7]
    %v156 = vld [vmem:[%s7] sm:$0xff]
    %v157 = vld [vmem:[%s7 + $0x8] sm:$0xff]
    %v158 = vld [vmem:[%s7 + $0x10] sm:$0xff]
    %v159 = vld [vmem:[%s7 + $0x18] sm:$0xff]
    %v160 = vld [vmem:[%s7 + $0x20] sm:$0xff]
    %v161 = vld [vmem:[%s7 + $0x28] sm:$0xf]
    %v162 = vld [vmem:[%s9] sm:$0xff]
    %v163 = vld [vmem:[%s9 + $0x8] sm:$0xff]
    %v164 = vld [vmem:[%s9 + $0x10] sm:$0xff]
    %v165 = vld [vmem:[%s9 + $0x18] sm:$0xff]
    %v166 = vld [vmem:[%s9 + $0x20] sm:$0xff]
    %v167 = vld [vmem:[%s9 + $0x28] sm:$0xff]
    %v168 = vld [vmem:[%s9 + $0x30] sm:$0xff]
    %v169 = vld [vmem:[%s9 + $0x38] sm:$0xff]
    %v170 = vld [vmem:[%s9 + $0x40] sm:$0xff]
    %vm171 = vcmask 392192
    %v173 = vsel %vm171, %v156, 0
    %v176 = vsel %vm171, %v157, 0
    %v179 = vsel %vm171, %v158, 0
    %v182 = vsel %vm171, %v159, 0
    %v185 = vsel %vm171, %v160, 0
    %v188 = vsel %vm171, %v161, 0
    %190 = vmatpush.msra.mxu0 0.0
    %191 = vmatpush.msra.mxu0 0.0
    %192 = vmatpush.msra.mxu0 0.0
    %193 = vmatpush.msra.mxu0 0.0
    %194 = vmatpush.msra.mxu0 0.0
    %195 = vmatpush.msra.mxu0 0.0
    %196 = vmatpush.msra.mxu0 0.0
    %197 = vmatpush.msra.mxu0 0.0
    %198 = vmatpush.msra.mxu0 0.0
    %199 = vmatpush.msra.mxu0 0.0
    %200 = vmatpush.msra.mxu0 %v129
    %201 = vmatpush.msra.mxu0 %v128
    %202 = vmatpush.msra.mxu0 %v127
    %203 = vmatpush.msra.mxu0 %v126
    %204 = vmatpush.msra.mxu0 %v125
    %205 = vmatpush.msra.mxu0 %v124
    %206 = vmatmul.f32.gmra.mxu0 %v173
    %v207 = vpop.f32.mrf.mxu0
    %v208 = vadd.f32 0.0, %v207
    %209 = vmatmul.f32.gmra.mxu0 %v176
    %v210 = vpop.f32.mrf.mxu0
    %v211 = vadd.f32 0.0, %v210
    %212 = vmatmul.f32.gmra.mxu0 %v179
    %v213 = vpop.f32.mrf.mxu0
    %v214 = vadd.f32 0.0, %v213
    %215 = vmatmul.f32.gmra.mxu0 %v182
    %v216 = vpop.f32.mrf.mxu0
    %v217 = vadd.f32 0.0, %v216
    %218 = vmatmul.f32.gmra.mxu0 %v185
    %v219 = vpop.f32.mrf.mxu0
    %v220 = vadd.f32 0.0, %v219
    %221 = vmatmul.f32.gmra.mxu0 %v188
    %v222 = vpop.f32.mrf.mxu0
    %v223 = vadd.f32 0.0, %v222
    %224 = vdwg.mxu0
    %v226 = vsel %vm148, %v208, 0
    %v229 = vsel %vm148, %v211, 0
    %v232 = vsel %vm148, %v214, 0
    %v235 = vsel %vm148, %v217, 0
    %v238 = vsel %vm148, %v220, 0
    %v241 = vsel %vm148, %v223, 0
    %243 = vmatpush.msra.mxu0 0.0
    %244 = vmatpush.msra.mxu0 0.0
    %245 = vmatpush.msra.mxu0 0.0
    %246 = vmatpush.msra.mxu0 0.0
    %247 = vmatpush.msra.mxu0 0.0
    %248 = vmatpush.msra.mxu0 0.0
    %249 = vmatpush.msra.mxu0 0.0
    %250 = vmatpush.msra.mxu0 0.0
    %251 = vmatpush.msra.mxu0 0.0
    %252 = vmatpush.msra.mxu0 0.0
    %253 = vmatpush.msra.mxu0 0.0
    %254 = vmatpush.msra.mxu0 0.0
    %255 = vmatpush.msra.mxu0 0.0
    %256 = vmatpush.msra.mxu0 %v168
    %257 = vmatpush.msra.mxu0 %v165
    %258 = vmatpush.msra.mxu0 %v162
    %259 = vmatmul.f32.gmra.mxu0 %v226
    %v260 = vpop.f32.mrf.mxu0
    %v261 = vadd.f32 0.0, %v260
    %262 = vmatmul.f32.gmra.mxu0 %v229
    %v263 = vpop.f32.mrf.mxu0
    %v264 = vadd.f32 0.0, %v263
    %265 = vmatmul.f32.gmra.mxu0 %v232
    %v266 = vpop.f32.mrf.mxu0
    %v267 = vadd.f32 0.0, %v266
    %268 = vmatmul.f32.gmra.mxu0 %v235
    %v269 = vpop.f32.mrf.mxu0
    %v270 = vadd.f32 0.0, %v269
    %271 = vmatmul.f32.gmra.mxu0 %v238
    %v272 = vpop.f32.mrf.mxu0
    %v273 = vadd.f32 0.0, %v272
    %274 = vmatmul.f32.gmra.mxu0 %v241
    %v275 = vpop.f32.mrf.mxu0
    %v276 = vadd.f32 0.0, %v275
    %277 = vdwg.mxu0
    %278 = vmatpush.msra.mxu0 0.0
    %279 = vmatpush.msra.mxu0 0.0
    %280 = vmatpush.msra.mxu0 0.0
    %281 = vmatpush.msra.mxu0 0.0
    %282 = vmatpush.msra.mxu0 0.0
    %283 = vmatpush.msra.mxu0 0.0
    %284 = vmatpush.msra.mxu0 0.0
    %285 = vmatpush.msra.mxu0 0.0
    %286 = vmatpush.msra.mxu0 0.0
    %287 = vmatpush.msra.mxu0 0.0
    %288 = vmatpush.msra.mxu0 0.0
    %289 = vmatpush.msra.mxu0 0.0
    %290 = vmatpush.msra.mxu0 0.0
    %291 = vmatpush.msra.mxu0 %v169
    %292 = vmatpush.msra.mxu0 %v166
    %293 = vmatpush.msra.mxu0 %v163
    %294 = vmatmul.f32.gmra.mxu0 %v226
    %v295 = vpop.f32.mrf.mxu0
    %v296 = vadd.f32 0.0, %v295
    %297 = vmatmul.f32.gmra.mxu0 %v229
    %v298 = vpop.f32.mrf.mxu0
    %v299 = vadd.f32 0.0, %v298
    %300 = vmatmul.f32.gmra.mxu0 %v232
    %v301 = vpop.f32.mrf.mxu0
    %v302 = vadd.f32 0.0, %v301
    %303 = vmatmul.f32.gmra.mxu0 %v235
    %v304 = vpop.f32.mrf.mxu0
    %v305 = vadd.f32 0.0, %v304
    %306 = vmatmul.f32.gmra.mxu0 %v238
    %v307 = vpop.f32.mrf.mxu0
    %v308 = vadd.f32 0.0, %v307
    %309 = vmatmul.f32.gmra.mxu0 %v241
    %v310 = vpop.f32.mrf.mxu0
    %v311 = vadd.f32 0.0, %v310
    %312 = vdwg.mxu0
    %313 = vmatpush.msra.mxu0 0.0
    %314 = vmatpush.msra.mxu0 0.0
    %315 = vmatpush.msra.mxu0 0.0
    %316 = vmatpush.msra.mxu0 0.0
    %317 = vmatpush.msra.mxu0 0.0
    %318 = vmatpush.msra.mxu0 0.0
    %319 = vmatpush.msra.mxu0 0.0
    %320 = vmatpush.msra.mxu0 0.0
    %321 = vmatpush.msra.mxu0 0.0
    %322 = vmatpush.msra.mxu0 0.0
    %323 = vmatpush.msra.mxu0 0.0
    %324 = vmatpush.msra.mxu0 0.0
    %325 = vmatpush.msra.mxu0 0.0
    %326 = vmatpush.msra.mxu0 %v170
    %327 = vmatpush.msra.mxu0 %v167
    %328 = vmatpush.msra.mxu0 %v164
    %329 = vmatmul.f32.gmra.mxu0 %v226
    %v330 = vpop.f32.mrf.mxu0
    %v331 = vadd.f32 0.0, %v330
    %332 = vmatmul.f32.gmra.mxu0 %v229
    %v333 = vpop.f32.mrf.mxu0
    %v334 = vadd.f32 0.0, %v333
    %335 = vmatmul.f32.gmra.mxu0 %v232
    %v336 = vpop.f32.mrf.mxu0
    %v337 = vadd.f32 0.0, %v336
    %338 = vmatmul.f32.gmra.mxu0 %v235
    %v339 = vpop.f32.mrf.mxu0
    %v340 = vadd.f32 0.0, %v339
    %341 = vmatmul.f32.gmra.mxu0 %v238
    %v342 = vpop.f32.mrf.mxu0
    %v343 = vadd.f32 0.0, %v342
    %344 = vmatmul.f32.gmra.mxu0 %v241
    %v345 = vpop.f32.mrf.mxu0
    %v346 = vadd.f32 0.0, %v345
    %347 = vdwg.mxu0
    %v349 = vperm.slane %v155, 0
    %v350 = vperm.slane %v155, 1
    %v351 = vperm.slane %v155, 2
    %v355 = vadd.f32 %v349, %v261
    %v356 = vadd.f32 %v350, %v296
    %v357 = vadd.f32 %v351, %v331
    %v358 = vadd.f32 %v349, %v264
    %v359 = vadd.f32 %v350, %v299
    %v360 = vadd.f32 %v351, %v334
    %v361 = vadd.f32 %v349, %v267
    %v362 = vadd.f32 %v350, %v302
    %v363 = vadd.f32 %v351, %v337
    %v364 = vadd.f32 %v349, %v270
    %v365 = vadd.f32 %v350, %v305
    %v366 = vadd.f32 %v351, %v340
    %v367 = vadd.f32 %v349, %v273
    %v368 = vadd.f32 %v350, %v308
    %v369 = vadd.f32 %v351, %v343
    %v370 = vadd.f32 %v349, %v276
    %v371 = vadd.f32 %v350, %v311
    %v372 = vadd.f32 %v351, %v346
    %s373 = scalar_lea.vmem %s7, 48
    %v374 = vld [vmem:[%s373] sm:$0xff]
    %v375 = vld [vmem:[%s373 + $0x8] sm:$0xff]
    %v376 = vld [vmem:[%s373 + $0x10] sm:$0xff]
    %v377 = vld [vmem:[%s373 + $0x18] sm:$0xff]
    %v378 = vld [vmem:[%s373 + $0x20] sm:$0xff]
    %v379 = vld [vmem:[%s373 + $0x28] sm:$0xf]
    %s380 = scalar_lea.vmem %s9, 72
    %v381 = vld [vmem:[%s380] sm:$0xff]
    %v382 = vld [vmem:[%s380 + $0x8] sm:$0xff]
    %v383 = vld [vmem:[%s380 + $0x10] sm:$0xff]
    %v384 = vld [vmem:[%s380 + $0x18] sm:$0xff]
    %v385 = vld [vmem:[%s380 + $0x20] sm:$0xff]
    %v386 = vld [vmem:[%s380 + $0x28] sm:$0xff]
    %v387 = vld [vmem:[%s380 + $0x30] sm:$0xff]
    %v388 = vld [vmem:[%s380 + $0x38] sm:$0xff]
    %v389 = vld [vmem:[%s380 + $0x40] sm:$0xff]
    %v391 = vsel %vm171, %v374, 0
    %v394 = vsel %vm171, %v375, 0
    %v397 = vsel %vm171, %v376, 0
    %v400 = vsel %vm171, %v377, 0
    %v403 = vsel %vm171, %v378, 0
    %v406 = vsel %vm171, %v379, 0
    %408 = vmatpush.msra.mxu0 0.0
    %409 = vmatpush.msra.mxu0 0.0
    %410 = vmatpush.msra.mxu0 0.0
    %411 = vmatpush.msra.mxu0 0.0
    %412 = vmatpush.msra.mxu0 0.0
    %413 = vmatpush.msra.mxu0 0.0
    %414 = vmatpush.msra.mxu0 0.0
    %415 = vmatpush.msra.mxu0 0.0
    %416 = vmatpush.msra.mxu0 0.0
    %417 = vmatpush.msra.mxu0 0.0
    %418 = vmatpush.msra.mxu0 %v129
    %419 = vmatpush.msra.mxu0 %v128
    %420 = vmatpush.msra.mxu0 %v127
    %421 = vmatpush.msra.mxu0 %v126
    %422 = vmatpush.msra.mxu0 %v125
    %423 = vmatpush.msra.mxu0 %v124
    %424 = vmatmul.f32.gmra.mxu0 %v391
    %v425 = vpop.f32.mrf.mxu0
    %v426 = vadd.f32 0.0, %v425
    %427 = vmatmul.f32.gmra.mxu0 %v394
    %v428 = vpop.f32.mrf.mxu0
    %v429 = vadd.f32 0.0, %v428
    %430 = vmatmul.f32.gmra.mxu0 %v397
    %v431 = vpop.f32.mrf.mxu0
    %v432 = vadd.f32 0.0, %v431
    %433 = vmatmul.f32.gmra.mxu0 %v400
    %v434 = vpop.f32.mrf.mxu0
    %v435 = vadd.f32 0.0, %v434
    %436 = vmatmul.f32.gmra.mxu0 %v403
    %v437 = vpop.f32.mrf.mxu0
    %v438 = vadd.f32 0.0, %v437
    %439 = vmatmul.f32.gmra.mxu0 %v406
    %v440 = vpop.f32.mrf.mxu0
    %v441 = vadd.f32 0.0, %v440
    %442 = vdwg.mxu0
    %v444 = vsel %vm148, %v426, 0
    %v447 = vsel %vm148, %v429, 0
    %v450 = vsel %vm148, %v432, 0
    %v453 = vsel %vm148, %v435, 0
    %v456 = vsel %vm148, %v438, 0
    %v459 = vsel %vm148, %v441, 0
    %461 = vmatpush.msra.mxu0 0.0
    %462 = vmatpush.msra.mxu0 0.0
    %463 = vmatpush.msra.mxu0 0.0
    %464 = vmatpush.msra.mxu0 0.0
    %465 = vmatpush.msra.mxu0 0.0
    %466 = vmatpush.msra.mxu0 0.0
    %467 = vmatpush.msra.mxu0 0.0
    %468 = vmatpush.msra.mxu0 0.0
    %469 = vmatpush.msra.mxu0 0.0
    %470 = vmatpush.msra.mxu0 0.0
    %471 = vmatpush.msra.mxu0 0.0
    %472 = vmatpush.msra.mxu0 0.0
    %473 = vmatpush.msra.mxu0 0.0
    %474 = vmatpush.msra.mxu0 %v387
    %475 = vmatpush.msra.mxu0 %v384
    %476 = vmatpush.msra.mxu0 %v381
    %477 = vmatmul.f32.gmra.mxu0 %v444
    %v478 = vpop.f32.mrf.mxu0
    %v479 = vadd.f32 0.0, %v478
    %480 = vmatmul.f32.gmra.mxu0 %v447
    %v481 = vpop.f32.mrf.mxu0
    %v482 = vadd.f32 0.0, %v481
    %483 = vmatmul.f32.gmra.mxu0 %v450
    %v484 = vpop.f32.mrf.mxu0
    %v485 = vadd.f32 0.0, %v484
    %486 = vmatmul.f32.gmra.mxu0 %v453
    %v487 = vpop.f32.mrf.mxu0
    %v488 = vadd.f32 0.0, %v487
    %489 = vmatmul.f32.gmra.mxu0 %v456
    %v490 = vpop.f32.mrf.mxu0
    %v491 = vadd.f32 0.0, %v490
    %492 = vmatmul.f32.gmra.mxu0 %v459
    %v493 = vpop.f32.mrf.mxu0
    %v494 = vadd.f32 0.0, %v493
    %495 = vdwg.mxu0
    %496 = vmatpush.msra.mxu0 0.0
    %497 = vmatpush.msra.mxu0 0.0
    %498 = vmatpush.msra.mxu0 0.0
    %499 = vmatpush.msra.mxu0 0.0
    %500 = vmatpush.msra.mxu0 0.0
    %501 = vmatpush.msra.mxu0 0.0
    %502 = vmatpush.msra.mxu0 0.0
    %503 = vmatpush.msra.mxu0 0.0
    %504 = vmatpush.msra.mxu0 0.0
    %505 = vmatpush.msra.mxu0 0.0
    %506 = vmatpush.msra.mxu0 0.0
    %507 = vmatpush.msra.mxu0 0.0
    %508 = vmatpush.msra.mxu0 0.0
    %509 = vmatpush.msra.mxu0 %v388
    %510 = vmatpush.msra.mxu0 %v385
    %511 = vmatpush.msra.mxu0 %v382
    %512 = vmatmul.f32.gmra.mxu0 %v444
    %v513 = vpop.f32.mrf.mxu0
    %v514 = vadd.f32 0.0, %v513
    %515 = vmatmul.f32.gmra.mxu0 %v447
    %v516 = vpop.f32.mrf.mxu0
    %v517 = vadd.f32 0.0, %v516
    %518 = vmatmul.f32.gmra.mxu0 %v450
    %v519 = vpop.f32.mrf.mxu0
    %v520 = vadd.f32 0.0, %v519
    %521 = vmatmul.f32.gmra.mxu0 %v453
    %v522 = vpop.f32.mrf.mxu0
    %v523 = vadd.f32 0.0, %v522
    %524 = vmatmul.f32.gmra.mxu0 %v456
    %v525 = vpop.f32.mrf.mxu0
    %v526 = vadd.f32 0.0, %v525
    %527 = vmatmul.f32.gmra.mxu0 %v459
    %v528 = vpop.f32.mrf.mxu0
    %v529 = vadd.f32 0.0, %v528
    %530 = vdwg.mxu0
    %531 = vmatpush.msra.mxu0 0.0
    %532 = vmatpush.msra.mxu0 0.0
    %533 = vmatpush.msra.mxu0 0.0
    %534 = vmatpush.msra.mxu0 0.0
    %535 = vmatpush.msra.mxu0 0.0
    %536 = vmatpush.msra.mxu0 0.0
    %537 = vmatpush.msra.mxu0 0.0
    %538 = vmatpush.msra.mxu0 0.0
    %539 = vmatpush.msra.mxu0 0.0
    %540 = vmatpush.msra.mxu0 0.0
    %541 = vmatpush.msra.mxu0 0.0
    %542 = vmatpush.msra.mxu0 0.0
    %543 = vmatpush.msra.mxu0 0.0
    %544 = vmatpush.msra.mxu0 %v389
    %545 = vmatpush.msra.mxu0 %v386
    %546 = vmatpush.msra.mxu0 %v383
    %547 = vmatmul.f32.gmra.mxu0 %v444
    %v548 = vpop.f32.mrf.mxu0
    %v549 = vadd.f32 0.0, %v548
    %550 = vmatmul.f32.gmra.mxu0 %v447
    %v551 = vpop.f32.mrf.mxu0
    %v552 = vadd.f32 0.0, %v551
    %553 = vmatmul.f32.gmra.mxu0 %v450
    %v554 = vpop.f32.mrf.mxu0
    %v555 = vadd.f32 0.0, %v554
    %556 = vmatmul.f32.gmra.mxu0 %v453
    %v557 = vpop.f32.mrf.mxu0
    %v558 = vadd.f32 0.0, %v557
    %559 = vmatmul.f32.gmra.mxu0 %v456
    %v560 = vpop.f32.mrf.mxu0
    %v561 = vadd.f32 0.0, %v560
    %562 = vmatmul.f32.gmra.mxu0 %v459
    %v563 = vpop.f32.mrf.mxu0
    %v564 = vadd.f32 0.0, %v563
    %565 = vdwg.mxu0
    %v566 = vadd.f32 %v355, %v479
    %v567 = vadd.f32 %v356, %v514
    %v568 = vadd.f32 %v357, %v549
    %v569 = vadd.f32 %v358, %v482
    %v570 = vadd.f32 %v359, %v517
    %v571 = vadd.f32 %v360, %v552
    %v572 = vadd.f32 %v361, %v485
    %v573 = vadd.f32 %v362, %v520
    %v574 = vadd.f32 %v363, %v555
    %v575 = vadd.f32 %v364, %v488
    %v576 = vadd.f32 %v365, %v523
    %v577 = vadd.f32 %v366, %v558
    %v578 = vadd.f32 %v367, %v491
    %v579 = vadd.f32 %v368, %v526
    %v580 = vadd.f32 %v369, %v561
    %v581 = vadd.f32 %v370, %v494
    %v582 = vadd.f32 %v371, %v529
    %v583 = vadd.f32 %v372, %v564
    %s584 = scalar_lea.vmem %s7, 96
    %v585 = vld [vmem:[%s584] sm:$0xff]
    %v586 = vld [vmem:[%s584 + $0x8] sm:$0xff]
    %v587 = vld [vmem:[%s584 + $0x10] sm:$0xff]
    %v588 = vld [vmem:[%s584 + $0x18] sm:$0xff]
    %v589 = vld [vmem:[%s584 + $0x20] sm:$0xff]
    %v590 = vld [vmem:[%s584 + $0x28] sm:$0xf]
    %s591 = scalar_lea.vmem %s9, 144
    %v592 = vld [vmem:[%s591] sm:$0xff]
    %v593 = vld [vmem:[%s591 + $0x8] sm:$0xff]
    %v594 = vld [vmem:[%s591 + $0x10] sm:$0xff]
    %v595 = vld [vmem:[%s591 + $0x18] sm:$0xff]
    %v596 = vld [vmem:[%s591 + $0x20] sm:$0xff]
    %v597 = vld [vmem:[%s591 + $0x28] sm:$0xff]
    %v598 = vld [vmem:[%s591 + $0x30] sm:$0xff]
    %v599 = vld [vmem:[%s591 + $0x38] sm:$0xff]
    %v600 = vld [vmem:[%s591 + $0x40] sm:$0xff]
    %v602 = vsel %vm171, %v585, 0
    %v605 = vsel %vm171, %v586, 0
    %v608 = vsel %vm171, %v587, 0
    %v611 = vsel %vm171, %v588, 0
    %v614 = vsel %vm171, %v589, 0
    %v617 = vsel %vm171, %v590, 0
    %619 = vmatpush.msra.mxu0 0.0
    %620 = vmatpush.msra.mxu0 0.0
    %621 = vmatpush.msra.mxu0 0.0
    %622 = vmatpush.msra.mxu0 0.0
    %623 = vmatpush.msra.mxu0 0.0
    %624 = vmatpush.msra.mxu0 0.0
    %625 = vmatpush.msra.mxu0 0.0
    %626 = vmatpush.msra.mxu0 0.0
    %627 = vmatpush.msra.mxu0 0.0
    %628 = vmatpush.msra.mxu0 0.0
    %629 = vmatpush.msra.mxu0 %v129
    %630 = vmatpush.msra.mxu0 %v128
    %631 = vmatpush.msra.mxu0 %v127
    %632 = vmatpush.msra.mxu0 %v126
    %633 = vmatpush.msra.mxu0 %v125
    %634 = vmatpush.msra.mxu0 %v124
    %635 = vmatmul.f32.gmra.mxu0 %v602
    %v636 = vpop.f32.mrf.mxu0
    %v637 = vadd.f32 0.0, %v636
    %638 = vmatmul.f32.gmra.mxu0 %v605
    %v639 = vpop.f32.mrf.mxu0
    %v640 = vadd.f32 0.0, %v639
    %641 = vmatmul.f32.gmra.mxu0 %v608
    %v642 = vpop.f32.mrf.mxu0
    %v643 = vadd.f32 0.0, %v642
    %644 = vmatmul.f32.gmra.mxu0 %v611
    %v645 = vpop.f32.mrf.mxu0
    %v646 = vadd.f32 0.0, %v645
    %647 = vmatmul.f32.gmra.mxu0 %v614
    %v648 = vpop.f32.mrf.mxu0
    %v649 = vadd.f32 0.0, %v648
    %650 = vmatmul.f32.gmra.mxu0 %v617
    %v651 = vpop.f32.mrf.mxu0
    %v652 = vadd.f32 0.0, %v651
    %653 = vdwg.mxu0
    %v655 = vsel %vm148, %v637, 0
    %v658 = vsel %vm148, %v640, 0
    %v661 = vsel %vm148, %v643, 0
    %v664 = vsel %vm148, %v646, 0
    %v667 = vsel %vm148, %v649, 0
    %v670 = vsel %vm148, %v652, 0
    %672 = vmatpush.msra.mxu0 0.0
    %673 = vmatpush.msra.mxu0 0.0
    %674 = vmatpush.msra.mxu0 0.0
    %675 = vmatpush.msra.mxu0 0.0
    %676 = vmatpush.msra.mxu0 0.0
    %677 = vmatpush.msra.mxu0 0.0
    %678 = vmatpush.msra.mxu0 0.0
    %679 = vmatpush.msra.mxu0 0.0
    %680 = vmatpush.msra.mxu0 0.0
    %681 = vmatpush.msra.mxu0 0.0
    %682 = vmatpush.msra.mxu0 0.0
    %683 = vmatpush.msra.mxu0 0.0
    %684 = vmatpush.msra.mxu0 0.0
    %685 = vmatpush.msra.mxu0 %v598
    %686 = vmatpush.msra.mxu0 %v595
    %687 = vmatpush.msra.mxu0 %v592
    %688 = vmatmul.f32.gmra.mxu0 %v655
    %v689 = vpop.f32.mrf.mxu0
    %v690 = vadd.f32 0.0, %v689
    %691 = vmatmul.f32.gmra.mxu0 %v658
    %v692 = vpop.f32.mrf.mxu0
    %v693 = vadd.f32 0.0, %v692
    %694 = vmatmul.f32.gmra.mxu0 %v661
    %v695 = vpop.f32.mrf.mxu0
    %v696 = vadd.f32 0.0, %v695
    %697 = vmatmul.f32.gmra.mxu0 %v664
    %v698 = vpop.f32.mrf.mxu0
    %v699 = vadd.f32 0.0, %v698
    %700 = vmatmul.f32.gmra.mxu0 %v667
    %v701 = vpop.f32.mrf.mxu0
    %v702 = vadd.f32 0.0, %v701
    %703 = vmatmul.f32.gmra.mxu0 %v670
    %v704 = vpop.f32.mrf.mxu0
    %v705 = vadd.f32 0.0, %v704
    %706 = vdwg.mxu0
    %707 = vmatpush.msra.mxu0 0.0
    %708 = vmatpush.msra.mxu0 0.0
    %709 = vmatpush.msra.mxu0 0.0
    %710 = vmatpush.msra.mxu0 0.0
    %711 = vmatpush.msra.mxu0 0.0
    %712 = vmatpush.msra.mxu0 0.0
    %713 = vmatpush.msra.mxu0 0.0
    %714 = vmatpush.msra.mxu0 0.0
    %715 = vmatpush.msra.mxu0 0.0
    %716 = vmatpush.msra.mxu0 0.0
    %717 = vmatpush.msra.mxu0 0.0
    %718 = vmatpush.msra.mxu0 0.0
    %719 = vmatpush.msra.mxu0 0.0
    %720 = vmatpush.msra.mxu0 %v599
    %721 = vmatpush.msra.mxu0 %v596
    %722 = vmatpush.msra.mxu0 %v593
    %723 = vmatmul.f32.gmra.mxu0 %v655
    %v724 = vpop.f32.mrf.mxu0
    %v725 = vadd.f32 0.0, %v724
    %726 = vmatmul.f32.gmra.mxu0 %v658
    %v727 = vpop.f32.mrf.mxu0
    %v728 = vadd.f32 0.0, %v727
    %729 = vmatmul.f32.gmra.mxu0 %v661
    %v730 = vpop.f32.mrf.mxu0
    %v731 = vadd.f32 0.0, %v730
    %732 = vmatmul.f32.gmra.mxu0 %v664
    %v733 = vpop.f32.mrf.mxu0
    %v734 = vadd.f32 0.0, %v733
    %735 = vmatmul.f32.gmra.mxu0 %v667
    %v736 = vpop.f32.mrf.mxu0
    %v737 = vadd.f32 0.0, %v736
    %738 = vmatmul.f32.gmra.mxu0 %v670
    %v739 = vpop.f32.mrf.mxu0
    %v740 = vadd.f32 0.0, %v739
    %741 = vdwg.mxu0
    %742 = vmatpush.msra.mxu0 0.0
    %743 = vmatpush.msra.mxu0 0.0
    %744 = vmatpush.msra.mxu0 0.0
    %745 = vmatpush.msra.mxu0 0.0
    %746 = vmatpush.msra.mxu0 0.0
    %747 = vmatpush.msra.mxu0 0.0
    %748 = vmatpush.msra.mxu0 0.0
    %749 = vmatpush.msra.mxu0 0.0
    %750 = vmatpush.msra.mxu0 0.0
    %751 = vmatpush.msra.mxu0 0.0
    %752 = vmatpush.msra.mxu0 0.0
    %753 = vmatpush.msra.mxu0 0.0
    %754 = vmatpush.msra.mxu0 0.0
    %755 = vmatpush.msra.mxu0 %v600
    %756 = vmatpush.msra.mxu0 %v597
    %757 = vmatpush.msra.mxu0 %v594
    %758 = vmatmul.f32.gmra.mxu0 %v655
    %v759 = vpop.f32.mrf.mxu0
    %v760 = vadd.f32 0.0, %v759
    %761 = vmatmul.f32.gmra.mxu0 %v658
    %v762 = vpop.f32.mrf.mxu0
    %v763 = vadd.f32 0.0, %v762
    %764 = vmatmul.f32.gmra.mxu0 %v661
    %v765 = vpop.f32.mrf.mxu0
    %v766 = vadd.f32 0.0, %v765
    %767 = vmatmul.f32.gmra.mxu0 %v664
    %v768 = vpop.f32.mrf.mxu0
    %v769 = vadd.f32 0.0, %v768
    %770 = vmatmul.f32.gmra.mxu0 %v667
    %v771 = vpop.f32.mrf.mxu0
    %v772 = vadd.f32 0.0, %v771
    %773 = vmatmul.f32.gmra.mxu0 %v670
    %v774 = vpop.f32.mrf.mxu0
    %v775 = vadd.f32 0.0, %v774
    %776 = vdwg.mxu0
    %v777 = vadd.f32 %v566, %v690
    %v778 = vadd.f32 %v567, %v725
    %v779 = vadd.f32 %v568, %v760
    %v780 = vadd.f32 %v569, %v693
    %v781 = vadd.f32 %v570, %v728
    %v782 = vadd.f32 %v571, %v763
    %v783 = vadd.f32 %v572, %v696
    %v784 = vadd.f32 %v573, %v731
    %v785 = vadd.f32 %v574, %v766
    %v786 = vadd.f32 %v575, %v699
    %v787 = vadd.f32 %v576, %v734
    %v788 = vadd.f32 %v577, %v769
    %v789 = vadd.f32 %v578, %v702
    %v790 = vadd.f32 %v579, %v737
    %v791 = vadd.f32 %v580, %v772
    %v792 = vadd.f32 %v581, %v705
    %v793 = vadd.f32 %v582, %v740
    %v794 = vadd.f32 %v583, %v775
    %v795 = vmax.f32 %v777, 0.0
    %v796 = vmax.f32 %v778, 0.0
    %v797 = vmax.f32 %v779, 0.0
    %v798 = vmax.f32 %v780, 0.0
    %v799 = vmax.f32 %v781, 0.0
    %v800 = vmax.f32 %v782, 0.0
    %v801 = vmax.f32 %v783, 0.0
    %v802 = vmax.f32 %v784, 0.0
    %v803 = vmax.f32 %v785, 0.0
    %v804 = vmax.f32 %v786, 0.0
    %v805 = vmax.f32 %v787, 0.0
    %v806 = vmax.f32 %v788, 0.0
    %v807 = vmax.f32 %v789, 0.0
    %v808 = vmax.f32 %v790, 0.0
    %v809 = vmax.f32 %v791, 0.0
    %v810 = vmax.f32 %v792, 0.0
    %v811 = vmax.f32 %v793, 0.0
    %v812 = vmax.f32 %v794, 0.0
    %v813 = vld [vmem:[%s17] sm:$0x1]
    %v814 = vld [vmem:[%s13] sm:$0xff]
    %v815 = vld [vmem:[%s13 + $0x8] sm:$0xff]
    %v816 = vld [vmem:[%s13 + $0x10] sm:$0xf]
    %v817 = vld [vmem:[%s15] sm:$0xff]
    %v818 = vld [vmem:[%s15 + $0x8] sm:$0xff]
    %v819 = vld [vmem:[%s15 + $0x10] sm:$0xff]
    %v820 = vld [vmem:[%s15 + $0x18] sm:$0xff]
    %v821 = vld [vmem:[%s15 + $0x20] sm:$0xff]
    %v822 = vld [vmem:[%s15 + $0x28] sm:$0xff]
    %v823 = vld [vmem:[%s15 + $0x30] sm:$0xff]
    %v824 = vld [vmem:[%s15 + $0x38] sm:$0xff]
    %v825 = vld [vmem:[%s15 + $0x40] sm:$0xff]
    %v826 = vld [vmem:[%s15 + $0x48] sm:$0xff]
    %v827 = vld [vmem:[%s15 + $0x50] sm:$0xff]
    %v828 = vld [vmem:[%s15 + $0x58] sm:$0xff]
    %v829 = vld [vmem:[%s15 + $0x60] sm:$0xff]
    %v830 = vld [vmem:[%s15 + $0x68] sm:$0xff]
    %v831 = vld [vmem:[%s15 + $0x70] sm:$0xff]
    %v832 = vld [vmem:[%s15 + $0x78] sm:$0xff]
    %v833 = vld [vmem:[%s15 + $0x80] sm:$0xff]
    %v834 = vld [vmem:[%s15 + $0x88] sm:$0xff]
    %v835 = vld [vmem:[%s15 + $0x90] sm:$0xff]
    %v836 = vld [vmem:[%s15 + $0x98] sm:$0xff]
    %v837 = vld [vmem:[%s15 + $0xa0] sm:$0xff]
    %v838 = vld [vmem:[%s15 + $0xa8] sm:$0xff]
    %v839 = vld [vmem:[%s15 + $0xb0] sm:$0xff]
    %v840 = vld [vmem:[%s15 + $0xb8] sm:$0xff]
    %v841 = vld [vmem:[%s15 + $0xc0] sm:$0xff]
    %v842 = vld [vmem:[%s15 + $0xc8] sm:$0xff]
    %v843 = vld [vmem:[%s15 + $0xd0] sm:$0xff]
    %v844 = vld [vmem:[%s15 + $0xd8] sm:$0xff]
    %v845 = vld [vmem:[%s15 + $0xe0] sm:$0xff]
    %v846 = vld [vmem:[%s15 + $0xe8] sm:$0xff]
    %v847 = vld [vmem:[%s15 + $0xf0] sm:$0xff]
    %v848 = vld [vmem:[%s15 + $0xf8] sm:$0xff]
    %v849 = vld [vmem:[%s15 + $0x100] sm:$0xff]
    %v850 = vld [vmem:[%s15 + $0x108] sm:$0xff]
    %v851 = vld [vmem:[%s15 + $0x110] sm:$0xff]
    %v852 = vld [vmem:[%s15 + $0x118] sm:$0xff]
    %v853 = vld [vmem:[%s15 + $0x120] sm:$0xff]
    %v854 = vld [vmem:[%s15 + $0x128] sm:$0xff]
    %v855 = vld [vmem:[%s15 + $0x130] sm:$0xff]
    %v856 = vld [vmem:[%s15 + $0x138] sm:$0xff]
    %v857 = vld [vmem:[%s15 + $0x140] sm:$0xff]
    %v858 = vld [vmem:[%s15 + $0x148] sm:$0xff]
    %v859 = vld [vmem:[%s15 + $0x150] sm:$0xff]
    %v860 = vld [vmem:[%s15 + $0x158] sm:$0xff]
    %vm861 = vcmask 359424
    %v863 = vsel %vm861, %v814, 0
    %v866 = vsel %vm861, %v815, 0
    %v869 = vsel %vm861, %v816, 0
    %vm871 = vcmask 1043456
    %v873 = vsel %vm871, %v810, 0
    %v876 = vsel %vm871, %v811, 0
    %v879 = vsel %vm871, %v812, 0
    %881 = vmatpush.msra.mxu0 0.0
    %882 = vmatpush.msra.mxu0 0.0
    %883 = vmatpush.msra.mxu0 0.0
    %884 = vmatpush.msra.mxu0 0.0
    %885 = vmatpush.msra.mxu0 0.0
    %886 = vmatpush.msra.mxu0 0.0
    %887 = vmatpush.msra.mxu0 0.0
    %888 = vmatpush.msra.mxu0 0.0
    %889 = vmatpush.msra.mxu0 0.0
    %890 = vmatpush.msra.mxu0 0.0
    %891 = vmatpush.msra.mxu0 %v873
    %892 = vmatpush.msra.mxu0 %v807
    %893 = vmatpush.msra.mxu0 %v804
    %894 = vmatpush.msra.mxu0 %v801
    %895 = vmatpush.msra.mxu0 %v798
    %896 = vmatpush.msra.mxu0 %v795
    %897 = vmatmul.f32.gmra.mxu0 %v863
    %v898 = vpop.f32.mrf.mxu0
    %v899 = vadd.f32 0.0, %v898
    %900 = vmatmul.f32.gmra.mxu0 %v866
    %v901 = vpop.f32.mrf.mxu0
    %v902 = vadd.f32 0.0, %v901
    %903 = vmatmul.f32.gmra.mxu0 %v869
    %v904 = vpop.f32.mrf.mxu0
    %v905 = vadd.f32 0.0, %v904
    %906 = vdwg.mxu0
    %907 = vmatpush.msra.mxu0 0.0
    %908 = vmatpush.msra.mxu0 0.0
    %909 = vmatpush.msra.mxu0 0.0
    %910 = vmatpush.msra.mxu0 0.0
    %911 = vmatpush.msra.mxu0 0.0
    %912 = vmatpush.msra.mxu0 0.0
    %913 = vmatpush.msra.mxu0 0.0
    %914 = vmatpush.msra.mxu0 0.0
    %915 = vmatpush.msra.mxu0 0.0
    %916 = vmatpush.msra.mxu0 0.0
    %917 = vmatpush.msra.mxu0 %v876
    %918 = vmatpush.msra.mxu0 %v808
    %919 = vmatpush.msra.mxu0 %v805
    %920 = vmatpush.msra.mxu0 %v802
    %921 = vmatpush.msra.mxu0 %v799
    %922 = vmatpush.msra.mxu0 %v796
    %923 = vmatmul.f32.gmra.mxu0 %v863
    %v924 = vpop.f32.mrf.mxu0
    %v925 = vadd.f32 0.0, %v924
    %926 = vmatmul.f32.gmra.mxu0 %v866
    %v927 = vpop.f32.mrf.mxu0
    %v928 = vadd.f32 0.0, %v927
    %929 = vmatmul.f32.gmra.mxu0 %v869
    %v930 = vpop.f32.mrf.mxu0
    %v931 = vadd.f32 0.0, %v930
    %932 = vdwg.mxu0
    %933 = vmatpush.msra.mxu0 0.0
    %934 = vmatpush.msra.mxu0 0.0
    %935 = vmatpush.msra.mxu0 0.0
    %936 = vmatpush.msra.mxu0 0.0
    %937 = vmatpush.msra.mxu0 0.0
    %938 = vmatpush.msra.mxu0 0.0
    %939 = vmatpush.msra.mxu0 0.0
    %940 = vmatpush.msra.mxu0 0.0
    %941 = vmatpush.msra.mxu0 0.0
    %942 = vmatpush.msra.mxu0 0.0
    %943 = vmatpush.msra.mxu0 %v879
    %944 = vmatpush.msra.mxu0 %v809
    %945 = vmatpush.msra.mxu0 %v806
    %946 = vmatpush.msra.mxu0 %v803
    %947 = vmatpush.msra.mxu0 %v800
    %948 = vmatpush.msra.mxu0 %v797
    %949 = vmatmul.f32.gmra.mxu0 %v863
    %v950 = vpop.f32.mrf.mxu0
    %v951 = vadd.f32 0.0, %v950
    %952 = vmatmul.f32.gmra.mxu0 %v866
    %v953 = vpop.f32.mrf.mxu0
    %v954 = vadd.f32 0.0, %v953
    %955 = vmatmul.f32.gmra.mxu0 %v869
    %v956 = vpop.f32.mrf.mxu0
    %v957 = vadd.f32 0.0, %v956
    %958 = vdwg.mxu0
    %vm959 = vcmask 785408
    %v961 = vsel %vm959, %v951, 0
    %v964 = vsel %vm959, %v954, 0
    %v967 = vsel %vm959, %v957, 0
    %969 = vmatpush.msra.mxu0 %v832
    %970 = vmatpush.msra.mxu0 %v831
    %971 = vmatpush.msra.mxu0 %v830
    %972 = vmatpush.msra.mxu0 %v829
    %973 = vmatpush.msra.mxu0 %v828
    %974 = vmatpush.msra.mxu0 %v827
    %975 = vmatpush.msra.mxu0 %v826
    %976 = vmatpush.msra.mxu0 %v825
    %977 = vmatpush.msra.mxu0 %v824
    %978 = vmatpush.msra.mxu0 %v823
    %979 = vmatpush.msra.mxu0 %v822
    %980 = vmatpush.msra.mxu0 %v821
    %981 = vmatpush.msra.mxu0 %v820
    %982 = vmatpush.msra.mxu0 %v819
    %983 = vmatpush.msra.mxu0 %v818
    %984 = vmatpush.msra.mxu0 %v817
    %985 = vmatmul.f32.gmra.mxu0 %v899
    %v986 = vpop.f32.mrf.mxu0
    %v987 = vadd.f32 0.0, %v986
    %988 = vmatmul.f32.gmra.mxu0 %v902
    %v989 = vpop.f32.mrf.mxu0
    %v990 = vadd.f32 0.0, %v989
    %991 = vmatmul.f32.gmra.mxu0 %v905
    %v992 = vpop.f32.mrf.mxu0
    %v993 = vadd.f32 0.0, %v992
    %994 = vdwg.mxu0
    %995 = vmatpush.msra.mxu0 %v848
    %996 = vmatpush.msra.mxu0 %v847
    %997 = vmatpush.msra.mxu0 %v846
    %998 = vmatpush.msra.mxu0 %v845
    %999 = vmatpush.msra.mxu0 %v844
    %1000 = vmatpush.msra.mxu0 %v843
    %1001 = vmatpush.msra.mxu0 %v842
    %1002 = vmatpush.msra.mxu0 %v841
    %1003 = vmatpush.msra.mxu0 %v840
    %1004 = vmatpush.msra.mxu0 %v839
    %1005 = vmatpush.msra.mxu0 %v838
    %1006 = vmatpush.msra.mxu0 %v837
    %1007 = vmatpush.msra.mxu0 %v836
    %1008 = vmatpush.msra.mxu0 %v835
    %1009 = vmatpush.msra.mxu0 %v834
    %1010 = vmatpush.msra.mxu0 %v833
    %1011 = vmatmul.f32.gmra.mxu0 %v925
    %v1012 = vpop.f32.mrf.mxu0
    %v1013 = vadd.f32 %v987, %v1012
    %1014 = vmatmul.f32.gmra.mxu0 %v928
    %v1015 = vpop.f32.mrf.mxu0
    %v1016 = vadd.f32 %v990, %v1015
    %1017 = vmatmul.f32.gmra.mxu0 %v931
    %v1018 = vpop.f32.mrf.mxu0
    %v1019 = vadd.f32 %v993, %v1018
    %1020 = vdwg.mxu0
    %1021 = vmatpush.msra.mxu0 0.0
    %1022 = vmatpush.msra.mxu0 0.0
    %1023 = vmatpush.msra.mxu0 0.0
    %1024 = vmatpush.msra.mxu0 0.0
    %1025 = vmatpush.msra.mxu0 %v860
    %1026 = vmatpush.msra.mxu0 %v859
    %1027 = vmatpush.msra.mxu0 %v858
    %1028 = vmatpush.msra.mxu0 %v857
    %1029 = vmatpush.msra.mxu0 %v856
    %1030 = vmatpush.msra.mxu0 %v855
    %1031 = vmatpush.msra.mxu0 %v854
    %1032 = vmatpush.msra.mxu0 %v853
    %1033 = vmatpush.msra.mxu0 %v852
    %1034 = vmatpush.msra.mxu0 %v851
    %1035 = vmatpush.msra.mxu0 %v850
    %1036 = vmatpush.msra.mxu0 %v849
    %1037 = vmatmul.f32.gmra.mxu0 %v961
    %v1038 = vpop.f32.mrf.mxu0
    %v1039 = vadd.f32 %v1013, %v1038
    %1040 = vmatmul.f32.gmra.mxu0 %v964
    %v1041 = vpop.f32.mrf.mxu0
    %v1042 = vadd.f32 %v1016, %v1041
    %1043 = vmatmul.f32.gmra.mxu0 %v967
    %v1044 = vpop.f32.mrf.mxu0
    %v1045 = vadd.f32 %v1019, %v1044
    %1046 = vdwg.mxu0
    %v1048 = vperm.slane %v813, 0
    %v1050 = vadd.f32 %v1048, %v1039
    %v1051 = vadd.f32 %v1048, %v1042
    %v1052 = vadd.f32 %v1048, %v1045
    %s1053 = scalar_lea.vmem %s13, 24
    %v1054 = vld [vmem:[%s1053] sm:$0xff]
    %v1055 = vld [vmem:[%s1053 + $0x8] sm:$0xff]
    %v1056 = vld [vmem:[%s1053 + $0x10] sm:$0xf]
    %s1057 = scalar_lea.vmem %s15, 352
    %v1058 = vld [vmem:[%s1057] sm:$0xff]
    %v1059 = vld [vmem:[%s1057 + $0x8] sm:$0xff]
    %v1060 = vld [vmem:[%s1057 + $0x10] sm:$0xff]
    %v1061 = vld [vmem:[%s1057 + $0x18] sm:$0xff]
    %v1062 = vld [vmem:[%s1057 + $0x20] sm:$0xff]
    %v1063 = vld [vmem:[%s1057 + $0x28] sm:$0xff]
    %v1064 = vld [vmem:[%s1057 + $0x30] sm:$0xff]
    %v1065 = vld [vmem:[%s1057 + $0x38] sm:$0xff]
    %v1066 = vld [vmem:[%s1057 + $0x40] sm:$0xff]
    %v1067 = vld [vmem:[%s1057 + $0x48] sm:$0xff]
    %v1068 = vld [vmem:[%s1057 + $0x50] sm:$0xff]
    %v1069 = vld [vmem:[%s1057 + $0x58] sm:$0xff]
    %v1070 = vld [vmem:[%s1057 + $0x60] sm:$0xff]
    %v1071 = vld [vmem:[%s1057 + $0x68] sm:$0xff]
    %v1072 = vld [vmem:[%s1057 + $0x70] sm:$0xff]
    %v1073 = vld [vmem:[%s1057 + $0x78] sm:$0xff]
    %v1074 = vld [vmem:[%s1057 + $0x80] sm:$0xff]
    %v1075 = vld [vmem:[%s1057 + $0x88] sm:$0xff]
    %v1076 = vld [vmem:[%s1057 + $0x90] sm:$0xff]
    %v1077 = vld [vmem:[%s1057 + $0x98] sm:$0xff]
    %v1078 = vld [vmem:[%s1057 + $0xa0] sm:$0xff]
    %v1079 = vld [vmem:[%s1057 + $0xa8] sm:$0xff]
    %v1080 = vld [vmem:[%s1057 + $0xb0] sm:$0xff]
    %v1081 = vld [vmem:[%s1057 + $0xb8] sm:$0xff]
    %v1082 = vld [vmem:[%s1057 + $0xc0] sm:$0xff]
    %v1083 = vld [vmem:[%s1057 + $0xc8] sm:$0xff]
    %v1084 = vld [vmem:[%s1057 + $0xd0] sm:$0xff]
    %v1085 = vld [vmem:[%s1057 + $0xd8] sm:$0xff]
    %v1086 = vld [vmem:[%s1057 + $0xe0] sm:$0xff]
    %v1087 = vld [vmem:[%s1057 + $0xe8] sm:$0xff]
    %v1088 = vld [vmem:[%s1057 + $0xf0] sm:$0xff]
    %v1089 = vld [vmem:[%s1057 + $0xf8] sm:$0xff]
    %v1090 = vld [vmem:[%s1057 + $0x100] sm:$0xff]
    %v1091 = vld [vmem:[%s1057 + $0x108] sm:$0xff]
    %v1092 = vld [vmem:[%s1057 + $0x110] sm:$0xff]
    %v1093 = vld [vmem:[%s1057 + $0x118] sm:$0xff]
    %v1094 = vld [vmem:[%s1057 + $0x120] sm:$0xff]
    %v1095 = vld [vmem:[%s1057 + $0x128] sm:$0xff]
    %v1096 = vld [vmem:[%s1057 + $0x130] sm:$0xff]
    %v1097 = vld [vmem:[%s1057 + $0x138] sm:$0xff]
    %v1098 = vld [vmem:[%s1057 + $0x140] sm:$0xff]
    %v1099 = vld [vmem:[%s1057 + $0x148] sm:$0xff]
    %v1100 = vld [vmem:[%s1057 + $0x150] sm:$0xff]
    %v1101 = vld [vmem:[%s1057 + $0x158] sm:$0xff]
    %v1103 = vsel %vm861, %v1054, 0
    %v1106 = vsel %vm861, %v1055, 0
    %v1109 = vsel %vm861, %v1056, 0
    %1111 = vmatpush.msra.mxu0 0.0
    %1112 = vmatpush.msra.mxu0 0.0
    %1113 = vmatpush.msra.mxu0 0.0
    %1114 = vmatpush.msra.mxu0 0.0
    %1115 = vmatpush.msra.mxu0 0.0
    %1116 = vmatpush.msra.mxu0 0.0
    %1117 = vmatpush.msra.mxu0 0.0
    %1118 = vmatpush.msra.mxu0 0.0
    %1119 = vmatpush.msra.mxu0 0.0
    %1120 = vmatpush.msra.mxu0 0.0
    %1121 = vmatpush.msra.mxu0 %v873
    %1122 = vmatpush.msra.mxu0 %v807
    %1123 = vmatpush.msra.mxu0 %v804
    %1124 = vmatpush.msra.mxu0 %v801
    %1125 = vmatpush.msra.mxu0 %v798
    %1126 = vmatpush.msra.mxu0 %v795
    %1127 = vmatmul.f32.gmra.mxu0 %v1103
    %v1128 = vpop.f32.mrf.mxu0
    %v1129 = vadd.f32 0.0, %v1128
    %1130 = vmatmul.f32.gmra.mxu0 %v1106
    %v1131 = vpop.f32.mrf.mxu0
    %v1132 = vadd.f32 0.0, %v1131
    %1133 = vmatmul.f32.gmra.mxu0 %v1109
    %v1134 = vpop.f32.mrf.mxu0
    %v1135 = vadd.f32 0.0, %v1134
    %1136 = vdwg.mxu0
    %1137 = vmatpush.msra.mxu0 0.0
    %1138 = vmatpush.msra.mxu0 0.0
    %1139 = vmatpush.msra.mxu0 0.0
    %1140 = vmatpush.msra.mxu0 0.0
    %1141 = vmatpush.msra.mxu0 0.0
    %1142 = vmatpush.msra.mxu0 0.0
    %1143 = vmatpush.msra.mxu0 0.0
    %1144 = vmatpush.msra.mxu0 0.0
    %1145 = vmatpush.msra.mxu0 0.0
    %1146 = vmatpush.msra.mxu0 0.0
    %1147 = vmatpush.msra.mxu0 %v876
    %1148 = vmatpush.msra.mxu0 %v808
    %1149 = vmatpush.msra.mxu0 %v805
    %1150 = vmatpush.msra.mxu0 %v802
    %1151 = vmatpush.msra.mxu0 %v799
    %1152 = vmatpush.msra.mxu0 %v796
    %1153 = vmatmul.f32.gmra.mxu0 %v1103
    %v1154 = vpop.f32.mrf.mxu0
    %v1155 = vadd.f32 0.0, %v1154
    %1156 = vmatmul.f32.gmra.mxu0 %v1106
    %v1157 = vpop.f32.mrf.mxu0
    %v1158 = vadd.f32 0.0, %v1157
    %1159 = vmatmul.f32.gmra.mxu0 %v1109
    %v1160 = vpop.f32.mrf.mxu0
    %v1161 = vadd.f32 0.0, %v1160
    %1162 = vdwg.mxu0
    %1163 = vmatpush.msra.mxu0 0.0
    %1164 = vmatpush.msra.mxu0 0.0
    %1165 = vmatpush.msra.mxu0 0.0
    %1166 = vmatpush.msra.mxu0 0.0
    %1167 = vmatpush.msra.mxu0 0.0
    %1168 = vmatpush.msra.mxu0 0.0
    %1169 = vmatpush.msra.mxu0 0.0
    %1170 = vmatpush.msra.mxu0 0.0
    %1171 = vmatpush.msra.mxu0 0.0
    %1172 = vmatpush.msra.mxu0 0.0
    %1173 = vmatpush.msra.mxu0 %v879
    %1174 = vmatpush.msra.mxu0 %v809
    %1175 = vmatpush.msra.mxu0 %v806
    %1176 = vmatpush.msra.mxu0 %v803
    %1177 = vmatpush.msra.mxu0 %v800
    %1178 = vmatpush.msra.mxu0 %v797
    %1179 = vmatmul.f32.gmra.mxu0 %v1103
    %v1180 = vpop.f32.mrf.mxu0
    %v1181 = vadd.f32 0.0, %v1180
    %1182 = vmatmul.f32.gmra.mxu0 %v1106
    %v1183 = vpop.f32.mrf.mxu0
    %v1184 = vadd.f32 0.0, %v1183
    %1185 = vmatmul.f32.gmra.mxu0 %v1109
    %v1186 = vpop.f32.mrf.mxu0
    %v1187 = vadd.f32 0.0, %v1186
    %1188 = vdwg.mxu0
    %v1190 = vsel %vm959, %v1181, 0
    %v1193 = vsel %vm959, %v1184, 0
    %v1196 = vsel %vm959, %v1187, 0
    %1198 = vmatpush.msra.mxu0 %v1073
    %1199 = vmatpush.msra.mxu0 %v1072
    %1200 = vmatpush.msra.mxu0 %v1071
    %1201 = vmatpush.msra.mxu0 %v1070
    %1202 = vmatpush.msra.mxu0 %v1069
    %1203 = vmatpush.msra.mxu0 %v1068
    %1204 = vmatpush.msra.mxu0 %v1067
    %1205 = vmatpush.msra.mxu0 %v1066
    %1206 = vmatpush.msra.mxu0 %v1065
    %1207 = vmatpush.msra.mxu0 %v1064
    %1208 = vmatpush.msra.mxu0 %v1063
    %1209 = vmatpush.msra.mxu0 %v1062
    %1210 = vmatpush.msra.mxu0 %v1061
    %1211 = vmatpush.msra.mxu0 %v1060
    %1212 = vmatpush.msra.mxu0 %v1059
    %1213 = vmatpush.msra.mxu0 %v1058
    %1214 = vmatmul.f32.gmra.mxu0 %v1129
    %v1215 = vpop.f32.mrf.mxu0
    %v1216 = vadd.f32 0.0, %v1215
    %1217 = vmatmul.f32.gmra.mxu0 %v1132
    %v1218 = vpop.f32.mrf.mxu0
    %v1219 = vadd.f32 0.0, %v1218
    %1220 = vmatmul.f32.gmra.mxu0 %v1135
    %v1221 = vpop.f32.mrf.mxu0
    %v1222 = vadd.f32 0.0, %v1221
    %1223 = vdwg.mxu0
    %1224 = vmatpush.msra.mxu0 %v1089
    %1225 = vmatpush.msra.mxu0 %v1088
    %1226 = vmatpush.msra.mxu0 %v1087
    %1227 = vmatpush.msra.mxu0 %v1086
    %1228 = vmatpush.msra.mxu0 %v1085
    %1229 = vmatpush.msra.mxu0 %v1084
    %1230 = vmatpush.msra.mxu0 %v1083
    %1231 = vmatpush.msra.mxu0 %v1082
    %1232 = vmatpush.msra.mxu0 %v1081
    %1233 = vmatpush.msra.mxu0 %v1080
    %1234 = vmatpush.msra.mxu0 %v1079
    %1235 = vmatpush.msra.mxu0 %v1078
    %1236 = vmatpush.msra.mxu0 %v1077
    %1237 = vmatpush.msra.mxu0 %v1076
    %1238 = vmatpush.msra.mxu0 %v1075
    %1239 = vmatpush.msra.mxu0 %v1074
    %1240 = vmatmul.f32.gmra.mxu0 %v1155
    %v1241 = vpop.f32.mrf.mxu0
    %v1242 = vadd.f32 %v1216, %v1241
    %1243 = vmatmul.f32.gmra.mxu0 %v1158
    %v1244 = vpop.f32.mrf.mxu0
    %v1245 = vadd.f32 %v1219, %v1244
    %1246 = vmatmul.f32.gmra.mxu0 %v1161
    %v1247 = vpop.f32.mrf.mxu0
    %v1248 = vadd.f32 %v1222, %v1247
    %1249 = vdwg.mxu0
    %1250 = vmatpush.msra.mxu0 0.0
    %1251 = vmatpush.msra.mxu0 0.0
    %1252 = vmatpush.msra.mxu0 0.0
    %1253 = vmatpush.msra.mxu0 0.0
    %1254 = vmatpush.msra.mxu0 %v1101
    %1255 = vmatpush.msra.mxu0 %v1100
    %1256 = vmatpush.msra.mxu0 %v1099
    %1257 = vmatpush.msra.mxu0 %v1098
    %1258 = vmatpush.msra.mxu0 %v1097
    %1259 = vmatpush.msra.mxu0 %v1096
    %1260 = vmatpush.msra.mxu0 %v1095
    %1261 = vmatpush.msra.mxu0 %v1094
    %1262 = vmatpush.msra.mxu0 %v1093
    %1263 = vmatpush.msra.mxu0 %v1092
    %1264 = vmatpush.msra.mxu0 %v1091
    %1265 = vmatpush.msra.mxu0 %v1090
    %1266 = vmatmul.f32.gmra.mxu0 %v1190
    %v1267 = vpop.f32.mrf.mxu0
    %v1268 = vadd.f32 %v1242, %v1267
    %1269 = vmatmul.f32.gmra.mxu0 %v1193
    %v1270 = vpop.f32.mrf.mxu0
    %v1271 = vadd.f32 %v1245, %v1270
    %1272 = vmatmul.f32.gmra.mxu0 %v1196
    %v1273 = vpop.f32.mrf.mxu0
    %v1274 = vadd.f32 %v1248, %v1273
    %1275 = vdwg.mxu0
    %v1276 = vadd.f32 %v1050, %v1268
    %v1277 = vadd.f32 %v1051, %v1271
    %v1278 = vadd.f32 %v1052, %v1274
    %s1279 = scalar_lea.vmem %s13, 48
    %v1280 = vld [vmem:[%s1279] sm:$0xff]
    %v1281 = vld [vmem:[%s1279 + $0x8] sm:$0xff]
    %v1282 = vld [vmem:[%s1279 + $0x10] sm:$0xf]
    %s1283 = scalar_lea.vmem %s15, 704
    %v1284 = vld [vmem:[%s1283] sm:$0xff]
    %v1285 = vld [vmem:[%s1283 + $0x8] sm:$0xff]
    %v1286 = vld [vmem:[%s1283 + $0x10] sm:$0xff]
    %v1287 = vld [vmem:[%s1283 + $0x18] sm:$0xff]
    %v1288 = vld [vmem:[%s1283 + $0x20] sm:$0xff]
    %v1289 = vld [vmem:[%s1283 + $0x28] sm:$0xff]
    %v1290 = vld [vmem:[%s1283 + $0x30] sm:$0xff]
    %v1291 = vld [vmem:[%s1283 + $0x38] sm:$0xff]
    %v1292 = vld [vmem:[%s1283 + $0x40] sm:$0xff]
    %v1293 = vld [vmem:[%s1283 + $0x48] sm:$0xff]
    %v1294 = vld [vmem:[%s1283 + $0x50] sm:$0xff]
    %v1295 = vld [vmem:[%s1283 + $0x58] sm:$0xff]
    %v1296 = vld [vmem:[%s1283 + $0x60] sm:$0xff]
    %v1297 = vld [vmem:[%s1283 + $0x68] sm:$0xff]
    %v1298 = vld [vmem:[%s1283 + $0x70] sm:$0xff]
    %v1299 = vld [vmem:[%s1283 + $0x78] sm:$0xff]
    %v1300 = vld [vmem:[%s1283 + $0x80] sm:$0xff]
    %v1301 = vld [vmem:[%s1283 + $0x88] sm:$0xff]
    %v1302 = vld [vmem:[%s1283 + $0x90] sm:$0xff]
    %v1303 = vld [vmem:[%s1283 + $0x98] sm:$0xff]
    %v1304 = vld [vmem:[%s1283 + $0xa0] sm:$0xff]
    %v1305 = vld [vmem:[%s1283 + $0xa8] sm:$0xff]
    %v1306 = vld [vmem:[%s1283 + $0xb0] sm:$0xff]
    %v1307 = vld [vmem:[%s1283 + $0xb8] sm:$0xff]
    %v1308 = vld [vmem:[%s1283 + $0xc0] sm:$0xff]
    %v1309 = vld [vmem:[%s1283 + $0xc8] sm:$0xff]
    %v1310 = vld [vmem:[%s1283 + $0xd0] sm:$0xff]
    %v1311 = vld [vmem:[%s1283 + $0xd8] sm:$0xff]
    %v1312 = vld [vmem:[%s1283 + $0xe0] sm:$0xff]
    %v1313 = vld [vmem:[%s1283 + $0xe8] sm:$0xff]
    %v1314 = vld [vmem:[%s1283 + $0xf0] sm:$0xff]
    %v1315 = vld [vmem:[%s1283 + $0xf8] sm:$0xff]
    %v1316 = vld [vmem:[%s1283 + $0x100] sm:$0xff]
    %v1317 = vld [vmem:[%s1283 + $0x108] sm:$0xff]
    %v1318 = vld [vmem:[%s1283 + $0x110] sm:$0xff]
    %v1319 = vld [vmem:[%s1283 + $0x118] sm:$0xff]
    %v1320 = vld [vmem:[%s1283 + $0x120] sm:$0xff]
    %v1321 = vld [vmem:[%s1283 + $0x128] sm:$0xff]
    %v1322 = vld [vmem:[%s1283 + $0x130] sm:$0xff]
    %v1323 = vld [vmem:[%s1283 + $0x138] sm:$0xff]
    %v1324 = vld [vmem:[%s1283 + $0x140] sm:$0xff]
    %v1325 = vld [vmem:[%s1283 + $0x148] sm:$0xff]
    %v1326 = vld [vmem:[%s1283 + $0x150] sm:$0xff]
    %v1327 = vld [vmem:[%s1283 + $0x158] sm:$0xff]
    %v1329 = vsel %vm861, %v1280, 0
    %v1332 = vsel %vm861, %v1281, 0
    %v1335 = vsel %vm861, %v1282, 0
    %1337 = vmatpush.msra.mxu0 0.0
    %1338 = vmatpush.msra.mxu0 0.0
    %1339 = vmatpush.msra.mxu0 0.0
    %1340 = vmatpush.msra.mxu0 0.0
    %1341 = vmatpush.msra.mxu0 0.0
    %1342 = vmatpush.msra.mxu0 0.0
    %1343 = vmatpush.msra.mxu0 0.0
    %1344 = vmatpush.msra.mxu0 0.0
    %1345 = vmatpush.msra.mxu0 0.0
    %1346 = vmatpush.msra.mxu0 0.0
    %1347 = vmatpush.msra.mxu0 %v873
    %1348 = vmatpush.msra.mxu0 %v807
    %1349 = vmatpush.msra.mxu0 %v804
    %1350 = vmatpush.msra.mxu0 %v801
    %1351 = vmatpush.msra.mxu0 %v798
    %1352 = vmatpush.msra.mxu0 %v795
    %1353 = vmatmul.f32.gmra.mxu0 %v1329
    %v1354 = vpop.f32.mrf.mxu0
    %v1355 = vadd.f32 0.0, %v1354
    %1356 = vmatmul.f32.gmra.mxu0 %v1332
    %v1357 = vpop.f32.mrf.mxu0
    %v1358 = vadd.f32 0.0, %v1357
    %1359 = vmatmul.f32.gmra.mxu0 %v1335
    %v1360 = vpop.f32.mrf.mxu0
    %v1361 = vadd.f32 0.0, %v1360
    %1362 = vdwg.mxu0
    %1363 = vmatpush.msra.mxu0 0.0
    %1364 = vmatpush.msra.mxu0 0.0
    %1365 = vmatpush.msra.mxu0 0.0
    %1366 = vmatpush.msra.mxu0 0.0
    %1367 = vmatpush.msra.mxu0 0.0
    %1368 = vmatpush.msra.mxu0 0.0
    %1369 = vmatpush.msra.mxu0 0.0
    %1370 = vmatpush.msra.mxu0 0.0
    %1371 = vmatpush.msra.mxu0 0.0
    %1372 = vmatpush.msra.mxu0 0.0
    %1373 = vmatpush.msra.mxu0 %v876
    %1374 = vmatpush.msra.mxu0 %v808
    %1375 = vmatpush.msra.mxu0 %v805
    %1376 = vmatpush.msra.mxu0 %v802
    %1377 = vmatpush.msra.mxu0 %v799
    %1378 = vmatpush.msra.mxu0 %v796
    %1379 = vmatmul.f32.gmra.mxu0 %v1329
    %v1380 = vpop.f32.mrf.mxu0
    %v1381 = vadd.f32 0.0, %v1380
    %1382 = vmatmul.f32.gmra.mxu0 %v1332
    %v1383 = vpop.f32.mrf.mxu0
    %v1384 = vadd.f32 0.0, %v1383
    %1385 = vmatmul.f32.gmra.mxu0 %v1335
    %v1386 = vpop.f32.mrf.mxu0
    %v1387 = vadd.f32 0.0, %v1386
    %1388 = vdwg.mxu0
    %1389 = vmatpush.msra.mxu0 0.0
    %1390 = vmatpush.msra.mxu0 0.0
    %1391 = vmatpush.msra.mxu0 0.0
    %1392 = vmatpush.msra.mxu0 0.0
    %1393 = vmatpush.msra.mxu0 0.0
    %1394 = vmatpush.msra.mxu0 0.0
    %1395 = vmatpush.msra.mxu0 0.0
    %1396 = vmatpush.msra.mxu0 0.0
    %1397 = vmatpush.msra.mxu0 0.0
    %1398 = vmatpush.msra.mxu0 0.0
    %1399 = vmatpush.msra.mxu0 %v879
    %1400 = vmatpush.msra.mxu0 %v809
    %1401 = vmatpush.msra.mxu0 %v806
    %1402 = vmatpush.msra.mxu0 %v803
    %1403 = vmatpush.msra.mxu0 %v800
    %1404 = vmatpush.msra.mxu0 %v797
    %1405 = vmatmul.f32.gmra.mxu0 %v1329
    %v1406 = vpop.f32.mrf.mxu0
    %v1407 = vadd.f32 0.0, %v1406
    %1408 = vmatmul.f32.gmra.mxu0 %v1332
    %v1409 = vpop.f32.mrf.mxu0
    %v1410 = vadd.f32 0.0, %v1409
    %1411 = vmatmul.f32.gmra.mxu0 %v1335
    %v1412 = vpop.f32.mrf.mxu0
    %v1413 = vadd.f32 0.0, %v1412
    %1414 = vdwg.mxu0
    %v1416 = vsel %vm959, %v1407, 0
    %v1419 = vsel %vm959, %v1410, 0
    %v1422 = vsel %vm959, %v1413, 0
    %1424 = vmatpush.msra.mxu0 %v1299
    %1425 = vmatpush.msra.mxu0 %v1298
    %1426 = vmatpush.msra.mxu0 %v1297
    %1427 = vmatpush.msra.mxu0 %v1296
    %1428 = vmatpush.msra.mxu0 %v1295
    %1429 = vmatpush.msra.mxu0 %v1294
    %1430 = vmatpush.msra.mxu0 %v1293
    %1431 = vmatpush.msra.mxu0 %v1292
    %1432 = vmatpush.msra.mxu0 %v1291
    %1433 = vmatpush.msra.mxu0 %v1290
    %1434 = vmatpush.msra.mxu0 %v1289
    %1435 = vmatpush.msra.mxu0 %v1288
    %1436 = vmatpush.msra.mxu0 %v1287
    %1437 = vmatpush.msra.mxu0 %v1286
    %1438 = vmatpush.msra.mxu0 %v1285
    %1439 = vmatpush.msra.mxu0 %v1284
    %1440 = vmatmul.f32.gmra.mxu0 %v1355
    %v1441 = vpop.f32.mrf.mxu0
    %v1442 = vadd.f32 0.0, %v1441
    %1443 = vmatmul.f32.gmra.mxu0 %v1358
    %v1444 = vpop.f32.mrf.mxu0
    %v1445 = vadd.f32 0.0, %v1444
    %1446 = vmatmul.f32.gmra.mxu0 %v1361
    %v1447 = vpop.f32.mrf.mxu0
    %v1448 = vadd.f32 0.0, %v1447
    %1449 = vdwg.mxu0
    %1450 = vmatpush.msra.mxu0 %v1315
    %1451 = vmatpush.msra.mxu0 %v1314
    %1452 = vmatpush.msra.mxu0 %v1313
    %1453 = vmatpush.msra.mxu0 %v1312
    %1454 = vmatpush.msra.mxu0 %v1311
    %1455 = vmatpush.msra.mxu0 %v1310
    %1456 = vmatpush.msra.mxu0 %v1309
    %1457 = vmatpush.msra.mxu0 %v1308
    %1458 = vmatpush.msra.mxu0 %v1307
    %1459 = vmatpush.msra.mxu0 %v1306
    %1460 = vmatpush.msra.mxu0 %v1305
    %1461 = vmatpush.msra.mxu0 %v1304
    %1462 = vmatpush.msra.mxu0 %v1303
    %1463 = vmatpush.msra.mxu0 %v1302
    %1464 = vmatpush.msra.mxu0 %v1301
    %1465 = vmatpush.msra.mxu0 %v1300
    %1466 = vmatmul.f32.gmra.mxu0 %v1381
    %v1467 = vpop.f32.mrf.mxu0
    %v1468 = vadd.f32 %v1442, %v1467
    %1469 = vmatmul.f32.gmra.mxu0 %v1384
    %v1470 = vpop.f32.mrf.mxu0
    %v1471 = vadd.f32 %v1445, %v1470
    %1472 = vmatmul.f32.gmra.mxu0 %v1387
    %v1473 = vpop.f32.mrf.mxu0
    %v1474 = vadd.f32 %v1448, %v1473
    %1475 = vdwg.mxu0
    %1476 = vmatpush.msra.mxu0 0.0
    %1477 = vmatpush.msra.mxu0 0.0
    %1478 = vmatpush.msra.mxu0 0.0
    %1479 = vmatpush.msra.mxu0 0.0
    %1480 = vmatpush.msra.mxu0 %v1327
    %1481 = vmatpush.msra.mxu0 %v1326
    %1482 = vmatpush.msra.mxu0 %v1325
    %1483 = vmatpush.msra.mxu0 %v1324
    %1484 = vmatpush.msra.mxu0 %v1323
    %1485 = vmatpush.msra.mxu0 %v1322
    %1486 = vmatpush.msra.mxu0 %v1321
    %1487 = vmatpush.msra.mxu0 %v1320
    %1488 = vmatpush.msra.mxu0 %v1319
    %1489 = vmatpush.msra.mxu0 %v1318
    %1490 = vmatpush.msra.mxu0 %v1317
    %1491 = vmatpush.msra.mxu0 %v1316
    %1492 = vmatmul.f32.gmra.mxu0 %v1416
    %v1493 = vpop.f32.mrf.mxu0
    %v1494 = vadd.f32 %v1468, %v1493
    %1495 = vmatmul.f32.gmra.mxu0 %v1419
    %v1496 = vpop.f32.mrf.mxu0
    %v1497 = vadd.f32 %v1471, %v1496
    %1498 = vmatmul.f32.gmra.mxu0 %v1422
    %v1499 = vpop.f32.mrf.mxu0
    %v1500 = vadd.f32 %v1474, %v1499
    %1501 = vdwg.mxu0
    %v1502 = vadd.f32 %v1276, %v1494
    %v1503 = vadd.f32 %v1277, %v1497
    %v1504 = vadd.f32 %v1278, %v1500
    %s1505 = scalar_lea.vmem %s13, 72
    %v1506 = vld [vmem:[%s1505] sm:$0xff]
    %v1507 = vld [vmem:[%s1505 + $0x8] sm:$0xff]
    %v1508 = vld [vmem:[%s1505 + $0x10] sm:$0xf]
    %s1509 = scalar_lea.vmem %s15, 1056
    %v1510 = vld [vmem:[%s1509] sm:$0xff]
    %v1511 = vld [vmem:[%s1509 + $0x8] sm:$0xff]
    %v1512 = vld [vmem:[%s1509 + $0x10] sm:$0xff]
    %v1513 = vld [vmem:[%s1509 + $0x18] sm:$0xff]
    %v1514 = vld [vmem:[%s1509 + $0x20] sm:$0xff]
    %v1515 = vld [vmem:[%s1509 + $0x28] sm:$0xff]
    %v1516 = vld [vmem:[%s1509 + $0x30] sm:$0xff]
    %v1517 = vld [vmem:[%s1509 + $0x38] sm:$0xff]
    %v1518 = vld [vmem:[%s1509 + $0x40] sm:$0xff]
    %v1519 = vld [vmem:[%s1509 + $0x48] sm:$0xff]
    %v1520 = vld [vmem:[%s1509 + $0x50] sm:$0xff]
    %v1521 = vld [vmem:[%s1509 + $0x58] sm:$0xff]
    %v1522 = vld [vmem:[%s1509 + $0x60] sm:$0xff]
    %v1523 = vld [vmem:[%s1509 + $0x68] sm:$0xff]
    %v1524 = vld [vmem:[%s1509 + $0x70] sm:$0xff]
    %v1525 = vld [vmem:[%s1509 + $0x78] sm:$0xff]
    %v1526 = vld [vmem:[%s1509 + $0x80] sm:$0xff]
    %v1527 = vld [vmem:[%s1509 + $0x88] sm:$0xff]
    %v1528 = vld [vmem:[%s1509 + $0x90] sm:$0xff]
    %v1529 = vld [vmem:[%s1509 + $0x98] sm:$0xff]
    %v1530 = vld [vmem:[%s1509 + $0xa0] sm:$0xff]
    %v1531 = vld [vmem:[%s1509 + $0xa8] sm:$0xff]
    %v1532 = vld [vmem:[%s1509 + $0xb0] sm:$0xff]
    %v1533 = vld [vmem:[%s1509 + $0xb8] sm:$0xff]
    %v1534 = vld [vmem:[%s1509 + $0xc0] sm:$0xff]
    %v1535 = vld [vmem:[%s1509 + $0xc8] sm:$0xff]
    %v1536 = vld [vmem:[%s1509 + $0xd0] sm:$0xff]
    %v1537 = vld [vmem:[%s1509 + $0xd8] sm:$0xff]
    %v1538 = vld [vmem:[%s1509 + $0xe0] sm:$0xff]
    %v1539 = vld [vmem:[%s1509 + $0xe8] sm:$0xff]
    %v1540 = vld [vmem:[%s1509 + $0xf0] sm:$0xff]
    %v1541 = vld [vmem:[%s1509 + $0xf8] sm:$0xff]
    %v1542 = vld [vmem:[%s1509 + $0x100] sm:$0xff]
    %v1543 = vld [vmem:[%s1509 + $0x108] sm:$0xff]
    %v1544 = vld [vmem:[%s1509 + $0x110] sm:$0xff]
    %v1545 = vld [vmem:[%s1509 + $0x118] sm:$0xff]
    %v1546 = vld [vmem:[%s1509 + $0x120] sm:$0xff]
    %v1547 = vld [vmem:[%s1509 + $0x128] sm:$0xff]
    %v1548 = vld [vmem:[%s1509 + $0x130] sm:$0xff]
    %v1549 = vld [vmem:[%s1509 + $0x138] sm:$0xff]
    %v1550 = vld [vmem:[%s1509 + $0x140] sm:$0xff]
    %v1551 = vld [vmem:[%s1509 + $0x148] sm:$0xff]
    %v1552 = vld [vmem:[%s1509 + $0x150] sm:$0xff]
    %v1553 = vld [vmem:[%s1509 + $0x158] sm:$0xff]
    %v1555 = vsel %vm861, %v1506, 0
    %v1558 = vsel %vm861, %v1507, 0
    %v1561 = vsel %vm861, %v1508, 0
    %1563 = vmatpush.msra.mxu0 0.0
    %1564 = vmatpush.msra.mxu0 0.0
    %1565 = vmatpush.msra.mxu0 0.0
    %1566 = vmatpush.msra.mxu0 0.0
    %1567 = vmatpush.msra.mxu0 0.0
    %1568 = vmatpush.msra.mxu0 0.0
    %1569 = vmatpush.msra.mxu0 0.0
    %1570 = vmatpush.msra.mxu0 0.0
    %1571 = vmatpush.msra.mxu0 0.0
    %1572 = vmatpush.msra.mxu0 0.0
    %1573 = vmatpush.msra.mxu0 %v873
    %1574 = vmatpush.msra.mxu0 %v807
    %1575 = vmatpush.msra.mxu0 %v804
    %1576 = vmatpush.msra.mxu0 %v801
    %1577 = vmatpush.msra.mxu0 %v798
    %1578 = vmatpush.msra.mxu0 %v795
    %1579 = vmatmul.f32.gmra.mxu0 %v1555
    %v1580 = vpop.f32.mrf.mxu0
    %v1581 = vadd.f32 0.0, %v1580
    %1582 = vmatmul.f32.gmra.mxu0 %v1558
    %v1583 = vpop.f32.mrf.mxu0
    %v1584 = vadd.f32 0.0, %v1583
    %1585 = vmatmul.f32.gmra.mxu0 %v1561
    %v1586 = vpop.f32.mrf.mxu0
    %v1587 = vadd.f32 0.0, %v1586
    %1588 = vdwg.mxu0
    %1589 = vmatpush.msra.mxu0 0.0
    %1590 = vmatpush.msra.mxu0 0.0
    %1591 = vmatpush.msra.mxu0 0.0
    %1592 = vmatpush.msra.mxu0 0.0
    %1593 = vmatpush.msra.mxu0 0.0
    %1594 = vmatpush.msra.mxu0 0.0
    %1595 = vmatpush.msra.mxu0 0.0
    %1596 = vmatpush.msra.mxu0 0.0
    %1597 = vmatpush.msra.mxu0 0.0
    %1598 = vmatpush.msra.mxu0 0.0
    %1599 = vmatpush.msra.mxu0 %v876
    %1600 = vmatpush.msra.mxu0 %v808
    %1601 = vmatpush.msra.mxu0 %v805
    %1602 = vmatpush.msra.mxu0 %v802
    %1603 = vmatpush.msra.mxu0 %v799
    %1604 = vmatpush.msra.mxu0 %v796
    %1605 = vmatmul.f32.gmra.mxu0 %v1555
    %v1606 = vpop.f32.mrf.mxu0
    %v1607 = vadd.f32 0.0, %v1606
    %1608 = vmatmul.f32.gmra.mxu0 %v1558
    %v1609 = vpop.f32.mrf.mxu0
    %v1610 = vadd.f32 0.0, %v1609
    %1611 = vmatmul.f32.gmra.mxu0 %v1561
    %v1612 = vpop.f32.mrf.mxu0
    %v1613 = vadd.f32 0.0, %v1612
    %1614 = vdwg.mxu0
    %1615 = vmatpush.msra.mxu0 0.0
    %1616 = vmatpush.msra.mxu0 0.0
    %1617 = vmatpush.msra.mxu0 0.0
    %1618 = vmatpush.msra.mxu0 0.0
    %1619 = vmatpush.msra.mxu0 0.0
    %1620 = vmatpush.msra.mxu0 0.0
    %1621 = vmatpush.msra.mxu0 0.0
    %1622 = vmatpush.msra.mxu0 0.0
    %1623 = vmatpush.msra.mxu0 0.0
    %1624 = vmatpush.msra.mxu0 0.0
    %1625 = vmatpush.msra.mxu0 %v879
    %1626 = vmatpush.msra.mxu0 %v809
    %1627 = vmatpush.msra.mxu0 %v806
    %1628 = vmatpush.msra.mxu0 %v803
    %1629 = vmatpush.msra.mxu0 %v800
    %1630 = vmatpush.msra.mxu0 %v797
    %1631 = vmatmul.f32.gmra.mxu0 %v1555
    %v1632 = vpop.f32.mrf.mxu0
    %v1633 = vadd.f32 0.0, %v1632
    %1634 = vmatmul.f32.gmra.mxu0 %v1558
    %v1635 = vpop.f32.mrf.mxu0
    %v1636 = vadd.f32 0.0, %v1635
    %1637 = vmatmul.f32.gmra.mxu0 %v1561
    %v1638 = vpop.f32.mrf.mxu0
    %v1639 = vadd.f32 0.0, %v1638
    %1640 = vdwg.mxu0
    %v1642 = vsel %vm959, %v1633, 0
    %v1645 = vsel %vm959, %v1636, 0
    %v1648 = vsel %vm959, %v1639, 0
    %1650 = vmatpush.msra.mxu0 %v1525
    %1651 = vmatpush.msra.mxu0 %v1524
    %1652 = vmatpush.msra.mxu0 %v1523
    %1653 = vmatpush.msra.mxu0 %v1522
    %1654 = vmatpush.msra.mxu0 %v1521
    %1655 = vmatpush.msra.mxu0 %v1520
    %1656 = vmatpush.msra.mxu0 %v1519
    %1657 = vmatpush.msra.mxu0 %v1518
    %1658 = vmatpush.msra.mxu0 %v1517
    %1659 = vmatpush.msra.mxu0 %v1516
    %1660 = vmatpush.msra.mxu0 %v1515
    %1661 = vmatpush.msra.mxu0 %v1514
    %1662 = vmatpush.msra.mxu0 %v1513
    %1663 = vmatpush.msra.mxu0 %v1512
    %1664 = vmatpush.msra.mxu0 %v1511
    %1665 = vmatpush.msra.mxu0 %v1510
    %1666 = vmatmul.f32.gmra.mxu0 %v1581
    %v1667 = vpop.f32.mrf.mxu0
    %v1668 = vadd.f32 0.0, %v1667
    %1669 = vmatmul.f32.gmra.mxu0 %v1584
    %v1670 = vpop.f32.mrf.mxu0
    %v1671 = vadd.f32 0.0, %v1670
    %1672 = vmatmul.f32.gmra.mxu0 %v1587
    %v1673 = vpop.f32.mrf.mxu0
    %v1674 = vadd.f32 0.0, %v1673
    %1675 = vdwg.mxu0
    %1676 = vmatpush.msra.mxu0 %v1541
    %1677 = vmatpush.msra.mxu0 %v1540
    %1678 = vmatpush.msra.mxu0 %v1539
    %1679 = vmatpush.msra.mxu0 %v1538
    %1680 = vmatpush.msra.mxu0 %v1537
    %1681 = vmatpush.msra.mxu0 %v1536
    %1682 = vmatpush.msra.mxu0 %v1535
    %1683 = vmatpush.msra.mxu0 %v1534
    %1684 = vmatpush.msra.mxu0 %v1533
    %1685 = vmatpush.msra.mxu0 %v1532
    %1686 = vmatpush.msra.mxu0 %v1531
    %1687 = vmatpush.msra.mxu0 %v1530
    %1688 = vmatpush.msra.mxu0 %v1529
    %1689 = vmatpush.msra.mxu0 %v1528
    %1690 = vmatpush.msra.mxu0 %v1527
    %1691 = vmatpush.msra.mxu0 %v1526
    %1692 = vmatmul.f32.gmra.mxu0 %v1607
    %v1693 = vpop.f32.mrf.mxu0
    %v1694 = vadd.f32 %v1668, %v1693
    %1695 = vmatmul.f32.gmra.mxu0 %v1610
    %v1696 = vpop.f32.mrf.mxu0
    %v1697 = vadd.f32 %v1671, %v1696
    %1698 = vmatmul.f32.gmra.mxu0 %v1613
    %v1699 = vpop.f32.mrf.mxu0
    %v1700 = vadd.f32 %v1674, %v1699
    %1701 = vdwg.mxu0
    %1702 = vmatpush.msra.mxu0 0.0
    %1703 = vmatpush.msra.mxu0 0.0
    %1704 = vmatpush.msra.mxu0 0.0
    %1705 = vmatpush.msra.mxu0 0.0
    %1706 = vmatpush.msra.mxu0 %v1553
    %1707 = vmatpush.msra.mxu0 %v1552
    %1708 = vmatpush.msra.mxu0 %v1551
    %1709 = vmatpush.msra.mxu0 %v1550
    %1710 = vmatpush.msra.mxu0 %v1549
    %1711 = vmatpush.msra.mxu0 %v1548
    %1712 = vmatpush.msra.mxu0 %v1547
    %1713 = vmatpush.msra.mxu0 %v1546
    %1714 = vmatpush.msra.mxu0 %v1545
    %1715 = vmatpush.msra.mxu0 %v1544
    %1716 = vmatpush.msra.mxu0 %v1543
    %1717 = vmatpush.msra.mxu0 %v1542
    %1718 = vmatmul.f32.gmra.mxu0 %v1642
    %v1719 = vpop.f32.mrf.mxu0
    %v1720 = vadd.f32 %v1694, %v1719
    %1721 = vmatmul.f32.gmra.mxu0 %v1645
    %v1722 = vpop.f32.mrf.mxu0
    %v1723 = vadd.f32 %v1697, %v1722
    %1724 = vmatmul.f32.gmra.mxu0 %v1648
    %v1725 = vpop.f32.mrf.mxu0
    %v1726 = vadd.f32 %v1700, %v1725
    %1727 = vdwg.mxu0
    %v1728 = vadd.f32 %v1502, %v1720
    %v1729 = vadd.f32 %v1503, %v1723
    %v1730 = vadd.f32 %v1504, %v1726
    %v1731 = vmax.f32 %v1728, 0.0
    %v1732 = vmax.f32 %v1729, 0.0
    %v1733 = vmax.f32 %v1730, 0.0
    %v1734 = vld [vmem:[%s23] sm:$0x1]
    %v1735 = vld [vmem:[%s19] sm:$0xff]
    %v1736 = vld [vmem:[%s21] sm:$0xff]
    %v1737 = vld [vmem:[%s21 + $0x8] sm:$0xff]
    %v1738 = vld [vmem:[%s21 + $0x10] sm:$0xff]
    %v1739 = vld [vmem:[%s21 + $0x18] sm:$0xff]
    %v1740 = vld [vmem:[%s21 + $0x20] sm:$0xff]
    %v1741 = vld [vmem:[%s21 + $0x28] sm:$0xff]
    %v1742 = vld [vmem:[%s21 + $0x30] sm:$0xff]
    %v1743 = vld [vmem:[%s21 + $0x38] sm:$0xff]
    %v1744 = vld [vmem:[%s21 + $0x40] sm:$0xff]
    %v1745 = vld [vmem:[%s21 + $0x48] sm:$0xff]
    %vm1746 = vcmask 162816
    %v1748 = vsel %vm1746, %v1735, 0
    %v1751 = vsel %vm871, %v1733, 0
    %1753 = vmatpush.msra.mxu0 0.0
    %1754 = vmatpush.msra.mxu0 0.0
    %1755 = vmatpush.msra.mxu0 0.0
    %1756 = vmatpush.msra.mxu0 0.0
    %1757 = vmatpush.msra.mxu0 0.0
    %1758 = vmatpush.msra.mxu0 0.0
    %1759 = vmatpush.msra.mxu0 0.0
    %1760 = vmatpush.msra.mxu0 0.0
    %1761 = vmatpush.msra.mxu0 0.0
    %1762 = vmatpush.msra.mxu0 0.0
    %1763 = vmatpush.msra.mxu0 0.0
    %1764 = vmatpush.msra.mxu0 0.0
    %1765 = vmatpush.msra.mxu0 0.0
    %1766 = vmatpush.msra.mxu0 %v1751
    %1767 = vmatpush.msra.mxu0 %v1732
    %1768 = vmatpush.msra.mxu0 %v1731
    %1769 = vmatmul.f32.gmra.mxu0 %v1748
    %v1770 = vpop.f32.mrf.mxu0
    %v1771 = vadd.f32 0.0, %v1770
    %1772 = vdwg.mxu0
    %vm1773 = vcmask 654336
    %v1775 = vsel %vm1773, %v1771, 0
    %1777 = vmatpush.msra.mxu0 0.0
    %1778 = vmatpush.msra.mxu0 0.0
    %1779 = vmatpush.msra.mxu0 0.0
    %1780 = vmatpush.msra.mxu0 0.0
    %1781 = vmatpush.msra.mxu0 0.0
    %1782 = vmatpush.msra.mxu0 0.0
    %1783 = vmatpush.msra.mxu0 %v1745
    %1784 = vmatpush.msra.mxu0 %v1744
    %1785 = vmatpush.msra.mxu0 %v1743
    %1786 = vmatpush.msra.mxu0 %v1742
    %1787 = vmatpush.msra.mxu0 %v1741
    %1788 = vmatpush.msra.mxu0 %v1740
    %1789 = vmatpush.msra.mxu0 %v1739
    %1790 = vmatpush.msra.mxu0 %v1738
    %1791 = vmatpush.msra.mxu0 %v1737
    %1792 = vmatpush.msra.mxu0 %v1736
    %1793 = vmatmul.f32.gmra.mxu0 %v1775
    %v1794 = vpop.f32.mrf.mxu0
    %v1795 = vadd.f32 0.0, %v1794
    %1796 = vdwg.mxu0
    %v1798 = vperm.slane %v1734, 0
    %v1800 = vadd.f32 %v1798, %v1795
    %s1801 = scalar_lea.vmem %s19, 8
    %v1802 = vld [vmem:[%s1801] sm:$0xff]
    %s1803 = scalar_lea.vmem %s21, 80
    %v1804 = vld [vmem:[%s1803] sm:$0xff]
    %v1805 = vld [vmem:[%s1803 + $0x8] sm:$0xff]
    %v1806 = vld [vmem:[%s1803 + $0x10] sm:$0xff]
    %v1807 = vld [vmem:[%s1803 + $0x18] sm:$0xff]
    %v1808 = vld [vmem:[%s1803 + $0x20] sm:$0xff]
    %v1809 = vld [vmem:[%s1803 + $0x28] sm:$0xff]
    %v1810 = vld [vmem:[%s1803 + $0x30] sm:$0xff]
    %v1811 = vld [vmem:[%s1803 + $0x38] sm:$0xff]
    %v1812 = vld [vmem:[%s1803 + $0x40] sm:$0xff]
    %v1813 = vld [vmem:[%s1803 + $0x48] sm:$0xff]
    %v1815 = vsel %vm1746, %v1802, 0
    %1817 = vmatpush.msra.mxu0 0.0
    %1818 = vmatpush.msra.mxu0 0.0
    %1819 = vmatpush.msra.mxu0 0.0
    %1820 = vmatpush.msra.mxu0 0.0
    %1821 = vmatpush.msra.mxu0 0.0
    %1822 = vmatpush.msra.mxu0 0.0
    %1823 = vmatpush.msra.mxu0 0.0
    %1824 = vmatpush.msra.mxu0 0.0
    %1825 = vmatpush.msra.mxu0 0.0
    %1826 = vmatpush.msra.mxu0 0.0
    %1827 = vmatpush.msra.mxu0 0.0
    %1828 = vmatpush.msra.mxu0 0.0
    %1829 = vmatpush.msra.mxu0 0.0
    %1830 = vmatpush.msra.mxu0 %v1751
    %1831 = vmatpush.msra.mxu0 %v1732
    %1832 = vmatpush.msra.mxu0 %v1731
    %1833 = vmatmul.f32.gmra.mxu0 %v1815
    %v1834 = vpop.f32.mrf.mxu0
    %v1835 = vadd.f32 0.0, %v1834
    %1836 = vdwg.mxu0
    %v1838 = vsel %vm1773, %v1835, 0
    %1840 = vmatpush.msra.mxu0 0.0
    %1841 = vmatpush.msra.mxu0 0.0
    %1842 = vmatpush.msra.mxu0 0.0
    %1843 = vmatpush.msra.mxu0 0.0
    %1844 = vmatpush.msra.mxu0 0.0
    %1845 = vmatpush.msra.mxu0 0.0
    %1846 = vmatpush.msra.mxu0 %v1813
    %1847 = vmatpush.msra.mxu0 %v1812
    %1848 = vmatpush.msra.mxu0 %v1811
    %1849 = vmatpush.msra.mxu0 %v1810
    %1850 = vmatpush.msra.mxu0 %v1809
    %1851 = vmatpush.msra.mxu0 %v1808
    %1852 = vmatpush.msra.mxu0 %v1807
    %1853 = vmatpush.msra.mxu0 %v1806
    %1854 = vmatpush.msra.mxu0 %v1805
    %1855 = vmatpush.msra.mxu0 %v1804
    %1856 = vmatmul.f32.gmra.mxu0 %v1838
    %v1857 = vpop.f32.mrf.mxu0
    %v1858 = vadd.f32 0.0, %v1857
    %1859 = vdwg.mxu0
    %v1860 = vadd.f32 %v1800, %v1858
    %s1861 = scalar_lea.vmem %s19, 16
    %v1862 = vld [vmem:[%s1861] sm:$0xff]
    %s1863 = scalar_lea.vmem %s21, 160
    %v1864 = vld [vmem:[%s1863] sm:$0xff]
    %v1865 = vld [vmem:[%s1863 + $0x8] sm:$0xff]
    %v1866 = vld [vmem:[%s1863 + $0x10] sm:$0xff]
    %v1867 = vld [vmem:[%s1863 + $0x18] sm:$0xff]
    %v1868 = vld [vmem:[%s1863 + $0x20] sm:$0xff]
    %v1869 = vld [vmem:[%s1863 + $0x28] sm:$0xff]
    %v1870 = vld [vmem:[%s1863 + $0x30] sm:$0xff]
    %v1871 = vld [vmem:[%s1863 + $0x38] sm:$0xff]
    %v1872 = vld [vmem:[%s1863 + $0x40] sm:$0xff]
    %v1873 = vld [vmem:[%s1863 + $0x48] sm:$0xff]
    %v1875 = vsel %vm1746, %v1862, 0
    %1877 = vmatpush.msra.mxu0 0.0
    %1878 = vmatpush.msra.mxu0 0.0
    %1879 = vmatpush.msra.mxu0 0.0
    %1880 = vmatpush.msra.mxu0 0.0
    %1881 = vmatpush.msra.mxu0 0.0
    %1882 = vmatpush.msra.mxu0 0.0
    %1883 = vmatpush.msra.mxu0 0.0
    %1884 = vmatpush.msra.mxu0 0.0
    %1885 = vmatpush.msra.mxu0 0.0
    %1886 = vmatpush.msra.mxu0 0.0
    %1887 = vmatpush.msra.mxu0 0.0
    %1888 = vmatpush.msra.mxu0 0.0
    %1889 = vmatpush.msra.mxu0 0.0
    %1890 = vmatpush.msra.mxu0 %v1751
    %1891 = vmatpush.msra.mxu0 %v1732
    %1892 = vmatpush.msra.mxu0 %v1731
    %1893 = vmatmul.f32.gmra.mxu0 %v1875
    %v1894 = vpop.f32.mrf.mxu0
    %v1895 = vadd.f32 0.0, %v1894
    %1896 = vdwg.mxu0
    %v1898 = vsel %vm1773, %v1895, 0
    %1900 = vmatpush.msra.mxu0 0.0
    %1901 = vmatpush.msra.mxu0 0.0
    %1902 = vmatpush.msra.mxu0 0.0
    %1903 = vmatpush.msra.mxu0 0.0
    %1904 = vmatpush.msra.mxu0 0.0
    %1905 = vmatpush.msra.mxu0 0.0
    %1906 = vmatpush.msra.mxu0 %v1873
    %1907 = vmatpush.msra.mxu0 %v1872
    %1908 = vmatpush.msra.mxu0 %v1871
    %1909 = vmatpush.msra.mxu0 %v1870
    %1910 = vmatpush.msra.mxu0 %v1869
    %1911 = vmatpush.msra.mxu0 %v1868
    %1912 = vmatpush.msra.mxu0 %v1867
    %1913 = vmatpush.msra.mxu0 %v1866
    %1914 = vmatpush.msra.mxu0 %v1865
    %1915 = vmatpush.msra.mxu0 %v1864
    %1916 = vmatmul.f32.gmra.mxu0 %v1898
    %v1917 = vpop.f32.mrf.mxu0
    %v1918 = vadd.f32 0.0, %v1917
    %1919 = vdwg.mxu0
    %v1920 = vadd.f32 %v1860, %v1918
    %s1921 = scalar_lea.vmem %s19, 24
    %v1922 = vld [vmem:[%s1921] sm:$0xff]
    %s1923 = scalar_lea.vmem %s21, 240
    %v1924 = vld [vmem:[%s1923] sm:$0xff]
    %v1925 = vld [vmem:[%s1923 + $0x8] sm:$0xff]
    %v1926 = vld [vmem:[%s1923 + $0x10] sm:$0xff]
    %v1927 = vld [vmem:[%s1923 + $0x18] sm:$0xff]
    %v1928 = vld [vmem:[%s1923 + $0x20] sm:$0xff]
    %v1929 = vld [vmem:[%s1923 + $0x28] sm:$0xff]
    %v1930 = vld [vmem:[%s1923 + $0x30] sm:$0xff]
    %v1931 = vld [vmem:[%s1923 + $0x38] sm:$0xff]
    %v1932 = vld [vmem:[%s1923 + $0x40] sm:$0xff]
    %v1933 = vld [vmem:[%s1923 + $0x48] sm:$0xff]
    %v1935 = vsel %vm1746, %v1922, 0
    %1937 = vmatpush.msra.mxu0 0.0
    %1938 = vmatpush.msra.mxu0 0.0
    %1939 = vmatpush.msra.mxu0 0.0
    %1940 = vmatpush.msra.mxu0 0.0
    %1941 = vmatpush.msra.mxu0 0.0
    %1942 = vmatpush.msra.mxu0 0.0
    %1943 = vmatpush.msra.mxu0 0.0
    %1944 = vmatpush.msra.mxu0 0.0
    %1945 = vmatpush.msra.mxu0 0.0
    %1946 = vmatpush.msra.mxu0 0.0
    %1947 = vmatpush.msra.mxu0 0.0
    %1948 = vmatpush.msra.mxu0 0.0
    %1949 = vmatpush.msra.mxu0 0.0
    %1950 = vmatpush.msra.mxu0 %v1751
    %1951 = vmatpush.msra.mxu0 %v1732
    %1952 = vmatpush.msra.mxu0 %v1731
    %1953 = vmatmul.f32.gmra.mxu0 %v1935
    %v1954 = vpop.f32.mrf.mxu0
    %v1955 = vadd.f32 0.0, %v1954
    %1956 = vdwg.mxu0
    %v1958 = vsel %vm1773, %v1955, 0
    %1960 = vmatpush.msra.mxu0 0.0
    %1961 = vmatpush.msra.mxu0 0.0
    %1962 = vmatpush.msra.mxu0 0.0
    %1963 = vmatpush.msra.mxu0 0.0
    %1964 = vmatpush.msra.mxu0 0.0
    %1965 = vmatpush.msra.mxu0 0.0
    %1966 = vmatpush.msra.mxu0 %v1933
    %1967 = vmatpush.msra.mxu0 %v1932
    %1968 = vmatpush.msra.mxu0 %v1931
    %1969 = vmatpush.msra.mxu0 %v1930
    %1970 = vmatpush.msra.mxu0 %v1929
    %1971 = vmatpush.msra.mxu0 %v1928
    %1972 = vmatpush.msra.mxu0 %v1927
    %1973 = vmatpush.msra.mxu0 %v1926
    %1974 = vmatpush.msra.mxu0 %v1925
    %1975 = vmatpush.msra.mxu0 %v1924
    %1976 = vmatmul.f32.gmra.mxu0 %v1958
    %v1977 = vpop.f32.mrf.mxu0
    %v1978 = vadd.f32 0.0, %v1977
    %1979 = vdwg.mxu0
    %v1980 = vadd.f32 %v1920, %v1978
    %v1981 = vmax.f32 %v1980, 0.0
    %v1982 = vld [vmem:[%s29] sm:$0x1]
    %v1983 = vld [vmem:[%s25] sm:$0x3]
    %v1984 = vld [vmem:[%s27] sm:$0xff]
    %v1985 = vld [vmem:[%s27 + $0x8] sm:$0xff]
    %vm1986 = vcmask 64512
    %v1988 = vsel %vm1986, %v1983, 0
    %1990 = vmatpush.msra.mxu0 0.0
    %1991 = vmatpush.msra.mxu0 0.0
    %1992 = vmatpush.msra.mxu0 0.0
    %1993 = vmatpush.msra.mxu0 0.0
    %1994 = vmatpush.msra.mxu0 0.0
    %1995 = vmatpush.msra.mxu0 0.0
    %1996 = vmatpush.msra.mxu0 0.0
    %1997 = vmatpush.msra.mxu0 0.0
    %1998 = vmatpush.msra.mxu0 0.0
    %1999 = vmatpush.msra.mxu0 0.0
    %2000 = vmatpush.msra.mxu0 0.0
    %2001 = vmatpush.msra.mxu0 0.0
    %2002 = vmatpush.msra.mxu0 0.0
    %2003 = vmatpush.msra.mxu0 0.0
    %2004 = vmatpush.msra.mxu0 0.0
    %2005 = vmatpush.msra.mxu0 %v1981
    %2006 = vmatmul.f32.gmra.mxu0 %v1988
    %v2007 = vpop.f32.mrf.mxu0
    %v2008 = vadd.f32 0.0, %v2007
    %2009 = vdwg.mxu0
    %vm2010 = vcmask 130048
    %v2012 = vsel %vm2010, %v2008, 0
    %2014 = vmatpush.msra.mxu0 0.0
    %2015 = vmatpush.msra.mxu0 0.0
    %2016 = vmatpush.msra.mxu0 0.0
    %2017 = vmatpush.msra.mxu0 0.0
    %2018 = vmatpush.msra.mxu0 0.0
    %2019 = vmatpush.msra.mxu0 0.0
    %2020 = vmatpush.msra.mxu0 0.0
    %2021 = vmatpush.msra.mxu0 0.0
    %2022 = vmatpush.msra.mxu0 0.0
    %2023 = vmatpush.msra.mxu0 0.0
    %2024 = vmatpush.msra.mxu0 0.0
    %2025 = vmatpush.msra.mxu0 0.0
    %2026 = vmatpush.msra.mxu0 0.0
    %2027 = vmatpush.msra.mxu0 0.0
    %2028 = vmatpush.msra.mxu0 %v1985
    %2029 = vmatpush.msra.mxu0 %v1984
    %2030 = vmatmul.f32.gmra.mxu0 %v2012
    %v2031 = vpop.f32.mrf.mxu0
    %v2032 = vadd.f32 0.0, %v2031
    %2033 = vdwg.mxu0
    %v2035 = vperm.slane %v1982, 0
    %v2037 = vadd.f32 %v2035, %v2032
    %s2038 = scalar_lea.vmem %s25, 2
    %v2039 = vld [vmem:[%s2038] sm:$0x3]
    %s2040 = scalar_lea.vmem %s27, 16
    %v2041 = vld [vmem:[%s2040] sm:$0xff]
    %v2042 = vld [vmem:[%s2040 + $0x8] sm:$0xff]
    %v2044 = vsel %vm1986, %v2039, 0
    %2046 = vmatpush.msra.mxu0 0.0
    %2047 = vmatpush.msra.mxu0 0.0
    %2048 = vmatpush.msra.mxu0 0.0
    %2049 = vmatpush.msra.mxu0 0.0
    %2050 = vmatpush.msra.mxu0 0.0
    %2051 = vmatpush.msra.mxu0 0.0
    %2052 = vmatpush.msra.mxu0 0.0
    %2053 = vmatpush.msra.mxu0 0.0
    %2054 = vmatpush.msra.mxu0 0.0
    %2055 = vmatpush.msra.mxu0 0.0
    %2056 = vmatpush.msra.mxu0 0.0
    %2057 = vmatpush.msra.mxu0 0.0
    %2058 = vmatpush.msra.mxu0 0.0
    %2059 = vmatpush.msra.mxu0 0.0
    %2060 = vmatpush.msra.mxu0 0.0
    %2061 = vmatpush.msra.mxu0 %v1981
    %2062 = vmatmul.f32.gmra.mxu0 %v2044
    %v2063 = vpop.f32.mrf.mxu0
    %v2064 = vadd.f32 0.0, %v2063
    %2065 = vdwg.mxu0
    %v2067 = vsel %vm2010, %v2064, 0
    %2069 = vmatpush.msra.mxu0 0.0
    %2070 = vmatpush.msra.mxu0 0.0
    %2071 = vmatpush.msra.mxu0 0.0
    %2072 = vmatpush.msra.mxu0 0.0
    %2073 = vmatpush.msra.mxu0 0.0
    %2074 = vmatpush.msra.mxu0 0.0
    %2075 = vmatpush.msra.mxu0 0.0
    %2076 = vmatpush.msra.mxu0 0.0
    %2077 = vmatpush.msra.mxu0 0.0
    %2078 = vmatpush.msra.mxu0 0.0
    %2079 = vmatpush.msra.mxu0 0.0
    %2080 = vmatpush.msra.mxu0 0.0
    %2081 = vmatpush.msra.mxu0 0.0
    %2082 = vmatpush.msra.mxu0 0.0
    %2083 = vmatpush.msra.mxu0 %v2042
    %2084 = vmatpush.msra.mxu0 %v2041
    %2085 = vmatmul.f32.gmra.mxu0 %v2067
    %v2086 = vpop.f32.mrf.mxu0
    %v2087 = vadd.f32 0.0, %v2086
    %2088 = vdwg.mxu0
    %v2089 = vadd.f32 %v2037, %v2087
    %s2090 = scalar_lea.vmem %s25, 4
    %v2091 = vld [vmem:[%s2090] sm:$0x3]
    %s2092 = scalar_lea.vmem %s27, 32
    %v2093 = vld [vmem:[%s2092] sm:$0xff]
    %v2094 = vld [vmem:[%s2092 + $0x8] sm:$0xff]
    %v2096 = vsel %vm1986, %v2091, 0
    %2098 = vmatpush.msra.mxu0 0.0
    %2099 = vmatpush.msra.mxu0 0.0
    %2100 = vmatpush.msra.mxu0 0.0
    %2101 = vmatpush.msra.mxu0 0.0
    %2102 = vmatpush.msra.mxu0 0.0
    %2103 = vmatpush.msra.mxu0 0.0
    %2104 = vmatpush.msra.mxu0 0.0
    %2105 = vmatpush.msra.mxu0 0.0
    %2106 = vmatpush.msra.mxu0 0.0
    %2107 = vmatpush.msra.mxu0 0.0
    %2108 = vmatpush.msra.mxu0 0.0
    %2109 = vmatpush.msra.mxu0 0.0
    %2110 = vmatpush.msra.mxu0 0.0
    %2111 = vmatpush.msra.mxu0 0.0
    %2112 = vmatpush.msra.mxu0 0.0
    %2113 = vmatpush.msra.mxu0 %v1981
    %2114 = vmatmul.f32.gmra.mxu0 %v2096
    %v2115 = vpop.f32.mrf.mxu0
    %v2116 = vadd.f32 0.0, %v2115
    %2117 = vdwg.mxu0
    %v2119 = vsel %vm2010, %v2116, 0
    %2121 = vmatpush.msra.mxu0 0.0
    %2122 = vmatpush.msra.mxu0 0.0
    %2123 = vmatpush.msra.mxu0 0.0
    %2124 = vmatpush.msra.mxu0 0.0
    %2125 = vmatpush.msra.mxu0 0.0
    %2126 = vmatpush.msra.mxu0 0.0
    %2127 = vmatpush.msra.mxu0 0.0
    %2128 = vmatpush.msra.mxu0 0.0
    %2129 = vmatpush.msra.mxu0 0.0
    %2130 = vmatpush.msra.mxu0 0.0
    %2131 = vmatpush.msra.mxu0 0.0
    %2132 = vmatpush.msra.mxu0 0.0
    %2133 = vmatpush.msra.mxu0 0.0
    %2134 = vmatpush.msra.mxu0 0.0
    %2135 = vmatpush.msra.mxu0 %v2094
    %2136 = vmatpush.msra.mxu0 %v2093
    %2137 = vmatmul.f32.gmra.mxu0 %v2119
    %v2138 = vpop.f32.mrf.mxu0
    %v2139 = vadd.f32 0.0, %v2138
    %2140 = vdwg.mxu0
    %v2141 = vadd.f32 %v2089, %v2139
    %s2142 = scalar_lea.vmem %s25, 6
    %v2143 = vld [vmem:[%s2142] sm:$0x3]
    %s2144 = scalar_lea.vmem %s27, 48
    %v2145 = vld [vmem:[%s2144] sm:$0xff]
    %v2146 = vld [vmem:[%s2144 + $0x8] sm:$0xff]
    %v2148 = vsel %vm1986, %v2143, 0
    %2150 = vmatpush.msra.mxu0 0.0
    %2151 = vmatpush.msra.mxu0 0.0
    %2152 = vmatpush.msra.mxu0 0.0
    %2153 = vmatpush.msra.mxu0 0.0
    %2154 = vmatpush.msra.mxu0 0.0
    %2155 = vmatpush.msra.mxu0 0.0
    %2156 = vmatpush.msra.mxu0 0.0
    %2157 = vmatpush.msra.mxu0 0.0
    %2158 = vmatpush.msra.mxu0 0.0
    %2159 = vmatpush.msra.mxu0 0.0
    %2160 = vmatpush.msra.mxu0 0.0
    %2161 = vmatpush.msra.mxu0 0.0
    %2162 = vmatpush.msra.mxu0 0.0
    %2163 = vmatpush.msra.mxu0 0.0
    %2164 = vmatpush.msra.mxu0 0.0
    %2165 = vmatpush.msra.mxu0 %v1981
    %2166 = vmatmul.f32.gmra.mxu0 %v2148
    %v2167 = vpop.f32.mrf.mxu0
    %v2168 = vadd.f32 0.0, %v2167
    %2169 = vdwg.mxu0
    %v2171 = vsel %vm2010, %v2168, 0
    %2173 = vmatpush.msra.mxu0 0.0
    %2174 = vmatpush.msra.mxu0 0.0
    %2175 = vmatpush.msra.mxu0 0.0
    %2176 = vmatpush.msra.mxu0 0.0
    %2177 = vmatpush.msra.mxu0 0.0
    %2178 = vmatpush.msra.mxu0 0.0
    %2179 = vmatpush.msra.mxu0 0.0
    %2180 = vmatpush.msra.mxu0 0.0
    %2181 = vmatpush.msra.mxu0 0.0
    %2182 = vmatpush.msra.mxu0 0.0
    %2183 = vmatpush.msra.mxu0 0.0
    %2184 = vmatpush.msra.mxu0 0.0
    %2185 = vmatpush.msra.mxu0 0.0
    %2186 = vmatpush.msra.mxu0 0.0
    %2187 = vmatpush.msra.mxu0 %v2146
    %2188 = vmatpush.msra.mxu0 %v2145
    %2189 = vmatmul.f32.gmra.mxu0 %v2171
    %v2190 = vpop.f32.mrf.mxu0
    %v2191 = vadd.f32 0.0, %v2190
    %2192 = vdwg.mxu0
    %v2193 = vadd.f32 %v2141, %v2191
    %vm2194 = vcmask 58368
    %2195 = vst.msk [vmem:[#allocation4] sm:$0x3] %vm2194, %v2193
    %2197 = vrot.lane.b32.xlu0 %v2193, 120
    %v2198 = vpop.permute.xlu0 %2197
    %2200 = vst.msk [vmem:[#allocation6] sm:$0x3] %vm2194, %v2198
    %v2201 = vld [vmem:[%s5] sm:$0x3]
    %v2202 = vmul.f32 %v2193, 0.5
    %v2203 = vmul.f32 %v2202, 1.442695
    %v2204 = vpow.pop %v2203
    %2206 = vrot.lane.b32.xlu0 %v2204, 120
    %v2207 = vpop.permute.xlu0 %2206
    %v2209 = vmul.f32 %v2201, %v2207
    %v2210 = vadd.f32 %v2209, %v2193
    %v2211 = vld [vmem:[%s3] sm:$0x3]
    %2213 = vrot.lane.b32.xlu0 %v2211, 8
    %v2214 = vpop.permute.xlu0 %2213
    %v2216 = vsel %vm1986, %v2210, %v2214
    %v2217 = vld [vmem:[%s35] sm:$0xff]
    %v2218 = vld [vmem:[%s31] sm:$0xff]
    %v2219 = vld [vmem:[%s33] sm:$0xff]
    %v2220 = vld [vmem:[%s33 + $0x8] sm:$0x1f]
    %vm2221 = vcmask 105472
    %v2223 = vsel %vm2221, %v2216, 0
    %vm2225 = vcmask 1044480
    %v2227 = vsel %vm2225, %v2220, 0
    %2229 = vmatpush.msra.mxu0 0.0
    %2230 = vmatpush.msra.mxu0 0.0
    %2231 = vmatpush.msra.mxu0 0.0
    %2232 = vmatpush.msra.mxu0 0.0
    %2233 = vmatpush.msra.mxu0 0.0
    %2234 = vmatpush.msra.mxu0 0.0
    %2235 = vmatpush.msra.mxu0 0.0
    %2236 = vmatpush.msra.mxu0 0.0
    %2237 = vmatpush.msra.mxu0 0.0
    %2238 = vmatpush.msra.mxu0 0.0
    %2239 = vmatpush.msra.mxu0 0.0
    %2240 = vmatpush.msra.mxu0 0.0
    %2241 = vmatpush.msra.mxu0 0.0
    %2242 = vmatpush.msra.mxu0 0.0
    %2243 = vmatpush.msra.mxu0 %v2227
    %2244 = vmatpush.msra.mxu0 %v2219
    %2245 = vmatmul.f32.gmra.mxu0 %v2223
    %v2246 = vpop.f32.mrf.mxu0
    %v2247 = vadd.f32 0.0, %v2246
    %2248 = vdwg.mxu0
    %vm2249 = vcmask 15360
    %v2251 = vsel %vm2249, %v2218, 0
    %vm2253 = vcmask 1041408
    %v2255 = vsel %vm2253, %v2247, 0
    %2257 = vmatpush.msra.mxu0 0.0
    %2258 = vmatpush.msra.mxu0 0.0
    %2259 = vmatpush.msra.mxu0 0.0
    %2260 = vmatpush.msra.mxu0 0.0
    %2261 = vmatpush.msra.mxu0 0.0
    %2262 = vmatpush.msra.mxu0 0.0
    %2263 = vmatpush.msra.mxu0 0.0
    %2264 = vmatpush.msra.mxu0 0.0
    %2265 = vmatpush.msra.mxu0 0.0
    %2266 = vmatpush.msra.mxu0 0.0
    %2267 = vmatpush.msra.mxu0 0.0
    %2268 = vmatpush.msra.mxu0 0.0
    %2269 = vmatpush.msra.mxu0 0.0
    %2270 = vmatpush.msra.mxu0 0.0
    %2271 = vmatpush.msra.mxu0 0.0
    %2272 = vmatpush.msra.mxu0 %v2255
    %2273 = vmatmul.f32.gmra.mxu0 %v2251
    %v2274 = vpop.f32.mrf.mxu0
    %v2275 = vadd.f32 0.0, %v2274
    %2276 = vdwg.mxu0
    %v2277 = vadd.f32 %v2217, %v2275
    %s2278 = scalar_lea.vmem %s31, 8
    %v2279 = vld [vmem:[%s2278] sm:$0xff]
    %s2280 = scalar_lea.vmem %s33, 16
    %v2281 = vld [vmem:[%s2280] sm:$0xff]
    %v2282 = vld [vmem:[%s2280 + $0x8] sm:$0x1f]
    %v2284 = vsel %vm2225, %v2282, 0
    %2286 = vmatpush.msra.mxu0 0.0
    %2287 = vmatpush.msra.mxu0 0.0
    %2288 = vmatpush.msra.mxu0 0.0
    %2289 = vmatpush.msra.mxu0 0.0
    %2290 = vmatpush.msra.mxu0 0.0
    %2291 = vmatpush.msra.mxu0 0.0
    %2292 = vmatpush.msra.mxu0 0.0
    %2293 = vmatpush.msra.mxu0 0.0
    %2294 = vmatpush.msra.mxu0 0.0
    %2295 = vmatpush.msra.mxu0 0.0
    %2296 = vmatpush.msra.mxu0 0.0
    %2297 = vmatpush.msra.mxu0 0.0
    %2298 = vmatpush.msra.mxu0 0.0
    %2299 = vmatpush.msra.mxu0 0.0
    %2300 = vmatpush.msra.mxu0 %v2284
    %2301 = vmatpush.msra.mxu0 %v2281
    %2302 = vmatmul.f32.gmra.mxu0 %v2223
    %v2303 = vpop.f32.mrf.mxu0
    %v2304 = vadd.f32 0.0, %v2303
    %2305 = vdwg.mxu0
    %v2307 = vsel %vm2249, %v2279, 0
    %v2310 = vsel %vm2253, %v2304, 0
    %2312 = vmatpush.msra.mxu0 0.0
    %2313 = vmatpush.msra.mxu0 0.0
    %2314 = vmatpush.msra.mxu0 0.0
    %2315 = vmatpush.msra.mxu0 0.0
    %2316 = vmatpush.msra.mxu0 0.0
    %2317 = vmatpush.msra.mxu0 0.0
    %2318 = vmatpush.msra.mxu0 0.0
    %2319 = vmatpush.msra.mxu0 0.0
    %2320 = vmatpush.msra.mxu0 0.0
    %2321 = vmatpush.msra.mxu0 0.0
    %2322 = vmatpush.msra.mxu0 0.0
    %2323 = vmatpush.msra.mxu0 0.0
    %2324 = vmatpush.msra.mxu0 0.0
    %2325 = vmatpush.msra.mxu0 0.0
    %2326 = vmatpush.msra.mxu0 0.0
    %2327 = vmatpush.msra.mxu0 %v2310
    %2328 = vmatmul.f32.gmra.mxu0 %v2307
    %v2329 = vpop.f32.mrf.mxu0
    %v2330 = vadd.f32 0.0, %v2329
    %2331 = vdwg.mxu0
    %v2332 = vadd.f32 %v2277, %v2330
    %s2333 = scalar_lea.vmem %s31, 16
    %v2334 = vld [vmem:[%s2333] sm:$0xff]
    %s2335 = scalar_lea.vmem %s33, 32
    %v2336 = vld [vmem:[%s2335] sm:$0xff]
    %v2337 = vld [vmem:[%s2335 + $0x8] sm:$0x1f]
    %v2339 = vsel %vm2225, %v2337, 0
    %2341 = vmatpush.msra.mxu0 0.0
    %2342 = vmatpush.msra.mxu0 0.0
    %2343 = vmatpush.msra.mxu0 0.0
    %2344 = vmatpush.msra.mxu0 0.0
    %2345 = vmatpush.msra.mxu0 0.0
    %2346 = vmatpush.msra.mxu0 0.0
    %2347 = vmatpush.msra.mxu0 0.0
    %2348 = vmatpush.msra.mxu0 0.0
    %2349 = vmatpush.msra.mxu0 0.0
    %2350 = vmatpush.msra.mxu0 0.0
    %2351 = vmatpush.msra.mxu0 0.0
    %2352 = vmatpush.msra.mxu0 0.0
    %2353 = vmatpush.msra.mxu0 0.0
    %2354 = vmatpush.msra.mxu0 0.0
    %2355 = vmatpush.msra.mxu0 %v2339
    %2356 = vmatpush.msra.mxu0 %v2336
    %2357 = vmatmul.f32.gmra.mxu0 %v2223
    %v2358 = vpop.f32.mrf.mxu0
    %v2359 = vadd.f32 0.0, %v2358
    %2360 = vdwg.mxu0
    %v2362 = vsel %vm2249, %v2334, 0
    %v2365 = vsel %vm2253, %v2359, 0
    %2367 = vmatpush.msra.mxu0 0.0
    %2368 = vmatpush.msra.mxu0 0.0
    %2369 = vmatpush.msra.mxu0 0.0
    %2370 = vmatpush.msra.mxu0 0.0
    %2371 = vmatpush.msra.mxu0 0.0
    %2372 = vmatpush.msra.mxu0 0.0
    %2373 = vmatpush.msra.mxu0 0.0
    %2374 = vmatpush.msra.mxu0 0.0
    %2375 = vmatpush.msra.mxu0 0.0
    %2376 = vmatpush.msra.mxu0 0.0
    %2377 = vmatpush.msra.mxu0 0.0
    %2378 = vmatpush.msra.mxu0 0.0
    %2379 = vmatpush.msra.mxu0 0.0
    %2380 = vmatpush.msra.mxu0 0.0
    %2381 = vmatpush.msra.mxu0 0.0
    %2382 = vmatpush.msra.mxu0 %v2365
    %2383 = vmatmul.f32.gmra.mxu0 %v2362
    %v2384 = vpop.f32.mrf.mxu0
    %v2385 = vadd.f32 0.0, %v2384
    %2386 = vdwg.mxu0
    %v2387 = vadd.f32 %v2332, %v2385
    %s2388 = scalar_lea.vmem %s31, 24
    %v2389 = vld [vmem:[%s2388] sm:$0xff]
    %s2390 = scalar_lea.vmem %s33, 48
    %v2391 = vld [vmem:[%s2390] sm:$0xff]
    %v2392 = vld [vmem:[%s2390 + $0x8] sm:$0x1f]
    %v2394 = vsel %vm2225, %v2392, 0
    %2396 = vmatpush.msra.mxu0 0.0
    %2397 = vmatpush.msra.mxu0 0.0
    %2398 = vmatpush.msra.mxu0 0.0
    %2399 = vmatpush.msra.mxu0 0.0
    %2400 = vmatpush.msra.mxu0 0.0
    %2401 = vmatpush.msra.mxu0 0.0
    %2402 = vmatpush.msra.mxu0 0.0
    %2403 = vmatpush.msra.mxu0 0.0
    %2404 = vmatpush.msra.mxu0 0.0
    %2405 = vmatpush.msra.mxu0 0.0
    %2406 = vmatpush.msra.mxu0 0.0
    %2407 = vmatpush.msra.mxu0 0.0
    %2408 = vmatpush.msra.mxu0 0.0
    %2409 = vmatpush.msra.mxu0 0.0
    %2410 = vmatpush.msra.mxu0 %v2394
    %2411 = vmatpush.msra.mxu0 %v2391
    %2412 = vmatmul.f32.gmra.mxu0 %v2223
    %v2413 = vpop.f32.mrf.mxu0
    %v2414 = vadd.f32 0.0, %v2413
    %2415 = vdwg.mxu0
    %v2417 = vsel %vm2249, %v2389, 0
    %v2420 = vsel %vm2253, %v2414, 0
    %2422 = vmatpush.msra.mxu0 0.0
    %2423 = vmatpush.msra.mxu0 0.0
    %2424 = vmatpush.msra.mxu0 0.0
    %2425 = vmatpush.msra.mxu0 0.0
    %2426 = vmatpush.msra.mxu0 0.0
    %2427 = vmatpush.msra.mxu0 0.0
    %2428 = vmatpush.msra.mxu0 0.0
    %2429 = vmatpush.msra.mxu0 0.0
    %2430 = vmatpush.msra.mxu0 0.0
    %2431 = vmatpush.msra.mxu0 0.0
    %2432 = vmatpush.msra.mxu0 0.0
    %2433 = vmatpush.msra.mxu0 0.0
    %2434 = vmatpush.msra.mxu0 0.0
    %2435 = vmatpush.msra.mxu0 0.0
    %2436 = vmatpush.msra.mxu0 0.0
    %2437 = vmatpush.msra.mxu0 %v2420
    %2438 = vmatmul.f32.gmra.mxu0 %v2417
    %v2439 = vpop.f32.mrf.mxu0
    %v2440 = vadd.f32 0.0, %v2439
    %2441 = vdwg.mxu0
    %v2442 = vadd.f32 %v2387, %v2440
    %v2443 = vld [vmem:[%s41] sm:$0x1]
    %v2444 = vld [vmem:[%s37] sm:$0xff]
    %v2445 = vld [vmem:[%s37 + $0x8] sm:$0xff]
    %v2446 = vld [vmem:[%s37 + $0x10] sm:$0xf]
    %v2447 = vld [vmem:[%s39] sm:$0xff]
    %v2448 = vld [vmem:[%s39 + $0x8] sm:$0xff]
    %v2450 = vsel %vm2010, %v2442, 0
    %2452 = vmatpush.msra.mxu0 0.0
    %2453 = vmatpush.msra.mxu0 0.0
    %2454 = vmatpush.msra.mxu0 0.0
    %2455 = vmatpush.msra.mxu0 0.0
    %2456 = vmatpush.msra.mxu0 0.0
    %2457 = vmatpush.msra.mxu0 0.0
    %2458 = vmatpush.msra.mxu0 0.0
    %2459 = vmatpush.msra.mxu0 0.0
    %2460 = vmatpush.msra.mxu0 0.0
    %2461 = vmatpush.msra.mxu0 0.0
    %2462 = vmatpush.msra.mxu0 0.0
    %2463 = vmatpush.msra.mxu0 0.0
    %2464 = vmatpush.msra.mxu0 0.0
    %2465 = vmatpush.msra.mxu0 0.0
    %2466 = vmatpush.msra.mxu0 %v2448
    %2467 = vmatpush.msra.mxu0 %v2447
    %2468 = vmatmul.f32.gmra.mxu0 %v2450
    %v2469 = vpop.f32.mrf.mxu0
    %v2470 = vadd.f32 0.0, %v2469
    %2471 = vdwg.mxu0
    %v2473 = vsel %vm1986, %v2444, 0
    %v2476 = vsel %vm1986, %v2445, 0
    %v2479 = vsel %vm1986, %v2446, 0
    %2481 = vmatpush.msra.mxu0 0.0
    %2482 = vmatpush.msra.mxu0 0.0
    %2483 = vmatpush.msra.mxu0 0.0
    %2484 = vmatpush.msra.mxu0 0.0
    %2485 = vmatpush.msra.mxu0 0.0
    %2486 = vmatpush.msra.mxu0 0.0
    %2487 = vmatpush.msra.mxu0 0.0
    %2488 = vmatpush.msra.mxu0 0.0
    %2489 = vmatpush.msra.mxu0 0.0
    %2490 = vmatpush.msra.mxu0 0.0
    %2491 = vmatpush.msra.mxu0 0.0
    %2492 = vmatpush.msra.mxu0 0.0
    %2493 = vmatpush.msra.mxu0 0.0
    %2494 = vmatpush.msra.mxu0 0.0
    %2495 = vmatpush.msra.mxu0 0.0
    %2496 = vmatpush.msra.mxu0 %v2470
    %2497 = vmatmul.f32.gmra.mxu0 %v2473
    %v2498 = vpop.f32.mrf.mxu0
    %v2499 = vadd.f32 0.0, %v2498
    %2500 = vmatmul.f32.gmra.mxu0 %v2476
    %v2501 = vpop.f32.mrf.mxu0
    %v2502 = vadd.f32 0.0, %v2501
    %2503 = vmatmul.f32.gmra.mxu0 %v2479
    %v2504 = vpop.f32.mrf.mxu0
    %v2505 = vadd.f32 0.0, %v2504
    %2506 = vdwg.mxu0
    %v2508 = vperm.slane %v2443, 0
    %v2510 = vadd.f32 %v2508, %v2499
    %v2511 = vadd.f32 %v2508, %v2502
    %v2512 = vadd.f32 %v2508, %v2505
    %s2513 = scalar_lea.vmem %s37, 24
    %v2514 = vld [vmem:[%s2513] sm:$0xff]
    %v2515 = vld [vmem:[%s2513 + $0x8] sm:$0xff]
    %v2516 = vld [vmem:[%s2513 + $0x10] sm:$0xf]
    %s2517 = scalar_lea.vmem %s39, 16
    %v2518 = vld [vmem:[%s2517] sm:$0xff]
    %v2519 = vld [vmem:[%s2517 + $0x8] sm:$0xff]
    %2520 = vmatpush.msra.mxu0 0.0
    %2521 = vmatpush.msra.mxu0 0.0
    %2522 = vmatpush.msra.mxu0 0.0
    %2523 = vmatpush.msra.mxu0 0.0
    %2524 = vmatpush.msra.mxu0 0.0
    %2525 = vmatpush.msra.mxu0 0.0
    %2526 = vmatpush.msra.mxu0 0.0
    %2527 = vmatpush.msra.mxu0 0.0
    %2528 = vmatpush.msra.mxu0 0.0
    %2529 = vmatpush.msra.mxu0 0.0
    %2530 = vmatpush.msra.mxu0 0.0
    %2531 = vmatpush.msra.mxu0 0.0
    %2532 = vmatpush.msra.mxu0 0.0
    %2533 = vmatpush.msra.mxu0 0.0
    %2534 = vmatpush.msra.mxu0 %v2519
    %2535 = vmatpush.msra.mxu0 %v2518
    %2536 = vmatmul.f32.gmra.mxu0 %v2450
    %v2537 = vpop.f32.mrf.mxu0
    %v2538 = vadd.f32 0.0, %v2537
    %2539 = vdwg.mxu0
    %v2541 = vsel %vm1986, %v2514, 0
    %v2544 = vsel %vm1986, %v2515, 0
    %v2547 = vsel %vm1986, %v2516, 0
    %2549 = vmatpush.msra.mxu0 0.0
    %2550 = vmatpush.msra.mxu0 0.0
    %2551 = vmatpush.msra.mxu0 0.0
    %2552 = vmatpush.msra.mxu0 0.0
    %2553 = vmatpush.msra.mxu0 0.0
    %2554 = vmatpush.msra.mxu0 0.0
    %2555 = vmatpush.msra.mxu0 0.0
    %2556 = vmatpush.msra.mxu0 0.0
    %2557 = vmatpush.msra.mxu0 0.0
    %2558 = vmatpush.msra.mxu0 0.0
    %2559 = vmatpush.msra.mxu0 0.0
    %2560 = vmatpush.msra.mxu0 0.0
    %2561 = vmatpush.msra.mxu0 0.0
    %2562 = vmatpush.msra.mxu0 0.0
    %2563 = vmatpush.msra.mxu0 0.0
    %2564 = vmatpush.msra.mxu0 %v2538
    %2565 = vmatmul.f32.gmra.mxu0 %v2541
    %v2566 = vpop.f32.mrf.mxu0
    %v2567 = vadd.f32 0.0, %v2566
    %2568 = vmatmul.f32.gmra.mxu0 %v2544
    %v2569 = vpop.f32.mrf.mxu0
    %v2570 = vadd.f32 0.0, %v2569
    %2571 = vmatmul.f32.gmra.mxu0 %v2547
    %v2572 = vpop.f32.mrf.mxu0
    %v2573 = vadd.f32 0.0, %v2572
    %2574 = vdwg.mxu0
    %v2575 = vadd.f32 %v2510, %v2567
    %v2576 = vadd.f32 %v2511, %v2570
    %v2577 = vadd.f32 %v2512, %v2573
    %s2578 = scalar_lea.vmem %s37, 48
    %v2579 = vld [vmem:[%s2578] sm:$0xff]
    %v2580 = vld [vmem:[%s2578 + $0x8] sm:$0xff]
    %v2581 = vld [vmem:[%s2578 + $0x10] sm:$0xf]
    %s2582 = scalar_lea.vmem %s39, 32
    %v2583 = vld [vmem:[%s2582] sm:$0xff]
    %v2584 = vld [vmem:[%s2582 + $0x8] sm:$0xff]
    %2585 = vmatpush.msra.mxu0 0.0
    %2586 = vmatpush.msra.mxu0 0.0
    %2587 = vmatpush.msra.mxu0 0.0
    %2588 = vmatpush.msra.mxu0 0.0
    %2589 = vmatpush.msra.mxu0 0.0
    %2590 = vmatpush.msra.mxu0 0.0
    %2591 = vmatpush.msra.mxu0 0.0
    %2592 = vmatpush.msra.mxu0 0.0
    %2593 = vmatpush.msra.mxu0 0.0
    %2594 = vmatpush.msra.mxu0 0.0
    %2595 = vmatpush.msra.mxu0 0.0
    %2596 = vmatpush.msra.mxu0 0.0
    %2597 = vmatpush.msra.mxu0 0.0
    %2598 = vmatpush.msra.mxu0 0.0
    %2599 = vmatpush.msra.mxu0 %v2584
    %2600 = vmatpush.msra.mxu0 %v2583
    %2601 = vmatmul.f32.gmra.mxu0 %v2450
    %v2602 = vpop.f32.mrf.mxu0
    %v2603 = vadd.f32 0.0, %v2602
    %2604 = vdwg.mxu0
    %v2606 = vsel %vm1986, %v2579, 0
    %v2609 = vsel %vm1986, %v2580, 0
    %v2612 = vsel %vm1986, %v2581, 0
    %2614 = vmatpush.msra.mxu0 0.0
    %2615 = vmatpush.msra.mxu0 0.0
    %2616 = vmatpush.msra.mxu0 0.0
    %2617 = vmatpush.msra.mxu0 0.0
    %2618 = vmatpush.msra.mxu0 0.0
    %2619 = vmatpush.msra.mxu0 0.0
    %2620 = vmatpush.msra.mxu0 0.0
    %2621 = vmatpush.msra.mxu0 0.0
    %2622 = vmatpush.msra.mxu0 0.0
    %2623 = vmatpush.msra.mxu0 0.0
    %2624 = vmatpush.msra.mxu0 0.0
    %2625 = vmatpush.msra.mxu0 0.0
    %2626 = vmatpush.msra.mxu0 0.0
    %2627 = vmatpush.msra.mxu0 0.0
    %2628 = vmatpush.msra.mxu0 0.0
    %2629 = vmatpush.msra.mxu0 %v2603
    %2630 = vmatmul.f32.gmra.mxu0 %v2606
    %v2631 = vpop.f32.mrf.mxu0
    %v2632 = vadd.f32 0.0, %v2631
    %2633 = vmatmul.f32.gmra.mxu0 %v2609
    %v2634 = vpop.f32.mrf.mxu0
    %v2635 = vadd.f32 0.0, %v2634
    %2636 = vmatmul.f32.gmra.mxu0 %v2612
    %v2637 = vpop.f32.mrf.mxu0
    %v2638 = vadd.f32 0.0, %v2637
    %2639 = vdwg.mxu0
    %v2640 = vadd.f32 %v2575, %v2632
    %v2641 = vadd.f32 %v2576, %v2635
    %v2642 = vadd.f32 %v2577, %v2638
    %s2643 = scalar_lea.vmem %s37, 72
    %v2644 = vld [vmem:[%s2643] sm:$0xff]
    %v2645 = vld [vmem:[%s2643 + $0x8] sm:$0xff]
    %v2646 = vld [vmem:[%s2643 + $0x10] sm:$0xf]
    %s2647 = scalar_lea.vmem %s39, 48
    %v2648 = vld [vmem:[%s2647] sm:$0xff]
    %v2649 = vld [vmem:[%s2647 + $0x8] sm:$0xff]
    %2650 = vmatpush.msra.mxu0 0.0
    %2651 = vmatpush.msra.mxu0 0.0
    %2652 = vmatpush.msra.mxu0 0.0
    %2653 = vmatpush.msra.mxu0 0.0
    %2654 = vmatpush.msra.mxu0 0.0
    %2655 = vmatpush.msra.mxu0 0.0
    %2656 = vmatpush.msra.mxu0 0.0
    %2657 = vmatpush.msra.mxu0 0.0
    %2658 = vmatpush.msra.mxu0 0.0
    %2659 = vmatpush.msra.mxu0 0.0
    %2660 = vmatpush.msra.mxu0 0.0
    %2661 = vmatpush.msra.mxu0 0.0
    %2662 = vmatpush.msra.mxu0 0.0
    %2663 = vmatpush.msra.mxu0 0.0
    %2664 = vmatpush.msra.mxu0 %v2649
    %2665 = vmatpush.msra.mxu0 %v2648
    %2666 = vmatmul.f32.gmra.mxu0 %v2450
    %v2667 = vpop.f32.mrf.mxu0
    %v2668 = vadd.f32 0.0, %v2667
    %2669 = vdwg.mxu0
    %v2671 = vsel %vm1986, %v2644, 0
    %v2674 = vsel %vm1986, %v2645, 0
    %v2677 = vsel %vm1986, %v2646, 0
    %2679 = vmatpush.msra.mxu0 0.0
    %2680 = vmatpush.msra.mxu0 0.0
    %2681 = vmatpush.msra.mxu0 0.0
    %2682 = vmatpush.msra.mxu0 0.0
    %2683 = vmatpush.msra.mxu0 0.0
    %2684 = vmatpush.msra.mxu0 0.0
    %2685 = vmatpush.msra.mxu0 0.0
    %2686 = vmatpush.msra.mxu0 0.0
    %2687 = vmatpush.msra.mxu0 0.0
    %2688 = vmatpush.msra.mxu0 0.0
    %2689 = vmatpush.msra.mxu0 0.0
    %2690 = vmatpush.msra.mxu0 0.0
    %2691 = vmatpush.msra.mxu0 0.0
    %2692 = vmatpush.msra.mxu0 0.0
    %2693 = vmatpush.msra.mxu0 0.0
    %2694 = vmatpush.msra.mxu0 %v2668
    %2695 = vmatmul.f32.gmra.mxu0 %v2671
    %v2696 = vpop.f32.mrf.mxu0
    %v2697 = vadd.f32 0.0, %v2696
    %2698 = vmatmul.f32.gmra.mxu0 %v2674
    %v2699 = vpop.f32.mrf.mxu0
    %v2700 = vadd.f32 0.0, %v2699
    %2701 = vmatmul.f32.gmra.mxu0 %v2677
    %v2702 = vpop.f32.mrf.mxu0
    %v2703 = vadd.f32 0.0, %v2702
    %2704 = vdwg.mxu0
    %v2705 = vadd.f32 %v2640, %v2697
    %v2706 = vadd.f32 %v2641, %v2700
    %v2707 = vadd.f32 %v2642, %v2703
    %v2708 = vmax.f32 %v2705, 0.0
    %v2709 = vmax.f32 %v2706, 0.0
    %v2710 = vmax.f32 %v2707, 0.0
    %v2711 = vld [vmem:[%s47] sm:$0x3]
    %v2712 = vld [vmem:[%s43] sm:$0xff]
    %v2713 = vld [vmem:[%s43 + $0x8] sm:$0xff]
    %v2714 = vld [vmem:[%s43 + $0x10] sm:$0xff]
    %v2715 = vld [vmem:[%s43 + $0x18] sm:$0xff]
    %v2716 = vld [vmem:[%s43 + $0x20] sm:$0xff]
    %v2717 = vld [vmem:[%s43 + $0x28] sm:$0xf]
    %v2718 = vld [vmem:[%s45] sm:$0xff]
    %v2719 = vld [vmem:[%s45 + $0x8] sm:$0xff]
    %v2720 = vld [vmem:[%s45 + $0x10] sm:$0xff]
    %v2721 = vld [vmem:[%s45 + $0x18] sm:$0xff]
    %v2722 = vld [vmem:[%s45 + $0x20] sm:$0xff]
    %v2723 = vld [vmem:[%s45 + $0x28] sm:$0xff]
    %v2724 = vld [vmem:[%s45 + $0x30] sm:$0xff]
    %v2725 = vld [vmem:[%s45 + $0x38] sm:$0xff]
    %v2726 = vld [vmem:[%s45 + $0x40] sm:$0xff]
    %v2727 = vld [vmem:[%s45 + $0x48] sm:$0xff]
    %v2728 = vld [vmem:[%s45 + $0x50] sm:$0xff]
    %v2729 = vld [vmem:[%s45 + $0x58] sm:$0xff]
    %v2730 = vld [vmem:[%s45 + $0x60] sm:$0xff]
    %v2731 = vld [vmem:[%s45 + $0x68] sm:$0xff]
    %v2732 = vld [vmem:[%s45 + $0x70] sm:$0xff]
    %v2733 = vld [vmem:[%s45 + $0x78] sm:$0xff]
    %v2734 = vld [vmem:[%s45 + $0x80] sm:$0xff]
    %v2735 = vld [vmem:[%s45 + $0x88] sm:$0xff]
    %v2736 = vld [vmem:[%s45 + $0x90] sm:$0xff]
    %v2737 = vld [vmem:[%s45 + $0x98] sm:$0xff]
    %v2739 = vsel %vm1773, %v2708, 0
    %v2742 = vsel %vm1773, %v2709, 0
    %v2745 = vsel %vm1773, %v2710, 0
    %2747 = vmatpush.msra.mxu0 0.0
    %2748 = vmatpush.msra.mxu0 0.0
    %2749 = vmatpush.msra.mxu0 0.0
    %2750 = vmatpush.msra.mxu0 0.0
    %2751 = vmatpush.msra.mxu0 0.0
    %2752 = vmatpush.msra.mxu0 0.0
    %2753 = vmatpush.msra.mxu0 %v2736
    %2754 = vmatpush.msra.mxu0 %v2734
    %2755 = vmatpush.msra.mxu0 %v2732
    %2756 = vmatpush.msra.mxu0 %v2730
    %2757 = vmatpush.msra.mxu0 %v2728
    %2758 = vmatpush.msra.mxu0 %v2726
    %2759 = vmatpush.msra.mxu0 %v2724
    %2760 = vmatpush.msra.mxu0 %v2722
    %2761 = vmatpush.msra.mxu0 %v2720
    %2762 = vmatpush.msra.mxu0 %v2718
    %2763 = vmatmul.f32.gmra.mxu0 %v2739
    %v2764 = vpop.f32.mrf.mxu0
    %v2765 = vadd.f32 0.0, %v2764
    %2766 = vmatmul.f32.gmra.mxu0 %v2742
    %v2767 = vpop.f32.mrf.mxu0
    %v2768 = vadd.f32 0.0, %v2767
    %2769 = vmatmul.f32.gmra.mxu0 %v2745
    %v2770 = vpop.f32.mrf.mxu0
    %v2771 = vadd.f32 0.0, %v2770
    %2772 = vdwg.mxu0
    %2773 = vmatpush.msra.mxu0 0.0
    %2774 = vmatpush.msra.mxu0 0.0
    %2775 = vmatpush.msra.mxu0 0.0
    %2776 = vmatpush.msra.mxu0 0.0
    %2777 = vmatpush.msra.mxu0 0.0
    %2778 = vmatpush.msra.mxu0 0.0
    %2779 = vmatpush.msra.mxu0 %v2737
    %2780 = vmatpush.msra.mxu0 %v2735
    %2781 = vmatpush.msra.mxu0 %v2733
    %2782 = vmatpush.msra.mxu0 %v2731
    %2783 = vmatpush.msra.mxu0 %v2729
    %2784 = vmatpush.msra.mxu0 %v2727
    %2785 = vmatpush.msra.mxu0 %v2725
    %2786 = vmatpush.msra.mxu0 %v2723
    %2787 = vmatpush.msra.mxu0 %v2721
    %2788 = vmatpush.msra.mxu0 %v2719
    %2789 = vmatmul.f32.gmra.mxu0 %v2739
    %v2790 = vpop.f32.mrf.mxu0
    %v2791 = vadd.f32 0.0, %v2790
    %2792 = vmatmul.f32.gmra.mxu0 %v2742
    %v2793 = vpop.f32.mrf.mxu0
    %v2794 = vadd.f32 0.0, %v2793
    %2795 = vmatmul.f32.gmra.mxu0 %v2745
    %v2796 = vpop.f32.mrf.mxu0
    %v2797 = vadd.f32 0.0, %v2796
    %2798 = vdwg.mxu0
    %v2800 = vsel %vm1746, %v2712, 0
    %v2803 = vsel %vm1746, %v2713, 0
    %v2806 = vsel %vm1746, %v2714, 0
    %v2809 = vsel %vm1746, %v2715, 0
    %v2812 = vsel %vm1746, %v2716, 0
    %v2815 = vsel %vm1746, %v2717, 0
    %v2818 = vsel %vm871, %v2771, 0
    %v2821 = vsel %vm871, %v2797, 0
    %2823 = vmatpush.msra.mxu0 0.0
    %2824 = vmatpush.msra.mxu0 0.0
    %2825 = vmatpush.msra.mxu0 0.0
    %2826 = vmatpush.msra.mxu0 0.0
    %2827 = vmatpush.msra.mxu0 0.0
    %2828 = vmatpush.msra.mxu0 0.0
    %2829 = vmatpush.msra.mxu0 0.0
    %2830 = vmatpush.msra.mxu0 0.0
    %2831 = vmatpush.msra.mxu0 0.0
    %2832 = vmatpush.msra.mxu0 0.0
    %2833 = vmatpush.msra.mxu0 0.0
    %2834 = vmatpush.msra.mxu0 0.0
    %2835 = vmatpush.msra.mxu0 0.0
    %2836 = vmatpush.msra.mxu0 %v2818
    %2837 = vmatpush.msra.mxu0 %v2768
    %2838 = vmatpush.msra.mxu0 %v2765
    %2839 = vmatmul.f32.gmra.mxu0 %v2800
    %v2840 = vpop.f32.mrf.mxu0
    %v2841 = vadd.f32 0.0, %v2840
    %2842 = vmatmul.f32.gmra.mxu0 %v2803
    %v2843 = vpop.f32.mrf.mxu0
    %v2844 = vadd.f32 0.0, %v2843
    %2845 = vmatmul.f32.gmra.mxu0 %v2806
    %v2846 = vpop.f32.mrf.mxu0
    %v2847 = vadd.f32 0.0, %v2846
    %2848 = vmatmul.f32.gmra.mxu0 %v2809
    %v2849 = vpop.f32.mrf.mxu0
    %v2850 = vadd.f32 0.0, %v2849
    %2851 = vmatmul.f32.gmra.mxu0 %v2812
    %v2852 = vpop.f32.mrf.mxu0
    %v2853 = vadd.f32 0.0, %v2852
    %2854 = vmatmul.f32.gmra.mxu0 %v2815
    %v2855 = vpop.f32.mrf.mxu0
    %v2856 = vadd.f32 0.0, %v2855
    %2857 = vdwg.mxu0
    %2858 = vmatpush.msra.mxu0 0.0
    %2859 = vmatpush.msra.mxu0 0.0
    %2860 = vmatpush.msra.mxu0 0.0
    %2861 = vmatpush.msra.mxu0 0.0
    %2862 = vmatpush.msra.mxu0 0.0
    %2863 = vmatpush.msra.mxu0 0.0
    %2864 = vmatpush.msra.mxu0 0.0
    %2865 = vmatpush.msra.mxu0 0.0
    %2866 = vmatpush.msra.mxu0 0.0
    %2867 = vmatpush.msra.mxu0 0.0
    %2868 = vmatpush.msra.mxu0 0.0
    %2869 = vmatpush.msra.mxu0 0.0
    %2870 = vmatpush.msra.mxu0 0.0
    %2871 = vmatpush.msra.mxu0 %v2821
    %2872 = vmatpush.msra.mxu0 %v2794
    %2873 = vmatpush.msra.mxu0 %v2791
    %2874 = vmatmul.f32.gmra.mxu0 %v2800
    %v2875 = vpop.f32.mrf.mxu0
    %v2876 = vadd.f32 0.0, %v2875
    %2877 = vmatmul.f32.gmra.mxu0 %v2803
    %v2878 = vpop.f32.mrf.mxu0
    %v2879 = vadd.f32 0.0, %v2878
    %2880 = vmatmul.f32.gmra.mxu0 %v2806
    %v2881 = vpop.f32.mrf.mxu0
    %v2882 = vadd.f32 0.0, %v2881
    %2883 = vmatmul.f32.gmra.mxu0 %v2809
    %v2884 = vpop.f32.mrf.mxu0
    %v2885 = vadd.f32 0.0, %v2884
    %2886 = vmatmul.f32.gmra.mxu0 %v2812
    %v2887 = vpop.f32.mrf.mxu0
    %v2888 = vadd.f32 0.0, %v2887
    %2889 = vmatmul.f32.gmra.mxu0 %v2815
    %v2890 = vpop.f32.mrf.mxu0
    %v2891 = vadd.f32 0.0, %v2890
    %2892 = vdwg.mxu0
    %v2894 = vperm.slane %v2711, 0
    %v2895 = vperm.slane %v2711, 1
    %v2898 = vadd.f32 %v2894, %v2841
    %v2899 = vadd.f32 %v2895, %v2876
    %v2900 = vadd.f32 %v2894, %v2844
    %v2901 = vadd.f32 %v2895, %v2879
    %v2902 = vadd.f32 %v2894, %v2847
    %v2903 = vadd.f32 %v2895, %v2882
    %v2904 = vadd.f32 %v2894, %v2850
    %v2905 = vadd.f32 %v2895, %v2885
    %v2906 = vadd.f32 %v2894, %v2853
    %v2907 = vadd.f32 %v2895, %v2888
    %v2908 = vadd.f32 %v2894, %v2856
    %v2909 = vadd.f32 %v2895, %v2891
    %s2910 = scalar_lea.vmem %s43, 48
    %v2911 = vld [vmem:[%s2910] sm:$0xff]
    %v2912 = vld [vmem:[%s2910 + $0x8] sm:$0xff]
    %v2913 = vld [vmem:[%s2910 + $0x10] sm:$0xff]
    %v2914 = vld [vmem:[%s2910 + $0x18] sm:$0xff]
    %v2915 = vld [vmem:[%s2910 + $0x20] sm:$0xff]
    %v2916 = vld [vmem:[%s2910 + $0x28] sm:$0xf]
    %s2917 = scalar_lea.vmem %s45, 160
    %v2918 = vld [vmem:[%s2917] sm:$0xff]
    %v2919 = vld [vmem:[%s2917 + $0x8] sm:$0xff]
    %v2920 = vld [vmem:[%s2917 + $0x10] sm:$0xff]
    %v2921 = vld [vmem:[%s2917 + $0x18] sm:$0xff]
    %v2922 = vld [vmem:[%s2917 + $0x20] sm:$0xff]
    %v2923 = vld [vmem:[%s2917 + $0x28] sm:$0xff]
    %v2924 = vld [vmem:[%s2917 + $0x30] sm:$0xff]
    %v2925 = vld [vmem:[%s2917 + $0x38] sm:$0xff]
    %v2926 = vld [vmem:[%s2917 + $0x40] sm:$0xff]
    %v2927 = vld [vmem:[%s2917 + $0x48] sm:$0xff]
    %v2928 = vld [vmem:[%s2917 + $0x50] sm:$0xff]
    %v2929 = vld [vmem:[%s2917 + $0x58] sm:$0xff]
    %v2930 = vld [vmem:[%s2917 + $0x60] sm:$0xff]
    %v2931 = vld [vmem:[%s2917 + $0x68] sm:$0xff]
    %v2932 = vld [vmem:[%s2917 + $0x70] sm:$0xff]
    %v2933 = vld [vmem:[%s2917 + $0x78] sm:$0xff]
    %v2934 = vld [vmem:[%s2917 + $0x80] sm:$0xff]
    %v2935 = vld [vmem:[%s2917 + $0x88] sm:$0xff]
    %v2936 = vld [vmem:[%s2917 + $0x90] sm:$0xff]
    %v2937 = vld [vmem:[%s2917 + $0x98] sm:$0xff]
    %2938 = vmatpush.msra.mxu0 0.0
    %2939 = vmatpush.msra.mxu0 0.0
    %2940 = vmatpush.msra.mxu0 0.0
    %2941 = vmatpush.msra.mxu0 0.0
    %2942 = vmatpush.msra.mxu0 0.0
    %2943 = vmatpush.msra.mxu0 0.0
    %2944 = vmatpush.msra.mxu0 %v2936
    %2945 = vmatpush.msra.mxu0 %v2934
    %2946 = vmatpush.msra.mxu0 %v2932
    %2947 = vmatpush.msra.mxu0 %v2930
    %2948 = vmatpush.msra.mxu0 %v2928
    %2949 = vmatpush.msra.mxu0 %v2926
    %2950 = vmatpush.msra.mxu0 %v2924
    %2951 = vmatpush.msra.mxu0 %v2922
    %2952 = vmatpush.msra.mxu0 %v2920
    %2953 = vmatpush.msra.mxu0 %v2918
    %2954 = vmatmul.f32.gmra.mxu0 %v2739
    %v2955 = vpop.f32.mrf.mxu0
    %v2956 = vadd.f32 0.0, %v2955
    %2957 = vmatmul.f32.gmra.mxu0 %v2742
    %v2958 = vpop.f32.mrf.mxu0
    %v2959 = vadd.f32 0.0, %v2958
    %2960 = vmatmul.f32.gmra.mxu0 %v2745
    %v2961 = vpop.f32.mrf.mxu0
    %v2962 = vadd.f32 0.0, %v2961
    %2963 = vdwg.mxu0
    %2964 = vmatpush.msra.mxu0 0.0
    %2965 = vmatpush.msra.mxu0 0.0
    %2966 = vmatpush.msra.mxu0 0.0
    %2967 = vmatpush.msra.mxu0 0.0
    %2968 = vmatpush.msra.mxu0 0.0
    %2969 = vmatpush.msra.mxu0 0.0
    %2970 = vmatpush.msra.mxu0 %v2937
    %2971 = vmatpush.msra.mxu0 %v2935
    %2972 = vmatpush.msra.mxu0 %v2933
    %2973 = vmatpush.msra.mxu0 %v2931
    %2974 = vmatpush.msra.mxu0 %v2929
    %2975 = vmatpush.msra.mxu0 %v2927
    %2976 = vmatpush.msra.mxu0 %v2925
    %2977 = vmatpush.msra.mxu0 %v2923
    %2978 = vmatpush.msra.mxu0 %v2921
    %2979 = vmatpush.msra.mxu0 %v2919
    %2980 = vmatmul.f32.gmra.mxu0 %v2739
    %v2981 = vpop.f32.mrf.mxu0
    %v2982 = vadd.f32 0.0, %v2981
    %2983 = vmatmul.f32.gmra.mxu0 %v2742
    %v2984 = vpop.f32.mrf.mxu0
    %v2985 = vadd.f32 0.0, %v2984
    %2986 = vmatmul.f32.gmra.mxu0 %v2745
    %v2987 = vpop.f32.mrf.mxu0
    %v2988 = vadd.f32 0.0, %v2987
    %2989 = vdwg.mxu0
    %v2991 = vsel %vm1746, %v2911, 0
    %v2994 = vsel %vm1746, %v2912, 0
    %v2997 = vsel %vm1746, %v2913, 0
    %v3000 = vsel %vm1746, %v2914, 0
    %v3003 = vsel %vm1746, %v2915, 0
    %v3006 = vsel %vm1746, %v2916, 0
    %v3009 = vsel %vm871, %v2962, 0
    %v3012 = vsel %vm871, %v2988, 0
    %3014 = vmatpush.msra.mxu0 0.0
    %3015 = vmatpush.msra.mxu0 0.0
    %3016 = vmatpush.msra.mxu0 0.0
    %3017 = vmatpush.msra.mxu0 0.0
    %3018 = vmatpush.msra.mxu0 0.0
    %3019 = vmatpush.msra.mxu0 0.0
    %3020 = vmatpush.msra.mxu0 0.0
    %3021 = vmatpush.msra.mxu0 0.0
    %3022 = vmatpush.msra.mxu0 0.0
    %3023 = vmatpush.msra.mxu0 0.0
    %3024 = vmatpush.msra.mxu0 0.0
    %3025 = vmatpush.msra.mxu0 0.0
    %3026 = vmatpush.msra.mxu0 0.0
    %3027 = vmatpush.msra.mxu0 %v3009
    %3028 = vmatpush.msra.mxu0 %v2959
    %3029 = vmatpush.msra.mxu0 %v2956
    %3030 = vmatmul.f32.gmra.mxu0 %v2991
    %v3031 = vpop.f32.mrf.mxu0
    %v3032 = vadd.f32 0.0, %v3031
    %3033 = vmatmul.f32.gmra.mxu0 %v2994
    %v3034 = vpop.f32.mrf.mxu0
    %v3035 = vadd.f32 0.0, %v3034
    %3036 = vmatmul.f32.gmra.mxu0 %v2997
    %v3037 = vpop.f32.mrf.mxu0
    %v3038 = vadd.f32 0.0, %v3037
    %3039 = vmatmul.f32.gmra.mxu0 %v3000
    %v3040 = vpop.f32.mrf.mxu0
    %v3041 = vadd.f32 0.0, %v3040
    %3042 = vmatmul.f32.gmra.mxu0 %v3003
    %v3043 = vpop.f32.mrf.mxu0
    %v3044 = vadd.f32 0.0, %v3043
    %3045 = vmatmul.f32.gmra.mxu0 %v3006
    %v3046 = vpop.f32.mrf.mxu0
    %v3047 = vadd.f32 0.0, %v3046
    %3048 = vdwg.mxu0
    %3049 = vmatpush.msra.mxu0 0.0
    %3050 = vmatpush.msra.mxu0 0.0
    %3051 = vmatpush.msra.mxu0 0.0
    %3052 = vmatpush.msra.mxu0 0.0
    %3053 = vmatpush.msra.mxu0 0.0
    %3054 = vmatpush.msra.mxu0 0.0
    %3055 = vmatpush.msra.mxu0 0.0
    %3056 = vmatpush.msra.mxu0 0.0
    %3057 = vmatpush.msra.mxu0 0.0
    %3058 = vmatpush.msra.mxu0 0.0
    %3059 = vmatpush.msra.mxu0 0.0
    %3060 = vmatpush.msra.mxu0 0.0
    %3061 = vmatpush.msra.mxu0 0.0
    %3062 = vmatpush.msra.mxu0 %v3012
    %3063 = vmatpush.msra.mxu0 %v2985
    %3064 = vmatpush.msra.mxu0 %v2982
    %3065 = vmatmul.f32.gmra.mxu0 %v2991
    %v3066 = vpop.f32.mrf.mxu0
    %v3067 = vadd.f32 0.0, %v3066
    %3068 = vmatmul.f32.gmra.mxu0 %v2994
    %v3069 = vpop.f32.mrf.mxu0
    %v3070 = vadd.f32 0.0, %v3069
    %3071 = vmatmul.f32.gmra.mxu0 %v2997
    %v3072 = vpop.f32.mrf.mxu0
    %v3073 = vadd.f32 0.0, %v3072
    %3074 = vmatmul.f32.gmra.mxu0 %v3000
    %v3075 = vpop.f32.mrf.mxu0
    %v3076 = vadd.f32 0.0, %v3075
    %3077 = vmatmul.f32.gmra.mxu0 %v3003
    %v3078 = vpop.f32.mrf.mxu0
    %v3079 = vadd.f32 0.0, %v3078
    %3080 = vmatmul.f32.gmra.mxu0 %v3006
    %v3081 = vpop.f32.mrf.mxu0
    %v3082 = vadd.f32 0.0, %v3081
    %3083 = vdwg.mxu0
    %v3084 = vadd.f32 %v2898, %v3032
    %v3085 = vadd.f32 %v2899, %v3067
    %v3086 = vadd.f32 %v2900, %v3035
    %v3087 = vadd.f32 %v2901, %v3070
    %v3088 = vadd.f32 %v2902, %v3038
    %v3089 = vadd.f32 %v2903, %v3073
    %v3090 = vadd.f32 %v2904, %v3041
    %v3091 = vadd.f32 %v2905, %v3076
    %v3092 = vadd.f32 %v2906, %v3044
    %v3093 = vadd.f32 %v2907, %v3079
    %v3094 = vadd.f32 %v2908, %v3047
    %v3095 = vadd.f32 %v2909, %v3082
    %s3096 = scalar_lea.vmem %s43, 96
    %v3097 = vld [vmem:[%s3096] sm:$0xff]
    %v3098 = vld [vmem:[%s3096 + $0x8] sm:$0xff]
    %v3099 = vld [vmem:[%s3096 + $0x10] sm:$0xff]
    %v3100 = vld [vmem:[%s3096 + $0x18] sm:$0xff]
    %v3101 = vld [vmem:[%s3096 + $0x20] sm:$0xff]
    %v3102 = vld [vmem:[%s3096 + $0x28] sm:$0xf]
    %s3103 = scalar_lea.vmem %s45, 320
    %v3104 = vld [vmem:[%s3103] sm:$0xff]
    %v3105 = vld [vmem:[%s3103 + $0x8] sm:$0xff]
    %v3106 = vld [vmem:[%s3103 + $0x10] sm:$0xff]
    %v3107 = vld [vmem:[%s3103 + $0x18] sm:$0xff]
    %v3108 = vld [vmem:[%s3103 + $0x20] sm:$0xff]
    %v3109 = vld [vmem:[%s3103 + $0x28] sm:$0xff]
    %v3110 = vld [vmem:[%s3103 + $0x30] sm:$0xff]
    %v3111 = vld [vmem:[%s3103 + $0x38] sm:$0xff]
    %v3112 = vld [vmem:[%s3103 + $0x40] sm:$0xff]
    %v3113 = vld [vmem:[%s3103 + $0x48] sm:$0xff]
    %v3114 = vld [vmem:[%s3103 + $0x50] sm:$0xff]
    %v3115 = vld [vmem:[%s3103 + $0x58] sm:$0xff]
    %v3116 = vld [vmem:[%s3103 + $0x60] sm:$0xff]
    %v3117 = vld [vmem:[%s3103 + $0x68] sm:$0xff]
    %v3118 = vld [vmem:[%s3103 + $0x70] sm:$0xff]
    %v3119 = vld [vmem:[%s3103 + $0x78] sm:$0xff]
    %v3120 = vld [vmem:[%s3103 + $0x80] sm:$0xff]
    %v3121 = vld [vmem:[%s3103 + $0x88] sm:$0xff]
    %v3122 = vld [vmem:[%s3103 + $0x90] sm:$0xff]
    %v3123 = vld [vmem:[%s3103 + $0x98] sm:$0xff]
    %3124 = vmatpush.msra.mxu0 0.0
    %3125 = vmatpush.msra.mxu0 0.0
    %3126 = vmatpush.msra.mxu0 0.0
    %3127 = vmatpush.msra.mxu0 0.0
    %3128 = vmatpush.msra.mxu0 0.0
    %3129 = vmatpush.msra.mxu0 0.0
    %3130 = vmatpush.msra.mxu0 %v3122
    %3131 = vmatpush.msra.mxu0 %v3120
    %3132 = vmatpush.msra.mxu0 %v3118
    %3133 = vmatpush.msra.mxu0 %v3116
    %3134 = vmatpush.msra.mxu0 %v3114
    %3135 = vmatpush.msra.mxu0 %v3112
    %3136 = vmatpush.msra.mxu0 %v3110
    %3137 = vmatpush.msra.mxu0 %v3108
    %3138 = vmatpush.msra.mxu0 %v3106
    %3139 = vmatpush.msra.mxu0 %v3104
    %3140 = vmatmul.f32.gmra.mxu0 %v2739
    %v3141 = vpop.f32.mrf.mxu0
    %v3142 = vadd.f32 0.0, %v3141
    %3143 = vmatmul.f32.gmra.mxu0 %v2742
    %v3144 = vpop.f32.mrf.mxu0
    %v3145 = vadd.f32 0.0, %v3144
    %3146 = vmatmul.f32.gmra.mxu0 %v2745
    %v3147 = vpop.f32.mrf.mxu0
    %v3148 = vadd.f32 0.0, %v3147
    %3149 = vdwg.mxu0
    %3150 = vmatpush.msra.mxu0 0.0
    %3151 = vmatpush.msra.mxu0 0.0
    %3152 = vmatpush.msra.mxu0 0.0
    %3153 = vmatpush.msra.mxu0 0.0
    %3154 = vmatpush.msra.mxu0 0.0
    %3155 = vmatpush.msra.mxu0 0.0
    %3156 = vmatpush.msra.mxu0 %v3123
    %3157 = vmatpush.msra.mxu0 %v3121
    %3158 = vmatpush.msra.mxu0 %v3119
    %3159 = vmatpush.msra.mxu0 %v3117
    %3160 = vmatpush.msra.mxu0 %v3115
    %3161 = vmatpush.msra.mxu0 %v3113
    %3162 = vmatpush.msra.mxu0 %v3111
    %3163 = vmatpush.msra.mxu0 %v3109
    %3164 = vmatpush.msra.mxu0 %v3107
    %3165 = vmatpush.msra.mxu0 %v3105
    %3166 = vmatmul.f32.gmra.mxu0 %v2739
    %v3167 = vpop.f32.mrf.mxu0
    %v3168 = vadd.f32 0.0, %v3167
    %3169 = vmatmul.f32.gmra.mxu0 %v2742
    %v3170 = vpop.f32.mrf.mxu0
    %v3171 = vadd.f32 0.0, %v3170
    %3172 = vmatmul.f32.gmra.mxu0 %v2745
    %v3173 = vpop.f32.mrf.mxu0
    %v3174 = vadd.f32 0.0, %v3173
    %3175 = vdwg.mxu0
    %v3177 = vsel %vm1746, %v3097, 0
    %v3180 = vsel %vm1746, %v3098, 0
    %v3183 = vsel %vm1746, %v3099, 0
    %v3186 = vsel %vm1746, %v3100, 0
    %v3189 = vsel %vm1746, %v3101, 0
    %v3192 = vsel %vm1746, %v3102, 0
    %v3195 = vsel %vm871, %v3148, 0
    %v3198 = vsel %vm871, %v3174, 0
    %3200 = vmatpush.msra.mxu0 0.0
    %3201 = vmatpush.msra.mxu0 0.0
    %3202 = vmatpush.msra.mxu0 0.0
    %3203 = vmatpush.msra.mxu0 0.0
    %3204 = vmatpush.msra.mxu0 0.0
    %3205 = vmatpush.msra.mxu0 0.0
    %3206 = vmatpush.msra.mxu0 0.0
    %3207 = vmatpush.msra.mxu0 0.0
    %3208 = vmatpush.msra.mxu0 0.0
    %3209 = vmatpush.msra.mxu0 0.0
    %3210 = vmatpush.msra.mxu0 0.0
    %3211 = vmatpush.msra.mxu0 0.0
    %3212 = vmatpush.msra.mxu0 0.0
    %3213 = vmatpush.msra.mxu0 %v3195
    %3214 = vmatpush.msra.mxu0 %v3145
    %3215 = vmatpush.msra.mxu0 %v3142
    %3216 = vmatmul.f32.gmra.mxu0 %v3177
    %v3217 = vpop.f32.mrf.mxu0
    %v3218 = vadd.f32 0.0, %v3217
    %3219 = vmatmul.f32.gmra.mxu0 %v3180
    %v3220 = vpop.f32.mrf.mxu0
    %v3221 = vadd.f32 0.0, %v3220
    %3222 = vmatmul.f32.gmra.mxu0 %v3183
    %v3223 = vpop.f32.mrf.mxu0
    %v3224 = vadd.f32 0.0, %v3223
    %3225 = vmatmul.f32.gmra.mxu0 %v3186
    %v3226 = vpop.f32.mrf.mxu0
    %v3227 = vadd.f32 0.0, %v3226
    %3228 = vmatmul.f32.gmra.mxu0 %v3189
    %v3229 = vpop.f32.mrf.mxu0
    %v3230 = vadd.f32 0.0, %v3229
    %3231 = vmatmul.f32.gmra.mxu0 %v3192
    %v3232 = vpop.f32.mrf.mxu0
    %v3233 = vadd.f32 0.0, %v3232
    %3234 = vdwg.mxu0
    %3235 = vmatpush.msra.mxu0 0.0
    %3236 = vmatpush.msra.mxu0 0.0
    %3237 = vmatpush.msra.mxu0 0.0
    %3238 = vmatpush.msra.mxu0 0.0
    %3239 = vmatpush.msra.mxu0 0.0
    %3240 = vmatpush.msra.mxu0 0.0
    %3241 = vmatpush.msra.mxu0 0.0
    %3242 = vmatpush.msra.mxu0 0.0
    %3243 = vmatpush.msra.mxu0 0.0
    %3244 = vmatpush.msra.mxu0 0.0
    %3245 = vmatpush.msra.mxu0 0.0
    %3246 = vmatpush.msra.mxu0 0.0
    %3247 = vmatpush.msra.mxu0 0.0
    %3248 = vmatpush.msra.mxu0 %v3198
    %3249 = vmatpush.msra.mxu0 %v3171
    %3250 = vmatpush.msra.mxu0 %v3168
    %3251 = vmatmul.f32.gmra.mxu0 %v3177
    %v3252 = vpop.f32.mrf.mxu0
    %v3253 = vadd.f32 0.0, %v3252
    %3254 = vmatmul.f32.gmra.mxu0 %v3180
    %v3255 = vpop.f32.mrf.mxu0
    %v3256 = vadd.f32 0.0, %v3255
    %3257 = vmatmul.f32.gmra.mxu0 %v3183
    %v3258 = vpop.f32.mrf.mxu0
    %v3259 = vadd.f32 0.0, %v3258
    %3260 = vmatmul.f32.gmra.mxu0 %v3186
    %v3261 = vpop.f32.mrf.mxu0
    %v3262 = vadd.f32 0.0, %v3261
    %3263 = vmatmul.f32.gmra.mxu0 %v3189
    %v3264 = vpop.f32.mrf.mxu0
    %v3265 = vadd.f32 0.0, %v3264
    %3266 = vmatmul.f32.gmra.mxu0 %v3192
    %v3267 = vpop.f32.mrf.mxu0
    %v3268 = vadd.f32 0.0, %v3267
    %3269 = vdwg.mxu0
    %v3270 = vadd.f32 %v3084, %v3218
    %v3271 = vadd.f32 %v3085, %v3253
    %v3272 = vadd.f32 %v3086, %v3221
    %v3273 = vadd.f32 %v3087, %v3256
    %v3274 = vadd.f32 %v3088, %v3224
    %v3275 = vadd.f32 %v3089, %v3259
    %v3276 = vadd.f32 %v3090, %v3227
    %v3277 = vadd.f32 %v3091, %v3262
    %v3278 = vadd.f32 %v3092, %v3230
    %v3279 = vadd.f32 %v3093, %v3265
    %v3280 = vadd.f32 %v3094, %v3233
    %v3281 = vadd.f32 %v3095, %v3268
    %s3282 = scalar_lea.vmem %s43, 144
    %v3283 = vld [vmem:[%s3282] sm:$0xff]
    %v3284 = vld [vmem:[%s3282 + $0x8] sm:$0xff]
    %v3285 = vld [vmem:[%s3282 + $0x10] sm:$0xff]
    %v3286 = vld [vmem:[%s3282 + $0x18] sm:$0xff]
    %v3287 = vld [vmem:[%s3282 + $0x20] sm:$0xff]
    %v3288 = vld [vmem:[%s3282 + $0x28] sm:$0xf]
    %s3289 = scalar_lea.vmem %s45, 480
    %v3290 = vld [vmem:[%s3289] sm:$0xff]
    %v3291 = vld [vmem:[%s3289 + $0x8] sm:$0xff]
    %v3292 = vld [vmem:[%s3289 + $0x10] sm:$0xff]
    %v3293 = vld [vmem:[%s3289 + $0x18] sm:$0xff]
    %v3294 = vld [vmem:[%s3289 + $0x20] sm:$0xff]
    %v3295 = vld [vmem:[%s3289 + $0x28] sm:$0xff]
    %v3296 = vld [vmem:[%s3289 + $0x30] sm:$0xff]
    %v3297 = vld [vmem:[%s3289 + $0x38] sm:$0xff]
    %v3298 = vld [vmem:[%s3289 + $0x40] sm:$0xff]
    %v3299 = vld [vmem:[%s3289 + $0x48] sm:$0xff]
    %v3300 = vld [vmem:[%s3289 + $0x50] sm:$0xff]
    %v3301 = vld [vmem:[%s3289 + $0x58] sm:$0xff]
    %v3302 = vld [vmem:[%s3289 + $0x60] sm:$0xff]
    %v3303 = vld [vmem:[%s3289 + $0x68] sm:$0xff]
    %v3304 = vld [vmem:[%s3289 + $0x70] sm:$0xff]
    %v3305 = vld [vmem:[%s3289 + $0x78] sm:$0xff]
    %v3306 = vld [vmem:[%s3289 + $0x80] sm:$0xff]
    %v3307 = vld [vmem:[%s3289 + $0x88] sm:$0xff]
    %v3308 = vld [vmem:[%s3289 + $0x90] sm:$0xff]
    %v3309 = vld [vmem:[%s3289 + $0x98] sm:$0xff]
    %3310 = vmatpush.msra.mxu0 0.0
    %3311 = vmatpush.msra.mxu0 0.0
    %3312 = vmatpush.msra.mxu0 0.0
    %3313 = vmatpush.msra.mxu0 0.0
    %3314 = vmatpush.msra.mxu0 0.0
    %3315 = vmatpush.msra.mxu0 0.0
    %3316 = vmatpush.msra.mxu0 %v3308
    %3317 = vmatpush.msra.mxu0 %v3306
    %3318 = vmatpush.msra.mxu0 %v3304
    %3319 = vmatpush.msra.mxu0 %v3302
    %3320 = vmatpush.msra.mxu0 %v3300
    %3321 = vmatpush.msra.mxu0 %v3298
    %3322 = vmatpush.msra.mxu0 %v3296
    %3323 = vmatpush.msra.mxu0 %v3294
    %3324 = vmatpush.msra.mxu0 %v3292
    %3325 = vmatpush.msra.mxu0 %v3290
    %3326 = vmatmul.f32.gmra.mxu0 %v2739
    %v3327 = vpop.f32.mrf.mxu0
    %v3328 = vadd.f32 0.0, %v3327
    %3329 = vmatmul.f32.gmra.mxu0 %v2742
    %v3330 = vpop.f32.mrf.mxu0
    %v3331 = vadd.f32 0.0, %v3330
    %3332 = vmatmul.f32.gmra.mxu0 %v2745
    %v3333 = vpop.f32.mrf.mxu0
    %v3334 = vadd.f32 0.0, %v3333
    %3335 = vdwg.mxu0
    %3336 = vmatpush.msra.mxu0 0.0
    %3337 = vmatpush.msra.mxu0 0.0
    %3338 = vmatpush.msra.mxu0 0.0
    %3339 = vmatpush.msra.mxu0 0.0
    %3340 = vmatpush.msra.mxu0 0.0
    %3341 = vmatpush.msra.mxu0 0.0
    %3342 = vmatpush.msra.mxu0 %v3309
    %3343 = vmatpush.msra.mxu0 %v3307
    %3344 = vmatpush.msra.mxu0 %v3305
    %3345 = vmatpush.msra.mxu0 %v3303
    %3346 = vmatpush.msra.mxu0 %v3301
    %3347 = vmatpush.msra.mxu0 %v3299
    %3348 = vmatpush.msra.mxu0 %v3297
    %3349 = vmatpush.msra.mxu0 %v3295
    %3350 = vmatpush.msra.mxu0 %v3293
    %3351 = vmatpush.msra.mxu0 %v3291
    %3352 = vmatmul.f32.gmra.mxu0 %v2739
    %v3353 = vpop.f32.mrf.mxu0
    %v3354 = vadd.f32 0.0, %v3353
    %3355 = vmatmul.f32.gmra.mxu0 %v2742
    %v3356 = vpop.f32.mrf.mxu0
    %v3357 = vadd.f32 0.0, %v3356
    %3358 = vmatmul.f32.gmra.mxu0 %v2745
    %v3359 = vpop.f32.mrf.mxu0
    %v3360 = vadd.f32 0.0, %v3359
    %3361 = vdwg.mxu0
    %v3363 = vsel %vm1746, %v3283, 0
    %v3366 = vsel %vm1746, %v3284, 0
    %v3369 = vsel %vm1746, %v3285, 0
    %v3372 = vsel %vm1746, %v3286, 0
    %v3375 = vsel %vm1746, %v3287, 0
    %v3378 = vsel %vm1746, %v3288, 0
    %v3381 = vsel %vm871, %v3334, 0
    %v3384 = vsel %vm871, %v3360, 0
    %3386 = vmatpush.msra.mxu0 0.0
    %3387 = vmatpush.msra.mxu0 0.0
    %3388 = vmatpush.msra.mxu0 0.0
    %3389 = vmatpush.msra.mxu0 0.0
    %3390 = vmatpush.msra.mxu0 0.0
    %3391 = vmatpush.msra.mxu0 0.0
    %3392 = vmatpush.msra.mxu0 0.0
    %3393 = vmatpush.msra.mxu0 0.0
    %3394 = vmatpush.msra.mxu0 0.0
    %3395 = vmatpush.msra.mxu0 0.0
    %3396 = vmatpush.msra.mxu0 0.0
    %3397 = vmatpush.msra.mxu0 0.0
    %3398 = vmatpush.msra.mxu0 0.0
    %3399 = vmatpush.msra.mxu0 %v3381
    %3400 = vmatpush.msra.mxu0 %v3331
    %3401 = vmatpush.msra.mxu0 %v3328
    %3402 = vmatmul.f32.gmra.mxu0 %v3363
    %v3403 = vpop.f32.mrf.mxu0
    %v3404 = vadd.f32 0.0, %v3403
    %3405 = vmatmul.f32.gmra.mxu0 %v3366
    %v3406 = vpop.f32.mrf.mxu0
    %v3407 = vadd.f32 0.0, %v3406
    %3408 = vmatmul.f32.gmra.mxu0 %v3369
    %v3409 = vpop.f32.mrf.mxu0
    %v3410 = vadd.f32 0.0, %v3409
    %3411 = vmatmul.f32.gmra.mxu0 %v3372
    %v3412 = vpop.f32.mrf.mxu0
    %v3413 = vadd.f32 0.0, %v3412
    %3414 = vmatmul.f32.gmra.mxu0 %v3375
    %v3415 = vpop.f32.mrf.mxu0
    %v3416 = vadd.f32 0.0, %v3415
    %3417 = vmatmul.f32.gmra.mxu0 %v3378
    %v3418 = vpop.f32.mrf.mxu0
    %v3419 = vadd.f32 0.0, %v3418
    %3420 = vdwg.mxu0
    %3421 = vmatpush.msra.mxu0 0.0
    %3422 = vmatpush.msra.mxu0 0.0
    %3423 = vmatpush.msra.mxu0 0.0
    %3424 = vmatpush.msra.mxu0 0.0
    %3425 = vmatpush.msra.mxu0 0.0
    %3426 = vmatpush.msra.mxu0 0.0
    %3427 = vmatpush.msra.mxu0 0.0
    %3428 = vmatpush.msra.mxu0 0.0
    %3429 = vmatpush.msra.mxu0 0.0
    %3430 = vmatpush.msra.mxu0 0.0
    %3431 = vmatpush.msra.mxu0 0.0
    %3432 = vmatpush.msra.mxu0 0.0
    %3433 = vmatpush.msra.mxu0 0.0
    %3434 = vmatpush.msra.mxu0 %v3384
    %3435 = vmatpush.msra.mxu0 %v3357
    %3436 = vmatpush.msra.mxu0 %v3354
    %3437 = vmatmul.f32.gmra.mxu0 %v3363
    %v3438 = vpop.f32.mrf.mxu0
    %v3439 = vadd.f32 0.0, %v3438
    %3440 = vmatmul.f32.gmra.mxu0 %v3366
    %v3441 = vpop.f32.mrf.mxu0
    %v3442 = vadd.f32 0.0, %v3441
    %3443 = vmatmul.f32.gmra.mxu0 %v3369
    %v3444 = vpop.f32.mrf.mxu0
    %v3445 = vadd.f32 0.0, %v3444
    %3446 = vmatmul.f32.gmra.mxu0 %v3372
    %v3447 = vpop.f32.mrf.mxu0
    %v3448 = vadd.f32 0.0, %v3447
    %3449 = vmatmul.f32.gmra.mxu0 %v3375
    %v3450 = vpop.f32.mrf.mxu0
    %v3451 = vadd.f32 0.0, %v3450
    %3452 = vmatmul.f32.gmra.mxu0 %v3378
    %v3453 = vpop.f32.mrf.mxu0
    %v3454 = vadd.f32 0.0, %v3453
    %3455 = vdwg.mxu0
    %v3456 = vadd.f32 %v3270, %v3404
    %v3457 = vadd.f32 %v3271, %v3439
    %v3458 = vadd.f32 %v3272, %v3407
    %v3459 = vadd.f32 %v3273, %v3442
    %v3460 = vadd.f32 %v3274, %v3410
    %v3461 = vadd.f32 %v3275, %v3445
    %v3462 = vadd.f32 %v3276, %v3413
    %v3463 = vadd.f32 %v3277, %v3448
    %v3464 = vadd.f32 %v3278, %v3416
    %v3465 = vadd.f32 %v3279, %v3451
    %v3466 = vadd.f32 %v3280, %v3419
    %v3467 = vadd.f32 %v3281, %v3454
    %v3468 = vmax.f32 %v3456, 0.0
    %v3469 = vmax.f32 %v3457, 0.0
    %v3470 = vmax.f32 %v3458, 0.0
    %v3471 = vmax.f32 %v3459, 0.0
    %v3472 = vmax.f32 %v3460, 0.0
    %v3473 = vmax.f32 %v3461, 0.0
    %v3474 = vmax.f32 %v3462, 0.0
    %v3475 = vmax.f32 %v3463, 0.0
    %v3476 = vmax.f32 %v3464, 0.0
    %v3477 = vmax.f32 %v3465, 0.0
    %v3478 = vmax.f32 %v3466, 0.0
    %v3479 = vmax.f32 %v3467, 0.0
    %v3480 = vld [vmem:[%s53] sm:$0x1]
    %v3481 = vld [vmem:[%s49] sm:$0xff]
    %v3482 = vld [vmem:[%s49 + $0x8] sm:$0xff]
    %v3483 = vld [vmem:[%s49 + $0x10] sm:$0xff]
    %v3484 = vld [vmem:[%s49 + $0x18] sm:$0xff]
    %v3485 = vld [vmem:[%s49 + $0x20] sm:$0xff]
    %v3486 = vld [vmem:[%s49 + $0x28] sm:$0xff]
    %v3487 = vld [vmem:[%s51] sm:$0xff]
    %v3488 = vld [vmem:[%s51 + $0x8] sm:$0xff]
    %v3489 = vld [vmem:[%s51 + $0x10] sm:$0xff]
    %v3490 = vld [vmem:[%s51 + $0x18] sm:$0xff]
    %v3491 = vld [vmem:[%s51 + $0x20] sm:$0xff]
    %v3492 = vld [vmem:[%s51 + $0x28] sm:$0xff]
    %v3493 = vld [vmem:[%s51 + $0x30] sm:$0xff]
    %v3494 = vld [vmem:[%s51 + $0x38] sm:$0xff]
    %v3495 = vld [vmem:[%s51 + $0x40] sm:$0xff]
    %v3496 = vld [vmem:[%s51 + $0x48] sm:$0xff]
    %v3497 = vld [vmem:[%s51 + $0x50] sm:$0xff]
    %v3498 = vld [vmem:[%s51 + $0x58] sm:$0xff]
    %v3499 = vld [vmem:[%s51 + $0x60] sm:$0xff]
    %v3500 = vld [vmem:[%s51 + $0x68] sm:$0xff]
    %v3501 = vld [vmem:[%s51 + $0x70] sm:$0xff]
    %v3502 = vld [vmem:[%s51 + $0x78] sm:$0xff]
    %v3503 = vld [vmem:[%s51 + $0x80] sm:$0xff]
    %v3504 = vld [vmem:[%s51 + $0x88] sm:$0xff]
    %v3505 = vld [vmem:[%s51 + $0x90] sm:$0xff]
    %v3506 = vld [vmem:[%s51 + $0x98] sm:$0xff]
    %v3507 = vld [vmem:[%s51 + $0xa0] sm:$0xff]
    %v3508 = vld [vmem:[%s51 + $0xa8] sm:$0xff]
    %v3510 = vsel %vm171, %v3469, 0
    %v3513 = vsel %vm171, %v3471, 0
    %v3516 = vsel %vm171, %v3473, 0
    %v3519 = vsel %vm171, %v3475, 0
    %v3522 = vsel %vm171, %v3477, 0
    %v3525 = vsel %vm171, %v3479, 0
    %3527 = vmatpush.msra.mxu0 %v3502
    %3528 = vmatpush.msra.mxu0 %v3501
    %3529 = vmatpush.msra.mxu0 %v3500
    %3530 = vmatpush.msra.mxu0 %v3499
    %3531 = vmatpush.msra.mxu0 %v3498
    %3532 = vmatpush.msra.mxu0 %v3497
    %3533 = vmatpush.msra.mxu0 %v3496
    %3534 = vmatpush.msra.mxu0 %v3495
    %3535 = vmatpush.msra.mxu0 %v3494
    %3536 = vmatpush.msra.mxu0 %v3493
    %3537 = vmatpush.msra.mxu0 %v3492
    %3538 = vmatpush.msra.mxu0 %v3491
    %3539 = vmatpush.msra.mxu0 %v3490
    %3540 = vmatpush.msra.mxu0 %v3489
    %3541 = vmatpush.msra.mxu0 %v3488
    %3542 = vmatpush.msra.mxu0 %v3487
    %3543 = vmatmul.f32.gmra.mxu0 %v3468
    %v3544 = vpop.f32.mrf.mxu0
    %v3545 = vadd.f32 0.0, %v3544
    %3546 = vmatmul.f32.gmra.mxu0 %v3470
    %v3547 = vpop.f32.mrf.mxu0
    %v3548 = vadd.f32 0.0, %v3547
    %3549 = vmatmul.f32.gmra.mxu0 %v3472
    %v3550 = vpop.f32.mrf.mxu0
    %v3551 = vadd.f32 0.0, %v3550
    %3552 = vmatmul.f32.gmra.mxu0 %v3474
    %v3553 = vpop.f32.mrf.mxu0
    %v3554 = vadd.f32 0.0, %v3553
    %3555 = vmatmul.f32.gmra.mxu0 %v3476
    %v3556 = vpop.f32.mrf.mxu0
    %v3557 = vadd.f32 0.0, %v3556
    %3558 = vmatmul.f32.gmra.mxu0 %v3478
    %v3559 = vpop.f32.mrf.mxu0
    %v3560 = vadd.f32 0.0, %v3559
    %3561 = vdwg.mxu0
    %3562 = vmatpush.msra.mxu0 0.0
    %3563 = vmatpush.msra.mxu0 0.0
    %3564 = vmatpush.msra.mxu0 0.0
    %3565 = vmatpush.msra.mxu0 0.0
    %3566 = vmatpush.msra.mxu0 0.0
    %3567 = vmatpush.msra.mxu0 0.0
    %3568 = vmatpush.msra.mxu0 0.0
    %3569 = vmatpush.msra.mxu0 0.0
    %3570 = vmatpush.msra.mxu0 0.0
    %3571 = vmatpush.msra.mxu0 0.0
    %3572 = vmatpush.msra.mxu0 %v3508
    %3573 = vmatpush.msra.mxu0 %v3507
    %3574 = vmatpush.msra.mxu0 %v3506
    %3575 = vmatpush.msra.mxu0 %v3505
    %3576 = vmatpush.msra.mxu0 %v3504
    %3577 = vmatpush.msra.mxu0 %v3503
    %3578 = vmatmul.f32.gmra.mxu0 %v3510
    %v3579 = vpop.f32.mrf.mxu0
    %v3580 = vadd.f32 %v3545, %v3579
    %3581 = vmatmul.f32.gmra.mxu0 %v3513
    %v3582 = vpop.f32.mrf.mxu0
    %v3583 = vadd.f32 %v3548, %v3582
    %3584 = vmatmul.f32.gmra.mxu0 %v3516
    %v3585 = vpop.f32.mrf.mxu0
    %v3586 = vadd.f32 %v3551, %v3585
    %3587 = vmatmul.f32.gmra.mxu0 %v3519
    %v3588 = vpop.f32.mrf.mxu0
    %v3589 = vadd.f32 %v3554, %v3588
    %3590 = vmatmul.f32.gmra.mxu0 %v3522
    %v3591 = vpop.f32.mrf.mxu0
    %v3592 = vadd.f32 %v3557, %v3591
    %3593 = vmatmul.f32.gmra.mxu0 %v3525
    %v3594 = vpop.f32.mrf.mxu0
    %v3595 = vadd.f32 %v3560, %v3594
    %3596 = vdwg.mxu0
    %v3598 = vsel %vm861, %v3481, 0
    %v3601 = vsel %vm861, %v3482, 0
    %v3604 = vsel %vm861, %v3483, 0
    %v3607 = vsel %vm861, %v3484, 0
    %v3610 = vsel %vm861, %v3485, 0
    %v3613 = vsel %vm861, %v3486, 0
    %v3616 = vsel %vm871, %v3595, 0
    %3618 = vmatpush.msra.mxu0 0.0
    %3619 = vmatpush.msra.mxu0 0.0
    %3620 = vmatpush.msra.mxu0 0.0
    %3621 = vmatpush.msra.mxu0 0.0
    %3622 = vmatpush.msra.mxu0 0.0
    %3623 = vmatpush.msra.mxu0 0.0
    %3624 = vmatpush.msra.mxu0 0.0
    %3625 = vmatpush.msra.mxu0 0.0
    %3626 = vmatpush.msra.mxu0 0.0
    %3627 = vmatpush.msra.mxu0 0.0
    %3628 = vmatpush.msra.mxu0 %v3616
    %3629 = vmatpush.msra.mxu0 %v3592
    %3630 = vmatpush.msra.mxu0 %v3589
    %3631 = vmatpush.msra.mxu0 %v3586
    %3632 = vmatpush.msra.mxu0 %v3583
    %3633 = vmatpush.msra.mxu0 %v3580
    %3634 = vmatmul.f32.gmra.mxu0 %v3598
    %v3635 = vpop.f32.mrf.mxu0
    %v3636 = vadd.f32 0.0, %v3635
    %3637 = vmatmul.f32.gmra.mxu0 %v3601
    %v3638 = vpop.f32.mrf.mxu0
    %v3639 = vadd.f32 0.0, %v3638
    %3640 = vmatmul.f32.gmra.mxu0 %v3604
    %v3641 = vpop.f32.mrf.mxu0
    %v3642 = vadd.f32 0.0, %v3641
    %3643 = vmatmul.f32.gmra.mxu0 %v3607
    %v3644 = vpop.f32.mrf.mxu0
    %v3645 = vadd.f32 0.0, %v3644
    %3646 = vmatmul.f32.gmra.mxu0 %v3610
    %v3647 = vpop.f32.mrf.mxu0
    %v3648 = vadd.f32 0.0, %v3647
    %3649 = vmatmul.f32.gmra.mxu0 %v3613
    %v3650 = vpop.f32.mrf.mxu0
    %v3651 = vadd.f32 0.0, %v3650
    %3652 = vdwg.mxu0
    %v3654 = vperm.slane %v3480, 0
    %v3656 = vadd.f32 %v3654, %v3636
    %v3657 = vadd.f32 %v3654, %v3639
    %v3658 = vadd.f32 %v3654, %v3642
    %v3659 = vadd.f32 %v3654, %v3645
    %v3660 = vadd.f32 %v3654, %v3648
    %v3661 = vadd.f32 %v3654, %v3651
    %s3662 = scalar_lea.vmem %s49, 48
    %v3663 = vld [vmem:[%s3662] sm:$0xff]
    %v3664 = vld [vmem:[%s3662 + $0x8] sm:$0xff]
    %v3665 = vld [vmem:[%s3662 + $0x10] sm:$0xff]
    %v3666 = vld [vmem:[%s3662 + $0x18] sm:$0xff]
    %v3667 = vld [vmem:[%s3662 + $0x20] sm:$0xff]
    %v3668 = vld [vmem:[%s3662 + $0x28] sm:$0xff]
    %s3669 = scalar_lea.vmem %s51, 176
    %v3670 = vld [vmem:[%s3669] sm:$0xff]
    %v3671 = vld [vmem:[%s3669 + $0x8] sm:$0xff]
    %v3672 = vld [vmem:[%s3669 + $0x10] sm:$0xff]
    %v3673 = vld [vmem:[%s3669 + $0x18] sm:$0xff]
    %v3674 = vld [vmem:[%s3669 + $0x20] sm:$0xff]
    %v3675 = vld [vmem:[%s3669 + $0x28] sm:$0xff]
    %v3676 = vld [vmem:[%s3669 + $0x30] sm:$0xff]
    %v3677 = vld [vmem:[%s3669 + $0x38] sm:$0xff]
    %v3678 = vld [vmem:[%s3669 + $0x40] sm:$0xff]
    %v3679 = vld [vmem:[%s3669 + $0x48] sm:$0xff]
    %v3680 = vld [vmem:[%s3669 + $0x50] sm:$0xff]
    %v3681 = vld [vmem:[%s3669 + $0x58] sm:$0xff]
    %v3682 = vld [vmem:[%s3669 + $0x60] sm:$0xff]
    %v3683 = vld [vmem:[%s3669 + $0x68] sm:$0xff]
    %v3684 = vld [vmem:[%s3669 + $0x70] sm:$0xff]
    %v3685 = vld [vmem:[%s3669 + $0x78] sm:$0xff]
    %v3686 = vld [vmem:[%s3669 + $0x80] sm:$0xff]
    %v3687 = vld [vmem:[%s3669 + $0x88] sm:$0xff]
    %v3688 = vld [vmem:[%s3669 + $0x90] sm:$0xff]
    %v3689 = vld [vmem:[%s3669 + $0x98] sm:$0xff]
    %v3690 = vld [vmem:[%s3669 + $0xa0] sm:$0xff]
    %v3691 = vld [vmem:[%s3669 + $0xa8] sm:$0xff]
    %3692 = vmatpush.msra.mxu0 %v3685
    %3693 = vmatpush.msra.mxu0 %v3684
    %3694 = vmatpush.msra.mxu0 %v3683
    %3695 = vmatpush.msra.mxu0 %v3682
    %3696 = vmatpush.msra.mxu0 %v3681
    %3697 = vmatpush.msra.mxu0 %v3680
    %3698 = vmatpush.msra.mxu0 %v3679
    %3699 = vmatpush.msra.mxu0 %v3678
    %3700 = vmatpush.msra.mxu0 %v3677
    %3701 = vmatpush.msra.mxu0 %v3676
    %3702 = vmatpush.msra.mxu0 %v3675
    %3703 = vmatpush.msra.mxu0 %v3674
    %3704 = vmatpush.msra.mxu0 %v3673
    %3705 = vmatpush.msra.mxu0 %v3672
    %3706 = vmatpush.msra.mxu0 %v3671
    %3707 = vmatpush.msra.mxu0 %v3670
    %3708 = vmatmul.f32.gmra.mxu0 %v3468
    %v3709 = vpop.f32.mrf.mxu0
    %v3710 = vadd.f32 0.0, %v3709
    %3711 = vmatmul.f32.gmra.mxu0 %v3470
    %v3712 = vpop.f32.mrf.mxu0
    %v3713 = vadd.f32 0.0, %v3712
    %3714 = vmatmul.f32.gmra.mxu0 %v3472
    %v3715 = vpop.f32.mrf.mxu0
    %v3716 = vadd.f32 0.0, %v3715
    %3717 = vmatmul.f32.gmra.mxu0 %v3474
    %v3718 = vpop.f32.mrf.mxu0
    %v3719 = vadd.f32 0.0, %v3718
    %3720 = vmatmul.f32.gmra.mxu0 %v3476
    %v3721 = vpop.f32.mrf.mxu0
    %v3722 = vadd.f32 0.0, %v3721
    %3723 = vmatmul.f32.gmra.mxu0 %v3478
    %v3724 = vpop.f32.mrf.mxu0
    %v3725 = vadd.f32 0.0, %v3724
    %3726 = vdwg.mxu0
    %3727 = vmatpush.msra.mxu0 0.0
    %3728 = vmatpush.msra.mxu0 0.0
    %3729 = vmatpush.msra.mxu0 0.0
    %3730 = vmatpush.msra.mxu0 0.0
    %3731 = vmatpush.msra.mxu0 0.0
    %3732 = vmatpush.msra.mxu0 0.0
    %3733 = vmatpush.msra.mxu0 0.0
    %3734 = vmatpush.msra.mxu0 0.0
    %3735 = vmatpush.msra.mxu0 0.0
    %3736 = vmatpush.msra.mxu0 0.0
    %3737 = vmatpush.msra.mxu0 %v3691
    %3738 = vmatpush.msra.mxu0 %v3690
    %3739 = vmatpush.msra.mxu0 %v3689
    %3740 = vmatpush.msra.mxu0 %v3688
    %3741 = vmatpush.msra.mxu0 %v3687
    %3742 = vmatpush.msra.mxu0 %v3686
    %3743 = vmatmul.f32.gmra.mxu0 %v3510
    %v3744 = vpop.f32.mrf.mxu0
    %v3745 = vadd.f32 %v3710, %v3744
    %3746 = vmatmul.f32.gmra.mxu0 %v3513
    %v3747 = vpop.f32.mrf.mxu0
    %v3748 = vadd.f32 %v3713, %v3747
    %3749 = vmatmul.f32.gmra.mxu0 %v3516
    %v3750 = vpop.f32.mrf.mxu0
    %v3751 = vadd.f32 %v3716, %v3750
    %3752 = vmatmul.f32.gmra.mxu0 %v3519
    %v3753 = vpop.f32.mrf.mxu0
    %v3754 = vadd.f32 %v3719, %v3753
    %3755 = vmatmul.f32.gmra.mxu0 %v3522
    %v3756 = vpop.f32.mrf.mxu0
    %v3757 = vadd.f32 %v3722, %v3756
    %3758 = vmatmul.f32.gmra.mxu0 %v3525
    %v3759 = vpop.f32.mrf.mxu0
    %v3760 = vadd.f32 %v3725, %v3759
    %3761 = vdwg.mxu0
    %v3763 = vsel %vm861, %v3663, 0
    %v3766 = vsel %vm861, %v3664, 0
    %v3769 = vsel %vm861, %v3665, 0
    %v3772 = vsel %vm861, %v3666, 0
    %v3775 = vsel %vm861, %v3667, 0
    %v3778 = vsel %vm861, %v3668, 0
    %v3781 = vsel %vm871, %v3760, 0
    %3783 = vmatpush.msra.mxu0 0.0
    %3784 = vmatpush.msra.mxu0 0.0
    %3785 = vmatpush.msra.mxu0 0.0
    %3786 = vmatpush.msra.mxu0 0.0
    %3787 = vmatpush.msra.mxu0 0.0
    %3788 = vmatpush.msra.mxu0 0.0
    %3789 = vmatpush.msra.mxu0 0.0
    %3790 = vmatpush.msra.mxu0 0.0
    %3791 = vmatpush.msra.mxu0 0.0
    %3792 = vmatpush.msra.mxu0 0.0
    %3793 = vmatpush.msra.mxu0 %v3781
    %3794 = vmatpush.msra.mxu0 %v3757
    %3795 = vmatpush.msra.mxu0 %v3754
    %3796 = vmatpush.msra.mxu0 %v3751
    %3797 = vmatpush.msra.mxu0 %v3748
    %3798 = vmatpush.msra.mxu0 %v3745
    %3799 = vmatmul.f32.gmra.mxu0 %v3763
    %v3800 = vpop.f32.mrf.mxu0
    %v3801 = vadd.f32 0.0, %v3800
    %3802 = vmatmul.f32.gmra.mxu0 %v3766
    %v3803 = vpop.f32.mrf.mxu0
    %v3804 = vadd.f32 0.0, %v3803
    %3805 = vmatmul.f32.gmra.mxu0 %v3769
    %v3806 = vpop.f32.mrf.mxu0
    %v3807 = vadd.f32 0.0, %v3806
    %3808 = vmatmul.f32.gmra.mxu0 %v3772
    %v3809 = vpop.f32.mrf.mxu0
    %v3810 = vadd.f32 0.0, %v3809
    %3811 = vmatmul.f32.gmra.mxu0 %v3775
    %v3812 = vpop.f32.mrf.mxu0
    %v3813 = vadd.f32 0.0, %v3812
    %3814 = vmatmul.f32.gmra.mxu0 %v3778
    %v3815 = vpop.f32.mrf.mxu0
    %v3816 = vadd.f32 0.0, %v3815
    %3817 = vdwg.mxu0
    %v3818 = vadd.f32 %v3656, %v3801
    %v3819 = vadd.f32 %v3657, %v3804
    %v3820 = vadd.f32 %v3658, %v3807
    %v3821 = vadd.f32 %v3659, %v3810
    %v3822 = vadd.f32 %v3660, %v3813
    %v3823 = vadd.f32 %v3661, %v3816
    %s3824 = scalar_lea.vmem %s49, 96
    %v3825 = vld [vmem:[%s3824] sm:$0xff]
    %v3826 = vld [vmem:[%s3824 + $0x8] sm:$0xff]
    %v3827 = vld [vmem:[%s3824 + $0x10] sm:$0xff]
    %v3828 = vld [vmem:[%s3824 + $0x18] sm:$0xff]
    %v3829 = vld [vmem:[%s3824 + $0x20] sm:$0xff]
    %v3830 = vld [vmem:[%s3824 + $0x28] sm:$0xff]
    %s3831 = scalar_lea.vmem %s51, 352
    %v3832 = vld [vmem:[%s3831] sm:$0xff]
    %v3833 = vld [vmem:[%s3831 + $0x8] sm:$0xff]
    %v3834 = vld [vmem:[%s3831 + $0x10] sm:$0xff]
    %v3835 = vld [vmem:[%s3831 + $0x18] sm:$0xff]
    %v3836 = vld [vmem:[%s3831 + $0x20] sm:$0xff]
    %v3837 = vld [vmem:[%s3831 + $0x28] sm:$0xff]
    %v3838 = vld [vmem:[%s3831 + $0x30] sm:$0xff]
    %v3839 = vld [vmem:[%s3831 + $0x38] sm:$0xff]
    %v3840 = vld [vmem:[%s3831 + $0x40] sm:$0xff]
    %v3841 = vld [vmem:[%s3831 + $0x48] sm:$0xff]
    %v3842 = vld [vmem:[%s3831 + $0x50] sm:$0xff]
    %v3843 = vld [vmem:[%s3831 + $0x58] sm:$0xff]
    %v3844 = vld [vmem:[%s3831 + $0x60] sm:$0xff]
    %v3845 = vld [vmem:[%s3831 + $0x68] sm:$0xff]
    %v3846 = vld [vmem:[%s3831 + $0x70] sm:$0xff]
    %v3847 = vld [vmem:[%s3831 + $0x78] sm:$0xff]
    %v3848 = vld [vmem:[%s3831 + $0x80] sm:$0xff]
    %v3849 = vld [vmem:[%s3831 + $0x88] sm:$0xff]
    %v3850 = vld [vmem:[%s3831 + $0x90] sm:$0xff]
    %v3851 = vld [vmem:[%s3831 + $0x98] sm:$0xff]
    %v3852 = vld [vmem:[%s3831 + $0xa0] sm:$0xff]
    %v3853 = vld [vmem:[%s3831 + $0xa8] sm:$0xff]
    %3854 = vmatpush.msra.mxu0 %v3847
    %3855 = vmatpush.msra.mxu0 %v3846
    %3856 = vmatpush.msra.mxu0 %v3845
    %3857 = vmatpush.msra.mxu0 %v3844
    %3858 = vmatpush.msra.mxu0 %v3843
    %3859 = vmatpush.msra.mxu0 %v3842
    %3860 = vmatpush.msra.mxu0 %v3841
    %3861 = vmatpush.msra.mxu0 %v3840
    %3862 = vmatpush.msra.mxu0 %v3839
    %3863 = vmatpush.msra.mxu0 %v3838
    %3864 = vmatpush.msra.mxu0 %v3837
    %3865 = vmatpush.msra.mxu0 %v3836
    %3866 = vmatpush.msra.mxu0 %v3835
    %3867 = vmatpush.msra.mxu0 %v3834
    %3868 = vmatpush.msra.mxu0 %v3833
    %3869 = vmatpush.msra.mxu0 %v3832
    %3870 = vmatmul.f32.gmra.mxu0 %v3468
    %v3871 = vpop.f32.mrf.mxu0
    %v3872 = vadd.f32 0.0, %v3871
    %3873 = vmatmul.f32.gmra.mxu0 %v3470
    %v3874 = vpop.f32.mrf.mxu0
    %v3875 = vadd.f32 0.0, %v3874
    %3876 = vmatmul.f32.gmra.mxu0 %v3472
    %v3877 = vpop.f32.mrf.mxu0
    %v3878 = vadd.f32 0.0, %v3877
    %3879 = vmatmul.f32.gmra.mxu0 %v3474
    %v3880 = vpop.f32.mrf.mxu0
    %v3881 = vadd.f32 0.0, %v3880
    %3882 = vmatmul.f32.gmra.mxu0 %v3476
    %v3883 = vpop.f32.mrf.mxu0
    %v3884 = vadd.f32 0.0, %v3883
    %3885 = vmatmul.f32.gmra.mxu0 %v3478
    %v3886 = vpop.f32.mrf.mxu0
    %v3887 = vadd.f32 0.0, %v3886
    %3888 = vdwg.mxu0
    %3889 = vmatpush.msra.mxu0 0.0
    %3890 = vmatpush.msra.mxu0 0.0
    %3891 = vmatpush.msra.mxu0 0.0
    %3892 = vmatpush.msra.mxu0 0.0
    %3893 = vmatpush.msra.mxu0 0.0
    %3894 = vmatpush.msra.mxu0 0.0
    %3895 = vmatpush.msra.mxu0 0.0
    %3896 = vmatpush.msra.mxu0 0.0
    %3897 = vmatpush.msra.mxu0 0.0
    %3898 = vmatpush.msra.mxu0 0.0
    %3899 = vmatpush.msra.mxu0 %v3853
    %3900 = vmatpush.msra.mxu0 %v3852
    %3901 = vmatpush.msra.mxu0 %v3851
    %3902 = vmatpush.msra.mxu0 %v3850
    %3903 = vmatpush.msra.mxu0 %v3849
    %3904 = vmatpush.msra.mxu0 %v3848
    %3905 = vmatmul.f32.gmra.mxu0 %v3510
    %v3906 = vpop.f32.mrf.mxu0
    %v3907 = vadd.f32 %v3872, %v3906
    %3908 = vmatmul.f32.gmra.mxu0 %v3513
    %v3909 = vpop.f32.mrf.mxu0
    %v3910 = vadd.f32 %v3875, %v3909
    %3911 = vmatmul.f32.gmra.mxu0 %v3516
    %v3912 = vpop.f32.mrf.mxu0
    %v3913 = vadd.f32 %v3878, %v3912
    %3914 = vmatmul.f32.gmra.mxu0 %v3519
    %v3915 = vpop.f32.mrf.mxu0
    %v3916 = vadd.f32 %v3881, %v3915
    %3917 = vmatmul.f32.gmra.mxu0 %v3522
    %v3918 = vpop.f32.mrf.mxu0
    %v3919 = vadd.f32 %v3884, %v3918
    %3920 = vmatmul.f32.gmra.mxu0 %v3525
    %v3921 = vpop.f32.mrf.mxu0
    %v3922 = vadd.f32 %v3887, %v3921
    %3923 = vdwg.mxu0
    %v3925 = vsel %vm861, %v3825, 0
    %v3928 = vsel %vm861, %v3826, 0
    %v3931 = vsel %vm861, %v3827, 0
    %v3934 = vsel %vm861, %v3828, 0
    %v3937 = vsel %vm861, %v3829, 0
    %v3940 = vsel %vm861, %v3830, 0
    %v3943 = vsel %vm871, %v3922, 0
    %3945 = vmatpush.msra.mxu0 0.0
    %3946 = vmatpush.msra.mxu0 0.0
    %3947 = vmatpush.msra.mxu0 0.0
    %3948 = vmatpush.msra.mxu0 0.0
    %3949 = vmatpush.msra.mxu0 0.0
    %3950 = vmatpush.msra.mxu0 0.0
    %3951 = vmatpush.msra.mxu0 0.0
    %3952 = vmatpush.msra.mxu0 0.0
    %3953 = vmatpush.msra.mxu0 0.0
    %3954 = vmatpush.msra.mxu0 0.0
    %3955 = vmatpush.msra.mxu0 %v3943
    %3956 = vmatpush.msra.mxu0 %v3919
    %3957 = vmatpush.msra.mxu0 %v3916
    %3958 = vmatpush.msra.mxu0 %v3913
    %3959 = vmatpush.msra.mxu0 %v3910
    %3960 = vmatpush.msra.mxu0 %v3907
    %3961 = vmatmul.f32.gmra.mxu0 %v3925
    %v3962 = vpop.f32.mrf.mxu0
    %v3963 = vadd.f32 0.0, %v3962
    %3964 = vmatmul.f32.gmra.mxu0 %v3928
    %v3965 = vpop.f32.mrf.mxu0
    %v3966 = vadd.f32 0.0, %v3965
    %3967 = vmatmul.f32.gmra.mxu0 %v3931
    %v3968 = vpop.f32.mrf.mxu0
    %v3969 = vadd.f32 0.0, %v3968
    %3970 = vmatmul.f32.gmra.mxu0 %v3934
    %v3971 = vpop.f32.mrf.mxu0
    %v3972 = vadd.f32 0.0, %v3971
    %3973 = vmatmul.f32.gmra.mxu0 %v3937
    %v3974 = vpop.f32.mrf.mxu0
    %v3975 = vadd.f32 0.0, %v3974
    %3976 = vmatmul.f32.gmra.mxu0 %v3940
    %v3977 = vpop.f32.mrf.mxu0
    %v3978 = vadd.f32 0.0, %v3977
    %3979 = vdwg.mxu0
    %v3980 = vadd.f32 %v3818, %v3963
    %v3981 = vadd.f32 %v3819, %v3966
    %v3982 = vadd.f32 %v3820, %v3969
    %v3983 = vadd.f32 %v3821, %v3972
    %v3984 = vadd.f32 %v3822, %v3975
    %v3985 = vadd.f32 %v3823, %v3978
    %3986 = vst.msk [vmem:[#allocation2] sm:$0xff] %vm148, %v3980
    %3987 = vst.msk [vmem:[#allocation2 + $0x8] sm:$0xff] %vm148, %v3981
    %3988 = vst.msk [vmem:[#allocation2 + $0x10] sm:$0xff] %vm148, %v3982
    %3989 = vst.msk [vmem:[#allocation2 + $0x18] sm:$0xff] %vm148, %v3983
    %3990 = vst.msk [vmem:[#allocation2 + $0x20] sm:$0xff] %vm148, %v3984
    %3991 = vst.msk [vmem:[#allocation2 + $0x28] sm:$0xff] %vm148, %v3985
    // Predicated region
    $region110: #{forward.1} parent=1 // pred_check
      _
    $region111: #{forward.1} parent=1 // pred_check_branch
      %3993 = sbr.rel (0) target = $region113
    $region112: #{forward.1} parent=1 // pred_region
      %3995 = vsyncadd [#allocation3], 0
      %s3996 = sshll.u32 [#allocation2], 4
      %s3997 = int_to_ptr.vmem [resolvable:$true] %s3996
      %s3998 = sshll.u32 %s55, 4
      %s3999 = int_to_ptr.hbm [resolvable:$true] %s3998
      %4004 = dma.vmem_to_hbm [thread:$0]  %s3997, 768, %s3999, [#allocation3], 128, 128, 8
    $region113: #{forward.1} parent=1 // pred_fallthru
      _
    // Predicated region
    $region114: #{forward.1} parent=1 // pred_check
      _
    $region115: #{forward.1} parent=1 // pred_check_branch
      %4006 = sbr.rel (0) target = $region117
    $region116: #{forward.1} parent=1 // pred_region
      %4008 = vsyncadd [#allocation5], 0
      %s4010 = sshll.u32 [#allocation4], 4
      %s4011 = int_to_ptr.vmem [resolvable:$true] %s4010
      %s4012 = sshll.u32 %s57, 4
      %s4013 = int_to_ptr.hbm [resolvable:$true] %s4012
      %4015 = dma.vmem_to_hbm [thread:$0]  %s4011, 32, %s4013, [#allocation5]
    $region117: #{forward.1} parent=1 // pred_fallthru
      _
    // Predicated region
    $region118: #{forward.1} parent=1 // pred_check
      _
    $region119: #{forward.1} parent=1 // pred_check_branch
      %4017 = sbr.rel (0) target = $region121
    $region120: #{forward.1} parent=1 // pred_region
      %4019 = vsyncadd [#allocation5], 0
      %s4021 = sshll.u32 [#allocation6], 4
      %s4022 = int_to_ptr.vmem [resolvable:$true] %s4021
      %s4023 = sshll.u32 %s59, 4
      %s4024 = int_to_ptr.hbm [resolvable:$true] %s4023
      %4026 = dma.vmem_to_hbm [thread:$0]  %s4022, 32, %s4024, [#allocation5]
    $region121: #{forward.1} parent=1 // pred_fallthru
      _
    // Predicated region
    $region122: #{forward.1} parent=1 // pred_check
      _
    $region123: #{forward.1} parent=1 // pred_check_branch
      %4028 = sbr.rel (0) target = $region125
    $region124: #{forward.1} parent=1 // pred_region
      %4030 = vsyncadd [#allocation8], 0
      %s4031 = sshll.u32 [#allocation7], 4
      %s4032 = int_to_ptr.vmem [resolvable:$true] %s4031
      %s4033 = sshll.u32 %s61, 4
      %s4034 = int_to_ptr.hbm [resolvable:$true] %s4033
      %4039 = dma.vmem_to_hbm [thread:$0]  %s4032, 768, %s4034, [#allocation8], 128, 128, 8
    $region125: #{forward.1} parent=1 // pred_fallthru
      _
    // Predicated region
    $region126: #{forward.1} parent=1 // pred_check
      _
    $region127: #{forward.1} parent=1 // pred_check_branch
      %4041 = sbr.rel (0) target = $region129
    $region128: #{forward.1} parent=1 // pred_region
      %4043 = dma.done [#allocation3], 768
    $region129: #{forward.1} parent=1 // pred_fallthru
      _
    // Predicated region
    $region130: #{forward.1} parent=1 // pred_check
      _
    $region131: #{forward.1} parent=1 // pred_check_branch
      %4045 = sbr.rel (0) target = $region133
    $region132: #{forward.1} parent=1 // pred_region
      %4047 = dma.done [#allocation5], 32
    $region133: #{forward.1} parent=1 // pred_fallthru
      _
    // Predicated region
    $region134: #{forward.1} parent=1 // pred_check
      _
    $region135: #{forward.1} parent=1 // pred_check_branch
      %4049 = sbr.rel (0) target = $region137
    $region136: #{forward.1} parent=1 // pred_region
      %4051 = dma.done [#allocation5], 32
    $region137: #{forward.1} parent=1 // pred_fallthru
      _
    // Predicated region
    $region138: #{forward.1} parent=1 // pred_check
      _
    $region139: #{forward.1} parent=1 // pred_check_branch
      %4053 = sbr.rel (0) target = $region141
    $region140: #{forward.1} parent=1 // pred_region
      %4055 = dma.done [#allocation8], 768
    $region141: #{forward.1} parent=1 // pred_fallthru
      _
    %4056 = vsyncpa [#allocation3], 1
    %4057 = vsyncpa [#allocation5], 1
    %4058 = vsyncpa [#allocation8], 1

</llo_original>
